<compile_context>
chip_gen: v6e
topology: v6e:2x2x1
jax: 0.10.0
libtpu: 0.0.40
codegen_flags: <defaults>
</compile_context>

<pallas_src>
import functools

import jax
import jax.numpy as jnp
import numpy as np
from jax.experimental import pallas as pl
from jax.experimental.pallas import tpu as pltpu


# ----------------------------- in-kernel helpers ----------------------------

def _layernorm(v, g, b, eps=1e-5):
    # PyTorch nn.LayerNorm: biased variance over the last dim, eps=1e-5.
    mu = jnp.mean(v, axis=-1, keepdims=True)
    var = jnp.mean((v - mu) ** 2, axis=-1, keepdims=True)
    return (v - mu) * jax.lax.rsqrt(var + eps) * g + b


# Abramowitz & Stegun 7.1.26 erf polynomial (|err| <= 1.5e-7).  Used instead of
# jax.lax.erf so the exact (erf-based) GELU path lowers on every Mosaic version
# using only VALU ops plus one EUP exp.
_A1, _A2, _A3, _A4, _A5 = (0.254829592, -0.284496736, 1.421413741,
                           -1.453152027, 1.061405429)
_PC = 0.3275911
_INV_SQRT2 = 0.7071067811865476


def _erf(z):
    a = jnp.abs(z)
    t = 1.0 / (1.0 + _PC * a)
    poly = ((((_A5 * t + _A4) * t + _A3) * t + _A2) * t + _A1) * t
    r = 1.0 - poly * jnp.exp(-a * a)
    return jnp.where(z >= 0, r, -r)


def _gelu_exact(x):
    # Matches PyTorch nn.GELU() default (erf based) to ~1e-7.
    return 0.5 * x * (1.0 + _erf(x * _INV_SQRT2))


# --------------------------------- kernel -----------------------------------

def transformer_block_kernel(x_ref, g1_ref, b1_ref, wqkv_ref, wproj_ref,
                             bproj_ref, g2_ref, b2_ref, w1_ref, bf1_ref,
                             w2_ref, bf2_ref, o_ref, *, num_heads):
    x = x_ref[0].astype(jnp.float32)                      # (N, C) f32
    N, C = x.shape
    hd = C // num_heads
    scale = hd ** -0.5

    # ---------------- attention branch: x + proj(MHA(LN1(x))) ----------------
    h1 = _layernorm(x, g1_ref[...], b1_ref[...])
    qkv = jnp.dot(h1.astype(jnp.bfloat16), wqkv_ref[...],
                  preferred_element_type=jnp.float32)     # (N, 3C), f32 accum
    # Fold the 1/sqrt(hd) scale into q once (O(N*C) multiplies) instead of
    # scaling every (N, N) score matrix.
    q = (qkv[:, 0:C] * scale).astype(jnp.bfloat16)
    k = qkv[:, C:2 * C].astype(jnp.bfloat16)
    v = qkv[:, 2 * C:3 * C].astype(jnp.bfloat16)

    # One relayout to (heads, N, hd) and two batched MXU contractions instead
    # of a per-head Python loop + lane-wise concatenate.
    qh = jnp.transpose(q.reshape(N, num_heads, hd), (1, 0, 2))
    kh = jnp.transpose(k.reshape(N, num_heads, hd), (1, 0, 2))
    vh = jnp.transpose(v.reshape(N, num_heads, hd), (1, 0, 2))

    s = jnp.einsum("hqd,hkd->hqk", qh, kh,
                   preferred_element_type=jnp.float32)    # (heads, N, N) f32
    s = s - jnp.max(s, axis=-1, keepdims=True)
    p = jnp.exp(s)
    # Softmax normalization via EUP approximate reciprocal (frees the VALU).
    p = p * pl.reciprocal(jnp.sum(p, axis=-1, keepdims=True), approx=True)
    ctx = jnp.einsum("hqk,hkd->hqd", p.astype(jnp.bfloat16), vh,
                     preferred_element_type=jnp.float32)  # (heads, N, hd) f32
    attn = jnp.transpose(ctx, (1, 0, 2)).reshape(N, C)
    attn = jnp.dot(attn.astype(jnp.bfloat16), wproj_ref[...],
                   preferred_element_type=jnp.float32) + bproj_ref[...]
    x1 = x + attn                                          # residual in f32

    # --------------- MLP branch: x1 + fc2(gelu(fc1(LN2(x1)))) ----------------
    h2 = _layernorm(x1, g2_ref[...], b2_ref[...])
    m = jnp.dot(h2.astype(jnp.bfloat16), w1_ref[...],
                preferred_element_type=jnp.float32) + bf1_ref[...]
    m = _gelu_exact(m)
    m = jnp.dot(m.astype(jnp.bfloat16), w2_ref[...],
                preferred_element_type=jnp.float32) + bf2_ref[...]
    o_ref[0] = (x1 + m).astype(o_ref.dtype)
    # TODO(synk): for N beyond a few hundred tokens, tile attention over KV
    # blocks (online softmax) and tile the MLP over N instead of materializing
    # the full (heads, N, N) scores / (N, 4C) hidden activations in one shot.


# -------------------------------- wrapper ------------------------------------

def transformer_block(x, params, num_heads, *, single_buffer_weights=True,
                      vmem_limit_bytes=32 * 1024 * 1024):
    B, N, C = x.shape
    H = params["w1"].shape[1]

    # Weights feed the MXU in bf16 (accumulation stays f32 in-kernel).  Biases
    # and LayerNorm affine params stay f32: they are applied after the f32
    # accumulation.  In production, convert the weights once outside the call.
    wqkv = params["wqkv"].astype(jnp.bfloat16)
    wproj = params["wproj"].astype(jnp.bfloat16)
    w1 = params["w1"].astype(jnp.bfloat16)
    w2 = params["w2"].astype(jnp.bfloat16)

    def const_spec(shape):
        index_map = lambda b: (0,) * len(shape)
        if single_buffer_weights:
            # Grid-invariant index_map -> double-buffering is pure VMEM waste;
            # request a single buffer for weights/biases.
            return pl.BlockSpec(shape, index_map, pipeline_mode=pl.Buffered(1))
        return pl.BlockSpec(shape, index_map)

    kernel = functools.partial(transformer_block_kernel, num_heads=num_heads)
    return pl.pallas_call(
        kernel,
        out_shape=jax.ShapeDtypeStruct((B, N, C), x.dtype),
        grid_spec=pltpu.PrefetchScalarGridSpec(
            num_scalar_prefetch=0,
            grid=(B,),
            in_specs=[
                pl.BlockSpec((1, N, C), lambda b: (b, 0, 0)),   # x
                const_spec((1, C)), const_spec((1, C)),         # norm1 gamma/beta
                const_spec((C, 3 * C)),                         # qkv weight (no bias)
                const_spec((C, C)), const_spec((1, C)),         # proj weight/bias
                const_spec((1, C)), const_spec((1, C)),         # norm2 gamma/beta
                const_spec((C, H)), const_spec((1, H)),         # fc1 weight/bias
                const_spec((H, C)), const_spec((1, C)),         # fc2 weight/bias
            ],
            out_specs=pl.BlockSpec((1, N, C), lambda b: (b, 0, 0)),
        ),
        # Batch axis shards across v7x's two TensorCores when B >= 2.
        # TODO(synk): for B == 1 on v7x, add a token- or head-parallel grid
        # axis so the second TensorCore is not idle.
        compiler_params=pltpu.CompilerParams(
            dimension_semantics=("parallel",),
            vmem_limit_bytes=vmem_limit_bytes),
    )(x, params["g1"], params["b1"], wqkv, wproj, params["bproj"],
      params["g2"], params["b2"], w1, params["bf1"], w2, params["bf2"])


# ----------------------------- pure-JAX reference ----------------------------

def reference(x, params, num_heads):
    B, N, C = x.shape
    hd = C // num_heads

    def ln(v, g, b):
        mu = jnp.mean(v, axis=-1, keepdims=True)
        var = jnp.mean((v - mu) ** 2, axis=-1, keepdims=True)
        return (v - mu) * jax.lax.rsqrt(var + 1e-5) * g + b

    h1 = ln(x, params["g1"], params["b1"])
    qkv = h1 @ params["wqkv"]                                      # (B, N, 3C)
    qkv = qkv.reshape(B, N, 3, num_heads, hd).transpose(2, 0, 3, 1, 4)
    q, k, v = qkv[0], qkv[1], qkv[2]                               # (B, nh, N, hd)
    attn = (q @ jnp.swapaxes(k, -2, -1)) * (hd ** -0.5)
    attn = jax.nn.softmax(attn, axis=-1)
    y = (attn @ v).transpose(0, 2, 1, 3).reshape(B, N, C)
    y = y @ params["wproj"] + params["bproj"]
    x1 = x + y

    h2 = ln(x1, params["g2"], params["b2"])
    m = h2 @ params["w1"] + params["bf1"]
    m = 0.5 * m * (1.0 + jax.lax.erf(m * _INV_SQRT2))              # exact GELU
    m = m @ params["w2"] + params["bf2"]
    return x1 + m


# ----------------------------------- main ------------------------------------

if __name__ == "__main__":
    # Small but lane-dense config: C is a multiple of 128 so output stores are
    # unmasked (real ViT-small C=384 is also lane-friendly).
    B, N, C = 2, 8, 128
    num_heads = 4
    mlp_ratio = 4.0
    H = int(C * mlp_ratio)

    key = jax.random.PRNGKey(0)
    keys = jax.random.split(key, 8)
    params = {
        "g1": jnp.ones((1, C), jnp.float32),
        "b1": jnp.zeros((1, C), jnp.float32),
        # qkv_bias=False (module default) -> no qkv bias.
        "wqkv": 0.05 * jax.random.normal(keys[1], (C, 3 * C), jnp.float32),
        "wproj": 0.05 * jax.random.normal(keys[2], (C, C), jnp.float32),
        "bproj": 0.05 * jax.random.normal(keys[3], (1, C), jnp.float32),
        "g2": jnp.ones((1, C), jnp.float32),
        "b2": jnp.zeros((1, C), jnp.float32),
        "w1": 0.05 * jax.random.normal(keys[4], (C, H), jnp.float32),
        "bf1": 0.05 * jax.random.normal(keys[5], (1, H), jnp.float32),
        "w2": 0.05 * jax.random.normal(keys[6], (H, C), jnp.float32),
        "bf2": 0.05 * jax.random.normal(keys[7], (1, C), jnp.float32),
    }
    x = jax.random.normal(keys[0], (B, N, C), jnp.float32)

    try:
        out = jax.block_until_ready(
            transformer_block(x, params, num_heads, single_buffer_weights=True))
    except Exception:
        # TODO(synk): pl.Buffered(1) pipeline_mode unsupported on this JAX /
        # Mosaic version; retry with default double-buffered weight specs.
        # Numerics are identical either way (only VMEM buffering changes).
        out = jax.block_until_ready(
            transformer_block(x, params, num_heads, single_buffer_weights=False))

    ref = reference(x, params, num_heads)
    # Tolerance widened for bf16 MXU operands + approx-reciprocal softmax vs
    # the pure-f32 reference.
    np.testing.assert_allclose(np.asarray(out), np.asarray(ref),
                               rtol=2e-2, atol=2e-2)
    print("KERNEL_OK")
</pallas_src>

<mosaic_0001>
module attributes {stable_mosaic.version = 11 : i64} {
  func.func @transformer_block_kernel(%arg0: i32, %arg1: memref<1x8x128xf32, #tpu.memory_space<vmem>>, %arg2: memref<1x128xf32, #tpu.memory_space<vmem>>, %arg3: memref<1x128xf32, #tpu.memory_space<vmem>>, %arg4: memref<128x384xbf16, #tpu.memory_space<vmem>>, %arg5: memref<128x128xbf16, #tpu.memory_space<vmem>>, %arg6: memref<1x128xf32, #tpu.memory_space<vmem>>, %arg7: memref<1x128xf32, #tpu.memory_space<vmem>>, %arg8: memref<1x128xf32, #tpu.memory_space<vmem>>, %arg9: memref<128x512xbf16, #tpu.memory_space<vmem>>, %arg10: memref<1x512xf32, #tpu.memory_space<vmem>>, %arg11: memref<512x128xbf16, #tpu.memory_space<vmem>>, %arg12: memref<1x128xf32, #tpu.memory_space<vmem>>, %arg13: memref<1x8x128xf32, #tpu.memory_space<vmem>>) attributes {dimension_semantics = [#tpu.dimension_semantics<parallel>], iteration_bounds = array<i64: 2>, scalar_prefetch = 0 : i64, scratch_operands = 0 : i64, tpu.core_type = #tpu.core_type<tc>, window_params = [{transform_indices = @transform_0, window_bounds = array<i64: 1, 8, 128>}, {pipeline_mode = #tpu.pipeline_mode<synchronous>, transform_indices = @transform_1, window_bounds = array<i64: 1, 128>}, {pipeline_mode = #tpu.pipeline_mode<synchronous>, transform_indices = @transform_2, window_bounds = array<i64: 1, 128>}, {pipeline_mode = #tpu.pipeline_mode<synchronous>, transform_indices = @transform_3, window_bounds = array<i64: 128, 384>}, {pipeline_mode = #tpu.pipeline_mode<synchronous>, transform_indices = @transform_4, window_bounds = array<i64: 128, 128>}, {pipeline_mode = #tpu.pipeline_mode<synchronous>, transform_indices = @transform_5, window_bounds = array<i64: 1, 128>}, {pipeline_mode = #tpu.pipeline_mode<synchronous>, transform_indices = @transform_6, window_bounds = array<i64: 1, 128>}, {pipeline_mode = #tpu.pipeline_mode<synchronous>, transform_indices = @transform_7, window_bounds = array<i64: 1, 128>}, {pipeline_mode = #tpu.pipeline_mode<synchronous>, transform_indices = @transform_8, window_bounds = array<i64: 128, 512>}, {pipeline_mode = #tpu.pipeline_mode<synchronous>, transform_indices = @transform_9, window_bounds = array<i64: 1, 512>}, {pipeline_mode = #tpu.pipeline_mode<synchronous>, transform_indices = @transform_10, window_bounds = array<i64: 512, 128>}, {pipeline_mode = #tpu.pipeline_mode<synchronous>, transform_indices = @transform_11, window_bounds = array<i64: 1, 128>}, {transform_indices = @transform_12, window_bounds = array<i64: 1, 8, 128>}]} {
    %c0 = arith.constant 0 : index
    %c0_0 = arith.constant 0 : index
    %c0_1 = arith.constant 0 : index
    %0 = vector.load %arg1[%c0, %c0_0, %c0_1] : memref<1x8x128xf32, #tpu.memory_space<vmem>>, vector<1x8x128xf32>
    %1 = vector.shape_cast %0 : vector<1x8x128xf32> to vector<8x128xf32>
    %c0_2 = arith.constant 0 : index
    %c0_3 = arith.constant 0 : index
    %2 = vector.load %arg2[%c0_2, %c0_3] : memref<1x128xf32, #tpu.memory_space<vmem>>, vector<1x128xf32>
    %c0_4 = arith.constant 0 : index
    %c0_5 = arith.constant 0 : index
    %3 = vector.load %arg3[%c0_4, %c0_5] : memref<1x128xf32, #tpu.memory_space<vmem>>, vector<1x128xf32>
    %cst = arith.constant dense<0.000000e+00> : vector<8xf32>
    %4 = vector.multi_reduction <add>, %1, %cst [1] : vector<8x128xf32> to vector<8xf32>
    %5 = vector.shape_cast %4 : vector<8xf32> to vector<8x1xf32>
    %cst_6 = arith.constant 1.280000e+02 : f32
    %6 = vector.broadcast %cst_6 : f32 to vector<8x1xf32>
    %7 = arith.divf %5, %6 : vector<8x1xf32>
    %8 = vector.broadcast %7 : vector<8x1xf32> to vector<8x128xf32>
    %9 = arith.subf %1, %8 : vector<8x128xf32>
    %10 = arith.mulf %9, %9 : vector<8x128xf32>
    %cst_7 = arith.constant dense<0.000000e+00> : vector<8xf32>
    %11 = vector.multi_reduction <add>, %10, %cst_7 [1] : vector<8x128xf32> to vector<8xf32>
    %12 = vector.shape_cast %11 : vector<8xf32> to vector<8x1xf32>
    %cst_8 = arith.constant 1.280000e+02 : f32
    %13 = vector.broadcast %cst_8 : f32 to vector<8x1xf32>
    %14 = arith.divf %12, %13 : vector<8x1xf32>
    %15 = vector.broadcast %7 : vector<8x1xf32> to vector<8x128xf32>
    %16 = arith.subf %1, %15 : vector<8x128xf32>
    %cst_9 = arith.constant 9.99999974E-6 : f32
    %17 = vector.broadcast %cst_9 : f32 to vector<8x1xf32>
    %18 = arith.addf %14, %17 : vector<8x1xf32>
    %19 = math.rsqrt %18 : vector<8x1xf32>
    %20 = vector.broadcast %19 : vector<8x1xf32> to vector<8x128xf32>
    %21 = arith.mulf %16, %20 : vector<8x128xf32>
    %22 = vector.broadcast %2 : vector<1x128xf32> to vector<8x128xf32>
    %23 = arith.mulf %21, %22 : vector<8x128xf32>
    %24 = vector.broadcast %3 : vector<1x128xf32> to vector<8x128xf32>
    %25 = arith.addf %23, %24 : vector<8x128xf32>
    %26 = arith.truncf %25 : vector<8x128xf32> to vector<8x128xbf16>
    %c0_10 = arith.constant 0 : index
    %c0_11 = arith.constant 0 : index
    %27 = vector.load %arg4[%c0_10, %c0_11] : memref<128x384xbf16, #tpu.memory_space<vmem>>, vector<128x384xbf16>
    %cst_12 = arith.constant dense<0.000000e+00> : vector<8x384xf32>
    %28 = tpu.matmul %26, %27, %cst_12 {dimension_numbers = #tpu.dot_dimension_numbers<[1], [0], [0], [1], [0, 0, 1, 1], [], []>} : vector<8x128xbf16>, vector<128x384xbf16>, vector<8x384xf32> -> vector<8x384xf32>
    %29 = vector.extract_strided_slice %28 {offsets = [0, 0], sizes = [8, 128], strides = [1, 1]} : vector<8x384xf32> to vector<8x128xf32>
    %cst_13 = arith.constant 0.176776692 : f32
    %30 = vector.broadcast %cst_13 : f32 to vector<8x128xf32>
    %31 = arith.mulf %29, %30 : vector<8x128xf32>
    %32 = arith.truncf %31 : vector<8x128xf32> to vector<8x128xbf16>
    %33 = vector.extract_strided_slice %28 {offsets = [0, 128], sizes = [8, 128], strides = [1, 1]} : vector<8x384xf32> to vector<8x128xf32>
    %34 = arith.truncf %33 : vector<8x128xf32> to vector<8x128xbf16>
    %35 = vector.extract_strided_slice %28 {offsets = [0, 256], sizes = [8, 128], strides = [1, 1]} : vector<8x384xf32> to vector<8x128xf32>
    %36 = arith.truncf %35 : vector<8x128xf32> to vector<8x128xbf16>
    %37 = vector.shape_cast %32 : vector<8x128xbf16> to vector<8x4x32xbf16>
    %38 = tpu.transpose %37, [1, 0, 2] : vector<8x4x32xbf16> -> vector<4x8x32xbf16>
    %39 = vector.shape_cast %34 : vector<8x128xbf16> to vector<8x4x32xbf16>
    %40 = tpu.transpose %39, [1, 0, 2] : vector<8x4x32xbf16> -> vector<4x8x32xbf16>
    %41 = vector.shape_cast %36 : vector<8x128xbf16> to vector<8x4x32xbf16>
    %42 = tpu.transpose %41, [1, 0, 2] : vector<8x4x32xbf16> -> vector<4x8x32xbf16>
    "tpu.trace_start"() <{level = 10 : i32, message = "hqd,hkd->hqk"}> : () -> ()
    %cst_14 = arith.constant dense<0.000000e+00> : vector<4x8x8xf32>
    %43 = tpu.matmul %38, %40, %cst_14 {dimension_numbers = #tpu.dot_dimension_numbers<[2], [2], [1], [1], [0, 0, 0, 1, 1, 1], [0], [0]>} : vector<4x8x32xbf16>, vector<4x8x32xbf16>, vector<4x8x8xf32> -> vector<4x8x8xf32>
    "tpu.trace_stop"() : () -> ()
    %cst_15 = arith.constant dense<0xFF800000> : vector<4x8xf32>
    %44 = vector.multi_reduction <maximumf>, %43, %cst_15 [2] : vector<4x8x8xf32> to vector<4x8xf32>
    %45 = vector.shape_cast %44 : vector<4x8xf32> to vector<4x8x1xf32>
    %46 = vector.broadcast %45 : vector<4x8x1xf32> to vector<4x8x8xf32>
    %47 = arith.subf %43, %46 : vector<4x8x8xf32>
    %48 = math.exp %47 : vector<4x8x8xf32>
    %cst_16 = arith.constant dense<0.000000e+00> : vector<4x8xf32>
    %49 = vector.multi_reduction <add>, %48, %cst_16 [2] : vector<4x8x8xf32> to vector<4x8xf32>
    %50 = vector.shape_cast %49 : vector<4x8xf32> to vector<4x8x1xf32>
    %51 = tpu.reciprocal %50 {approx = true} : vector<4x8x1xf32> -> vector<4x8x1xf32>
    %52 = vector.broadcast %51 : vector<4x8x1xf32> to vector<4x8x8xf32>
    %53 = arith.mulf %48, %52 : vector<4x8x8xf32>
    %54 = arith.truncf %53 : vector<4x8x8xf32> to vector<4x8x8xbf16>
    "tpu.trace_start"() <{level = 10 : i32, message = "hqk,hkd->hqd"}> : () -> ()
    %cst_17 = arith.constant dense<0.000000e+00> : vector<4x8x32xf32>
    %55 = tpu.matmul %54, %42, %cst_17 {dimension_numbers = #tpu.dot_dimension_numbers<[2], [1], [1], [2], [0, 0, 0, 1, 1, 2], [0], [0]>} : vector<4x8x8xbf16>, vector<4x8x32xbf16>, vector<4x8x32xf32> -> vector<4x8x32xf32>
    "tpu.trace_stop"() : () -> ()
    %56 = tpu.transpose %55, [1, 0, 2] : vector<4x8x32xf32> -> vector<8x4x32xf32>
    %57 = vector.shape_cast %56 : vector<8x4x32xf32> to vector<8x128xf32>
    %58 = arith.truncf %57 : vector<8x128xf32> to vector<8x128xbf16>
    %c0_18 = arith.constant 0 : index
    %c0_19 = arith.constant 0 : index
    %59 = vector.load %arg5[%c0_18, %c0_19] : memref<128x128xbf16, #tpu.memory_space<vmem>>, vector<128x128xbf16>
    %cst_20 = arith.constant dense<0.000000e+00> : vector<8x128xf32>
    %60 = tpu.matmul %58, %59, %cst_20 {dimension_numbers = #tpu.dot_dimension_numbers<[1], [0], [0], [1], [0, 0, 1, 1], [], []>} : vector<8x128xbf16>, vector<128x128xbf16>, vector<8x128xf32> -> vector<8x128xf32>
    %c0_21 = arith.constant 0 : index
    %c0_22 = arith.constant 0 : index
    %61 = vector.load %arg6[%c0_21, %c0_22] : memref<1x128xf32, #tpu.memory_space<vmem>>, vector<1x128xf32>
    %62 = vector.broadcast %61 : vector<1x128xf32> to vector<8x128xf32>
    %63 = arith.addf %60, %62 : vector<8x128xf32>
    %64 = arith.addf %1, %63 : vector<8x128xf32>
    %c0_23 = arith.constant 0 : index
    %c0_24 = arith.constant 0 : index
    %65 = vector.load %arg7[%c0_23, %c0_24] : memref<1x128xf32, #tpu.memory_space<vmem>>, vector<1x128xf32>
    %c0_25 = arith.constant 0 : index
    %c0_26 = arith.constant 0 : index
    %66 = vector.load %arg8[%c0_25, %c0_26] : memref<1x128xf32, #tpu.memory_space<vmem>>, vector<1x128xf32>
    %cst_27 = arith.constant dense<0.000000e+00> : vector<8xf32>
    %67 = vector.multi_reduction <add>, %64, %cst_27 [1] : vector<8x128xf32> to vector<8xf32>
    %68 = vector.shape_cast %67 : vector<8xf32> to vector<8x1xf32>
    %cst_28 = arith.constant 1.280000e+02 : f32
    %69 = vector.broadcast %cst_28 : f32 to vector<8x1xf32>
    %70 = arith.divf %68, %69 : vector<8x1xf32>
    %71 = vector.broadcast %70 : vector<8x1xf32> to vector<8x128xf32>
    %72 = arith.subf %64, %71 : vector<8x128xf32>
    %73 = arith.mulf %72, %72 : vector<8x128xf32>
    %cst_29 = arith.constant dense<0.000000e+00> : vector<8xf32>
    %74 = vector.multi_reduction <add>, %73, %cst_29 [1] : vector<8x128xf32> to vector<8xf32>
    %75 = vector.shape_cast %74 : vector<8xf32> to vector<8x1xf32>
    %cst_30 = arith.constant 1.280000e+02 : f32
    %76 = vector.broadcast %cst_30 : f32 to vector<8x1xf32>
    %77 = arith.divf %75, %76 : vector<8x1xf32>
    %78 = vector.broadcast %70 : vector<8x1xf32> to vector<8x128xf32>
    %79 = arith.subf %64, %78 : vector<8x128xf32>
    %cst_31 = arith.constant 9.99999974E-6 : f32
    %80 = vector.broadcast %cst_31 : f32 to vector<8x1xf32>
    %81 = arith.addf %77, %80 : vector<8x1xf32>
    %82 = math.rsqrt %81 : vector<8x1xf32>
    %83 = vector.broadcast %82 : vector<8x1xf32> to vector<8x128xf32>
    %84 = arith.mulf %79, %83 : vector<8x128xf32>
    %85 = vector.broadcast %65 : vector<1x128xf32> to vector<8x128xf32>
    %86 = arith.mulf %84, %85 : vector<8x128xf32>
    %87 = vector.broadcast %66 : vector<1x128xf32> to vector<8x128xf32>
    %88 = arith.addf %86, %87 : vector<8x128xf32>
    %89 = arith.truncf %88 : vector<8x128xf32> to vector<8x128xbf16>
    %c0_32 = arith.constant 0 : index
    %c0_33 = arith.constant 0 : index
    %90 = vector.load %arg9[%c0_32, %c0_33] : memref<128x512xbf16, #tpu.memory_space<vmem>>, vector<128x512xbf16>
    %cst_34 = arith.constant dense<0.000000e+00> : vector<8x512xf32>
    %91 = tpu.matmul %89, %90, %cst_34 {dimension_numbers = #tpu.dot_dimension_numbers<[1], [0], [0], [1], [0, 0, 1, 1], [], []>} : vector<8x128xbf16>, vector<128x512xbf16>, vector<8x512xf32> -> vector<8x512xf32>
    %c0_35 = arith.constant 0 : index
    %c0_36 = arith.constant 0 : index
    %92 = vector.load %arg10[%c0_35, %c0_36] : memref<1x512xf32, #tpu.memory_space<vmem>>, vector<1x512xf32>
    %93 = vector.broadcast %92 : vector<1x512xf32> to vector<8x512xf32>
    %94 = arith.addf %91, %93 : vector<8x512xf32>
    %cst_37 = arith.constant 5.000000e-01 : f32
    %95 = vector.broadcast %cst_37 : f32 to vector<8x512xf32>
    %96 = arith.mulf %95, %94 : vector<8x512xf32>
    %cst_38 = arith.constant 0.707106769 : f32
    %97 = vector.broadcast %cst_38 : f32 to vector<8x512xf32>
    %98 = arith.mulf %94, %97 : vector<8x512xf32>
    %99 = math.absf %98 : vector<8x512xf32>
    %cst_39 = arith.constant 0.327591091 : f32
    %100 = vector.broadcast %cst_39 : f32 to vector<8x512xf32>
    %101 = arith.mulf %100, %99 : vector<8x512xf32>
    %cst_40 = arith.constant 1.000000e+00 : f32
    %102 = vector.broadcast %cst_40 : f32 to vector<8x512xf32>
    %103 = arith.addf %102, %101 : vector<8x512xf32>
    %cst_41 = arith.constant 1.000000e+00 : f32
    %104 = vector.broadcast %cst_41 : f32 to vector<8x512xf32>
    %105 = arith.divf %104, %103 : vector<8x512xf32>
    %cst_42 = arith.constant 1.06140542 : f32
    %106 = vector.broadcast %cst_42 : f32 to vector<8x512xf32>
    %107 = arith.mulf %106, %105 : vector<8x512xf32>
    %cst_43 = arith.constant -1.45315206 : f32
    %108 = vector.broadcast %cst_43 : f32 to vector<8x512xf32>
    %109 = arith.addf %107, %108 : vector<8x512xf32>
    %110 = arith.mulf %109, %105 : vector<8x512xf32>
    %cst_44 = arith.constant 1.42141378 : f32
    %111 = vector.broadcast %cst_44 : f32 to vector<8x512xf32>
    %112 = arith.addf %110, %111 : vector<8x512xf32>
    %113 = arith.mulf %112, %105 : vector<8x512xf32>
    %cst_45 = arith.constant -0.284496725 : f32
    %114 = vector.broadcast %cst_45 : f32 to vector<8x512xf32>
    %115 = arith.addf %113, %114 : vector<8x512xf32>
    %116 = arith.mulf %115, %105 : vector<8x512xf32>
    %cst_46 = arith.constant 0.254829586 : f32
    %117 = vector.broadcast %cst_46 : f32 to vector<8x512xf32>
    %118 = arith.addf %116, %117 : vector<8x512xf32>
    %119 = arith.mulf %118, %105 : vector<8x512xf32>
    %cst_47 = arith.constant 0.000000e+00 : f32
    %120 = vector.broadcast %cst_47 : f32 to vector<8x512xf32>
    %121 = arith.subf %120, %99 : vector<8x512xf32>
    %122 = arith.mulf %121, %99 : vector<8x512xf32>
    %123 = math.exp %122 : vector<8x512xf32>
    %124 = arith.mulf %119, %123 : vector<8x512xf32>
    %cst_48 = arith.constant 1.000000e+00 : f32
    %125 = vector.broadcast %cst_48 : f32 to vector<8x512xf32>
    %126 = arith.subf %125, %124 : vector<8x512xf32>
    %cst_49 = arith.constant 0.000000e+00 : f32
    %127 = vector.broadcast %cst_49 : f32 to vector<8x512xf32>
    %128 = arith.cmpf oge, %98, %127 : vector<8x512xf32>
    %cst_50 = arith.constant 0.000000e+00 : f32
    %129 = vector.broadcast %cst_50 : f32 to vector<8x512xf32>
    %130 = arith.subf %129, %126 : vector<8x512xf32>
    %131 = arith.select %128, %126, %130 : vector<8x512xi1>, vector<8x512xf32>
    %cst_51 = arith.constant 1.000000e+00 : f32
    %132 = vector.broadcast %cst_51 : f32 to vector<8x512xf32>
    %133 = arith.addf %132, %131 : vector<8x512xf32>
    %134 = arith.mulf %96, %133 : vector<8x512xf32>
    %135 = arith.truncf %134 : vector<8x512xf32> to vector<8x512xbf16>
    %c0_52 = arith.constant 0 : index
    %c0_53 = arith.constant 0 : index
    %136 = vector.load %arg11[%c0_52, %c0_53] : memref<512x128xbf16, #tpu.memory_space<vmem>>, vector<512x128xbf16>
    %cst_54 = arith.constant dense<0.000000e+00> : vector<8x128xf32>
    %137 = tpu.matmul %135, %136, %cst_54 {dimension_numbers = #tpu.dot_dimension_numbers<[1], [0], [0], [1], [0, 0, 1, 1], [], []>} : vector<8x512xbf16>, vector<512x128xbf16>, vector<8x128xf32> -> vector<8x128xf32>
    %c0_55 = arith.constant 0 : index
    %c0_56 = arith.constant 0 : index
    %138 = vector.load %arg12[%c0_55, %c0_56] : memref<1x128xf32, #tpu.memory_space<vmem>>, vector<1x128xf32>
    %139 = vector.broadcast %138 : vector<1x128xf32> to vector<8x128xf32>
    %140 = arith.addf %137, %139 : vector<8x128xf32>
    %141 = arith.addf %64, %140 : vector<8x128xf32>
    %c0_57 = arith.constant 0 : index
    %c0_58 = arith.constant 0 : index
    %c0_59 = arith.constant 0 : index
    %142 = vector.load %arg13[%c0_57, %c0_58, %c0_59] : memref<1x8x128xf32, #tpu.memory_space<vmem>>, vector<1x8x128xf32>
    %143 = vector.shape_cast %142 : vector<1x8x128xf32> to vector<8x128xf32>
    %144 = vector.shape_cast %141 : vector<8x128xf32> to vector<1x8x128xf32>
    tpu.vector_store %arg13[%c0_57, %c0_58, %c0_59], %144 {strides = array<i32>} : memref<1x8x128xf32, #tpu.memory_space<vmem>>, vector<1x8x128xf32>,
    return
  }
  func.func @transform_0(%arg0: i32) -> (i32, i32, i32) {
    %c0_i32 = arith.constant 0 : i32
    %c0_i32_0 = arith.constant 0 : i32
    %c0_i32_1 = arith.constant 0 : i32
    return %arg0, %c0_i32, %c0_i32_0 : i32, i32, i32
  }
  func.func @transform_1(%arg0: i32) -> (i32, i32) {
    %c0_i32 = arith.constant 0 : i32
    %c0_i32_0 = arith.constant 0 : i32
    %c0_i32_1 = arith.constant 0 : i32
    return %c0_i32, %c0_i32_0 : i32, i32
  }
  func.func @transform_2(%arg0: i32) -> (i32, i32) {
    %c0_i32 = arith.constant 0 : i32
    %c0_i32_0 = arith.constant 0 : i32
    %c0_i32_1 = arith.constant 0 : i32
    return %c0_i32, %c0_i32_0 : i32, i32
  }
  func.func @transform_3(%arg0: i32) -> (i32, i32) {
    %c0_i32 = arith.constant 0 : i32
    %c0_i32_0 = arith.constant 0 : i32
    %c0_i32_1 = arith.constant 0 : i32
    return %c0_i32, %c0_i32_0 : i32, i32
  }
  func.func @transform_4(%arg0: i32) -> (i32, i32) {
    %c0_i32 = arith.constant 0 : i32
    %c0_i32_0 = arith.constant 0 : i32
    %c0_i32_1 = arith.constant 0 : i32
    return %c0_i32, %c0_i32_0 : i32, i32
  }
  func.func @transform_5(%arg0: i32) -> (i32, i32) {
    %c0_i32 = arith.constant 0 : i32
    %c0_i32_0 = arith.constant 0 : i32
    %c0_i32_1 = arith.constant 0 : i32
    return %c0_i32, %c0_i32_0 : i32, i32
  }
  func.func @transform_6(%arg0: i32) -> (i32, i32) {
    %c0_i32 = arith.constant 0 : i32
    %c0_i32_0 = arith.constant 0 : i32
    %c0_i32_1 = arith.constant 0 : i32
    return %c0_i32, %c0_i32_0 : i32, i32
  }
  func.func @transform_7(%arg0: i32) -> (i32, i32) {
    %c0_i32 = arith.constant 0 : i32
    %c0_i32_0 = arith.constant 0 : i32
    %c0_i32_1 = arith.constant 0 : i32
    return %c0_i32, %c0_i32_0 : i32, i32
  }
  func.func @transform_8(%arg0: i32) -> (i32, i32) {
    %c0_i32 = arith.constant 0 : i32
    %c0_i32_0 = arith.constant 0 : i32
    %c0_i32_1 = arith.constant 0 : i32
    return %c0_i32, %c0_i32_0 : i32, i32
  }
  func.func @transform_9(%arg0: i32) -> (i32, i32) {
    %c0_i32 = arith.constant 0 : i32
    %c0_i32_0 = arith.constant 0 : i32
    %c0_i32_1 = arith.constant 0 : i32
    return %c0_i32, %c0_i32_0 : i32, i32
  }
  func.func @transform_10(%arg0: i32) -> (i32, i32) {
    %c0_i32 = arith.constant 0 : i32
    %c0_i32_0 = arith.constant 0 : i32
    %c0_i32_1 = arith.constant 0 : i32
    return %c0_i32, %c0_i32_0 : i32, i32
  }
  func.func @transform_11(%arg0: i32) -> (i32, i32) {
    %c0_i32 = arith.constant 0 : i32
    %c0_i32_0 = arith.constant 0 : i32
    %c0_i32_1 = arith.constant 0 : i32
    return %c0_i32, %c0_i32_0 : i32, i32
  }
  func.func @transform_12(%arg0: i32) -> (i32, i32, i32) {
    %c0_i32 = arith.constant 0 : i32
    %c0_i32_0 = arith.constant 0 : i32
    %c0_i32_1 = arith.constant 0 : i32
    return %arg0, %c0_i32, %c0_i32_0 : i32, i32, i32
  }
}

module attributes {stable_mosaic.version = 11 : i64} {
  func.func @transformer_block_kernel(%arg0: i32, %arg1: memref<1x8x128xf32, #tpu.memory_space<vmem>>, %arg2: memref<1x128xf32, #tpu.memory_space<vmem>>, %arg3: memref<1x128xf32, #tpu.memory_space<vmem>>, %arg4: memref<128x384xbf16, #tpu.memory_space<vmem>>, %arg5: memref<128x128xbf16, #tpu.memory_space<vmem>>, %arg6: memref<1x128xf32, #tpu.memory_space<vmem>>, %arg7: memref<1x128xf32, #tpu.memory_space<vmem>>, %arg8: memref<1x128xf32, #tpu.memory_space<vmem>>, %arg9: memref<128x512xbf16, #tpu.memory_space<vmem>>, %arg10: memref<1x512xf32, #tpu.memory_space<vmem>>, %arg11: memref<512x128xbf16, #tpu.memory_space<vmem>>, %arg12: memref<1x128xf32, #tpu.memory_space<vmem>>, %arg13: memref<1x8x128xf32, #tpu.memory_space<vmem>>) attributes {dimension_semantics = [#tpu.dimension_semantics<parallel>], iteration_bounds = array<i64: 2>, scalar_prefetch = 0 : i64, scratch_operands = 0 : i64, tpu.core_type = #tpu.core_type<tc>, window_params = [{transform_indices = @transform_0, window_bounds = array<i64: 1, 8, 128>}, {pipeline_mode = #tpu.pipeline_mode<synchronous>, transform_indices = @transform_1, window_bounds = array<i64: 1, 128>}, {pipeline_mode = #tpu.pipeline_mode<synchronous>, transform_indices = @transform_2, window_bounds = array<i64: 1, 128>}, {pipeline_mode = #tpu.pipeline_mode<synchronous>, transform_indices = @transform_3, window_bounds = array<i64: 128, 384>}, {pipeline_mode = #tpu.pipeline_mode<synchronous>, transform_indices = @transform_4, window_bounds = array<i64: 128, 128>}, {pipeline_mode = #tpu.pipeline_mode<synchronous>, transform_indices = @transform_5, window_bounds = array<i64: 1, 128>}, {pipeline_mode = #tpu.pipeline_mode<synchronous>, transform_indices = @transform_6, window_bounds = array<i64: 1, 128>}, {pipeline_mode = #tpu.pipeline_mode<synchronous>, transform_indices = @transform_7, window_bounds = array<i64: 1, 128>}, {pipeline_mode = #tpu.pipeline_mode<synchronous>, transform_indices = @transform_8, window_bounds = array<i64: 128, 512>}, {pipeline_mode = #tpu.pipeline_mode<synchronous>, transform_indices = @transform_9, window_bounds = array<i64: 1, 512>}, {pipeline_mode = #tpu.pipeline_mode<synchronous>, transform_indices = @transform_10, window_bounds = array<i64: 512, 128>}, {pipeline_mode = #tpu.pipeline_mode<synchronous>, transform_indices = @transform_11, window_bounds = array<i64: 1, 128>}, {transform_indices = @transform_12, window_bounds = array<i64: 1, 8, 128>}]} {
    %c0 = arith.constant 0 : index
    %c0_0 = arith.constant 0 : index
    %c0_1 = arith.constant 0 : index
    %0 = vector.load %arg1[%c0, %c0_0, %c0_1] : memref<1x8x128xf32, #tpu.memory_space<vmem>>, vector<1x8x128xf32>
    %1 = vector.shape_cast %0 : vector<1x8x128xf32> to vector<8x128xf32>
    %c0_2 = arith.constant 0 : index
    %c0_3 = arith.constant 0 : index
    %2 = vector.load %arg2[%c0_2, %c0_3] : memref<1x128xf32, #tpu.memory_space<vmem>>, vector<1x128xf32>
    %c0_4 = arith.constant 0 : index
    %c0_5 = arith.constant 0 : index
    %3 = vector.load %arg3[%c0_4, %c0_5] : memref<1x128xf32, #tpu.memory_space<vmem>>, vector<1x128xf32>
    %cst = arith.constant dense<0.000000e+00> : vector<8xf32>
    %4 = vector.multi_reduction <add>, %1, %cst [1] : vector<8x128xf32> to vector<8xf32>
    %5 = vector.shape_cast %4 : vector<8xf32> to vector<8x1xf32>
    %cst_6 = arith.constant 1.280000e+02 : f32
    %6 = vector.broadcast %cst_6 : f32 to vector<8x1xf32>
    %7 = arith.divf %5, %6 : vector<8x1xf32>
    %8 = vector.broadcast %7 : vector<8x1xf32> to vector<8x128xf32>
    %9 = arith.subf %1, %8 : vector<8x128xf32>
    %10 = arith.mulf %9, %9 : vector<8x128xf32>
    %cst_7 = arith.constant dense<0.000000e+00> : vector<8xf32>
    %11 = vector.multi_reduction <add>, %10, %cst_7 [1] : vector<8x128xf32> to vector<8xf32>
    %12 = vector.shape_cast %11 : vector<8xf32> to vector<8x1xf32>
    %cst_8 = arith.constant 1.280000e+02 : f32
    %13 = vector.broadcast %cst_8 : f32 to vector<8x1xf32>
    %14 = arith.divf %12, %13 : vector<8x1xf32>
    %15 = vector.broadcast %7 : vector<8x1xf32> to vector<8x128xf32>
    %16 = arith.subf %1, %15 : vector<8x128xf32>
    %cst_9 = arith.constant 9.99999974E-6 : f32
    %17 = vector.broadcast %cst_9 : f32 to vector<8x1xf32>
    %18 = arith.addf %14, %17 : vector<8x1xf32>
    %19 = math.rsqrt %18 : vector<8x1xf32>
    %20 = vector.broadcast %19 : vector<8x1xf32> to vector<8x128xf32>
    %21 = arith.mulf %16, %20 : vector<8x128xf32>
    %22 = vector.broadcast %2 : vector<1x128xf32> to vector<8x128xf32>
    %23 = arith.mulf %21, %22 : vector<8x128xf32>
    %24 = vector.broadcast %3 : vector<1x128xf32> to vector<8x128xf32>
    %25 = arith.addf %23, %24 : vector<8x128xf32>
    %26 = arith.truncf %25 : vector<8x128xf32> to vector<8x128xbf16>
    %c0_10 = arith.constant 0 : index
    %c0_11 = arith.constant 0 : index
    %27 = vector.load %arg4[%c0_10, %c0_11] : memref<128x384xbf16, #tpu.memory_space<vmem>>, vector<128x384xbf16>
    %cst_12 = arith.constant dense<0.000000e+00> : vector<8x384xf32>
    %28 = tpu.matmul %26, %27, %cst_12 {dimension_numbers = #tpu.dot_dimension_numbers<[1], [0], [0], [1], [0, 0, 1, 1], [], []>} : vector<8x128xbf16>, vector<128x384xbf16>, vector<8x384xf32> -> vector<8x384xf32>
    %29 = vector.extract_strided_slice %28 {offsets = [0, 0], sizes = [8, 128], strides = [1, 1]} : vector<8x384xf32> to vector<8x128xf32>
    %cst_13 = arith.constant 0.176776692 : f32
    %30 = vector.broadcast %cst_13 : f32 to vector<8x128xf32>
    %31 = arith.mulf %29, %30 : vector<8x128xf32>
    %32 = arith.truncf %31 : vector<8x128xf32> to vector<8x128xbf16>
    %33 = vector.extract_strided_slice %28 {offsets = [0, 128], sizes = [8, 128], strides = [1, 1]} : vector<8x384xf32> to vector<8x128xf32>
    %34 = arith.truncf %33 : vector<8x128xf32> to vector<8x128xbf16>
    %35 = vector.extract_strided_slice %28 {offsets = [0, 256], sizes = [8, 128], strides = [1, 1]} : vector<8x384xf32> to vector<8x128xf32>
    %36 = arith.truncf %35 : vector<8x128xf32> to vector<8x128xbf16>
    %37 = vector.shape_cast %32 : vector<8x128xbf16> to vector<8x4x32xbf16>
    %38 = tpu.transpose %37, [1, 0, 2] : vector<8x4x32xbf16> -> vector<4x8x32xbf16>
    %39 = vector.shape_cast %34 : vector<8x128xbf16> to vector<8x4x32xbf16>
    %40 = tpu.transpose %39, [1, 0, 2] : vector<8x4x32xbf16> -> vector<4x8x32xbf16>
    %41 = vector.shape_cast %36 : vector<8x128xbf16> to vector<8x4x32xbf16>
    %42 = tpu.transpose %41, [1, 0, 2] : vector<8x4x32xbf16> -> vector<4x8x32xbf16>
    "tpu.trace_start"() <{level = 10 : i32, message = "hqd,hkd->hqk"}> : () -> ()
    %cst_14 = arith.constant dense<0.000000e+00> : vector<4x8x8xf32>
    %43 = tpu.matmul %38, %40, %cst_14 {dimension_numbers = #tpu.dot_dimension_numbers<[2], [2], [1], [1], [0, 0, 0, 1, 1, 1], [0], [0]>} : vector<4x8x32xbf16>, vector<4x8x32xbf16>, vector<4x8x8xf32> -> vector<4x8x8xf32>
    "tpu.trace_stop"() : () -> ()
    %cst_15 = arith.constant dense<0xFF800000> : vector<4x8xf32>
    %44 = vector.multi_reduction <maximumf>, %43, %cst_15 [2] : vector<4x8x8xf32> to vector<4x8xf32>
    %45 = vector.shape_cast %44 : vector<4x8xf32> to vector<4x8x1xf32>
    %46 = vector.broadcast %45 : vector<4x8x1xf32> to vector<4x8x8xf32>
    %47 = arith.subf %43, %46 : vector<4x8x8xf32>
    %48 = math.exp %47 : vector<4x8x8xf32>
    %cst_16 = arith.constant dense<0.000000e+00> : vector<4x8xf32>
    %49 = vector.multi_reduction <add>, %48, %cst_16 [2] : vector<4x8x8xf32> to vector<4x8xf32>
    %50 = vector.shape_cast %49 : vector<4x8xf32> to vector<4x8x1xf32>
    %51 = tpu.reciprocal %50 {approx = true} : vector<4x8x1xf32> -> vector<4x8x1xf32>
    %52 = vector.broadcast %51 : vector<4x8x1xf32> to vector<4x8x8xf32>
    %53 = arith.mulf %48, %52 : vector<4x8x8xf32>
    %54 = arith.truncf %53 : vector<4x8x8xf32> to vector<4x8x8xbf16>
    "tpu.trace_start"() <{level = 10 : i32, message = "hqk,hkd->hqd"}> : () -> ()
    %cst_17 = arith.constant dense<0.000000e+00> : vector<4x8x32xf32>
    %55 = tpu.matmul %54, %42, %cst_17 {dimension_numbers = #tpu.dot_dimension_numbers<[2], [1], [1], [2], [0, 0, 0, 1, 1, 2], [0], [0]>} : vector<4x8x8xbf16>, vector<4x8x32xbf16>, vector<4x8x32xf32> -> vector<4x8x32xf32>
    "tpu.trace_stop"() : () -> ()
    %56 = tpu.transpose %55, [1, 0, 2] : vector<4x8x32xf32> -> vector<8x4x32xf32>
    %57 = vector.shape_cast %56 : vector<8x4x32xf32> to vector<8x128xf32>
    %58 = arith.truncf %57 : vector<8x128xf32> to vector<8x128xbf16>
    %c0_18 = arith.constant 0 : index
    %c0_19 = arith.constant 0 : index
    %59 = vector.load %arg5[%c0_18, %c0_19] : memref<128x128xbf16, #tpu.memory_space<vmem>>, vector<128x128xbf16>
    %cst_20 = arith.constant dense<0.000000e+00> : vector<8x128xf32>
    %60 = tpu.matmul %58, %59, %cst_20 {dimension_numbers = #tpu.dot_dimension_numbers<[1], [0], [0], [1], [0, 0, 1, 1], [], []>} : vector<8x128xbf16>, vector<128x128xbf16>, vector<8x128xf32> -> vector<8x128xf32>
    %c0_21 = arith.constant 0 : index
    %c0_22 = arith.constant 0 : index
    %61 = vector.load %arg6[%c0_21, %c0_22] : memref<1x128xf32, #tpu.memory_space<vmem>>, vector<1x128xf32>
    %62 = vector.broadcast %61 : vector<1x128xf32> to vector<8x128xf32>
    %63 = arith.addf %60, %62 : vector<8x128xf32>
    %64 = arith.addf %1, %63 : vector<8x128xf32>
    %c0_23 = arith.constant 0 : index
    %c0_24 = arith.constant 0 : index
    %65 = vector.load %arg7[%c0_23, %c0_24] : memref<1x128xf32, #tpu.memory_space<vmem>>, vector<1x128xf32>
    %c0_25 = arith.constant 0 : index
    %c0_26 = arith.constant 0 : index
    %66 = vector.load %arg8[%c0_25, %c0_26] : memref<1x128xf32, #tpu.memory_space<vmem>>, vector<1x128xf32>
    %cst_27 = arith.constant dense<0.000000e+00> : vector<8xf32>
    %67 = vector.multi_reduction <add>, %64, %cst_27 [1] : vector<8x128xf32> to vector<8xf32>
    %68 = vector.shape_cast %67 : vector<8xf32> to vector<8x1xf32>
    %cst_28 = arith.constant 1.280000e+02 : f32
    %69 = vector.broadcast %cst_28 : f32 to vector<8x1xf32>
    %70 = arith.divf %68, %69 : vector<8x1xf32>
    %71 = vector.broadcast %70 : vector<8x1xf32> to vector<8x128xf32>
    %72 = arith.subf %64, %71 : vector<8x128xf32>
    %73 = arith.mulf %72, %72 : vector<8x128xf32>
    %cst_29 = arith.constant dense<0.000000e+00> : vector<8xf32>
    %74 = vector.multi_reduction <add>, %73, %cst_29 [1] : vector<8x128xf32> to vector<8xf32>
    %75 = vector.shape_cast %74 : vector<8xf32> to vector<8x1xf32>
    %cst_30 = arith.constant 1.280000e+02 : f32
    %76 = vector.broadcast %cst_30 : f32 to vector<8x1xf32>
    %77 = arith.divf %75, %76 : vector<8x1xf32>
    %78 = vector.broadcast %70 : vector<8x1xf32> to vector<8x128xf32>
    %79 = arith.subf %64, %78 : vector<8x128xf32>
    %cst_31 = arith.constant 9.99999974E-6 : f32
    %80 = vector.broadcast %cst_31 : f32 to vector<8x1xf32>
    %81 = arith.addf %77, %80 : vector<8x1xf32>
    %82 = math.rsqrt %81 : vector<8x1xf32>
    %83 = vector.broadcast %82 : vector<8x1xf32> to vector<8x128xf32>
    %84 = arith.mulf %79, %83 : vector<8x128xf32>
    %85 = vector.broadcast %65 : vector<1x128xf32> to vector<8x128xf32>
    %86 = arith.mulf %84, %85 : vector<8x128xf32>
    %87 = vector.broadcast %66 : vector<1x128xf32> to vector<8x128xf32>
    %88 = arith.addf %86, %87 : vector<8x128xf32>
    %89 = arith.truncf %88 : vector<8x128xf32> to vector<8x128xbf16>
    %c0_32 = arith.constant 0 : index
    %c0_33 = arith.constant 0 : index
    %90 = vector.load %arg9[%c0_32, %c0_33] : memref<128x512xbf16, #tpu.memory_space<vmem>>, vector<128x512xbf16>
    %cst_34 = arith.constant dense<0.000000e+00> : vector<8x512xf32>
    %91 = tpu.matmul %89, %90, %cst_34 {dimension_numbers = #tpu.dot_dimension_numbers<[1], [0], [0], [1], [0, 0, 1, 1], [], []>} : vector<8x128xbf16>, vector<128x512xbf16>, vector<8x512xf32> -> vector<8x512xf32>
    %c0_35 = arith.constant 0 : index
    %c0_36 = arith.constant 0 : index
    %92 = vector.load %arg10[%c0_35, %c0_36] : memref<1x512xf32, #tpu.memory_space<vmem>>, vector<1x512xf32>
    %93 = vector.broadcast %92 : vector<1x512xf32> to vector<8x512xf32>
    %94 = arith.addf %91, %93 : vector<8x512xf32>
    %cst_37 = arith.constant 5.000000e-01 : f32
    %95 = vector.broadcast %cst_37 : f32 to vector<8x512xf32>
    %96 = arith.mulf %95, %94 : vector<8x512xf32>
    %cst_38 = arith.constant 0.707106769 : f32
    %97 = vector.broadcast %cst_38 : f32 to vector<8x512xf32>
    %98 = arith.mulf %94, %97 : vector<8x512xf32>
    %99 = math.absf %98 : vector<8x512xf32>
    %cst_39 = arith.constant 0.327591091 : f32
    %100 = vector.broadcast %cst_39 : f32 to vector<8x512xf32>
    %101 = arith.mulf %100, %99 : vector<8x512xf32>
    %cst_40 = arith.constant 1.000000e+00 : f32
    %102 = vector.broadcast %cst_40 : f32 to vector<8x512xf32>
    %103 = arith.addf %102, %101 : vector<8x512xf32>
    %cst_41 = arith.constant 1.000000e+00 : f32
    %104 = vector.broadcast %cst_41 : f32 to vector<8x512xf32>
    %105 = arith.divf %104, %103 : vector<8x512xf32>
    %cst_42 = arith.constant 1.06140542 : f32
    %106 = vector.broadcast %cst_42 : f32 to vector<8x512xf32>
    %107 = arith.mulf %106, %105 : vector<8x512xf32>
    %cst_43 = arith.constant -1.45315206 : f32
    %108 = vector.broadcast %cst_43 : f32 to vector<8x512xf32>
    %109 = arith.addf %107, %108 : vector<8x512xf32>
    %110 = arith.mulf %109, %105 : vector<8x512xf32>
    %cst_44 = arith.constant 1.42141378 : f32
    %111 = vector.broadcast %cst_44 : f32 to vector<8x512xf32>
    %112 = arith.addf %110, %111 : vector<8x512xf32>
    %113 = arith.mulf %112, %105 : vector<8x512xf32>
    %cst_45 = arith.constant -0.284496725 : f32
    %114 = vector.broadcast %cst_45 : f32 to vector<8x512xf32>
    %115 = arith.addf %113, %114 : vector<8x512xf32>
    %116 = arith.mulf %115, %105 : vector<8x512xf32>
    %cst_46 = arith.constant 0.254829586 : f32
    %117 = vector.broadcast %cst_46 : f32 to vector<8x512xf32>
    %118 = arith.addf %116, %117 : vector<8x512xf32>
    %119 = arith.mulf %118, %105 : vector<8x512xf32>
    %cst_47 = arith.constant 0.000000e+00 : f32
    %120 = vector.broadcast %cst_47 : f32 to vector<8x512xf32>
    %121 = arith.subf %120, %99 : vector<8x512xf32>
    %122 = arith.mulf %121, %99 : vector<8x512xf32>
    %123 = math.exp %122 : vector<8x512xf32>
    %124 = arith.mulf %119, %123 : vector<8x512xf32>
    %cst_48 = arith.constant 1.000000e+00 : f32
    %125 = vector.broadcast %cst_48 : f32 to vector<8x512xf32>
    %126 = arith.subf %125, %124 : vector<8x512xf32>
    %cst_49 = arith.constant 0.000000e+00 : f32
    %127 = vector.broadcast %cst_49 : f32 to vector<8x512xf32>
    %128 = arith.cmpf oge, %98, %127 : vector<8x512xf32>
    %cst_50 = arith.constant 0.000000e+00 : f32
    %129 = vector.broadcast %cst_50 : f32 to vector<8x512xf32>
    %130 = arith.subf %129, %126 : vector<8x512xf32>
    %131 = arith.select %128, %126, %130 : vector<8x512xi1>, vector<8x512xf32>
    %cst_51 = arith.constant 1.000000e+00 : f32
    %132 = vector.broadcast %cst_51 : f32 to vector<8x512xf32>
    %133 = arith.addf %132, %131 : vector<8x512xf32>
    %134 = arith.mulf %96, %133 : vector<8x512xf32>
    %135 = arith.truncf %134 : vector<8x512xf32> to vector<8x512xbf16>
    %c0_52 = arith.constant 0 : index
    %c0_53 = arith.constant 0 : index
    %136 = vector.load %arg11[%c0_52, %c0_53] : memref<512x128xbf16, #tpu.memory_space<vmem>>, vector<512x128xbf16>
    %cst_54 = arith.constant dense<0.000000e+00> : vector<8x128xf32>
    %137 = tpu.matmul %135, %136, %cst_54 {dimension_numbers = #tpu.dot_dimension_numbers<[1], [0], [0], [1], [0, 0, 1, 1], [], []>} : vector<8x512xbf16>, vector<512x128xbf16>, vector<8x128xf32> -> vector<8x128xf32>
    %c0_55 = arith.constant 0 : index
    %c0_56 = arith.constant 0 : index
    %138 = vector.load %arg12[%c0_55, %c0_56] : memref<1x128xf32, #tpu.memory_space<vmem>>, vector<1x128xf32>
    %139 = vector.broadcast %138 : vector<1x128xf32> to vector<8x128xf32>
    %140 = arith.addf %137, %139 : vector<8x128xf32>
    %141 = arith.addf %64, %140 : vector<8x128xf32>
    %c0_57 = arith.constant 0 : index
    %c0_58 = arith.constant 0 : index
    %c0_59 = arith.constant 0 : index
    %142 = vector.load %arg13[%c0_57, %c0_58, %c0_59] : memref<1x8x128xf32, #tpu.memory_space<vmem>>, vector<1x8x128xf32>
    %143 = vector.shape_cast %142 : vector<1x8x128xf32> to vector<8x128xf32>
    %144 = vector.shape_cast %141 : vector<8x128xf32> to vector<1x8x128xf32>
    tpu.vector_store %arg13[%c0_57, %c0_58, %c0_59], %144 {strides = array<i32>} : memref<1x8x128xf32, #tpu.memory_space<vmem>>, vector<1x8x128xf32>,
    return
  }
  func.func @transform_0(%arg0: i32) -> (i32, i32, i32) {
    %c0_i32 = arith.constant 0 : i32
    %c0_i32_0 = arith.constant 0 : i32
    %c0_i32_1 = arith.constant 0 : i32
    return %arg0, %c0_i32, %c0_i32_0 : i32, i32, i32
  }
  func.func @transform_1(%arg0: i32) -> (i32, i32) {
    %c0_i32 = arith.constant 0 : i32
    %c0_i32_0 = arith.constant 0 : i32
    %c0_i32_1 = arith.constant 0 : i32
    return %c0_i32, %c0_i32_0 : i32, i32
  }
  func.func @transform_2(%arg0: i32) -> (i32, i32) {
    %c0_i32 = arith.constant 0 : i32
    %c0_i32_0 = arith.constant 0 : i32
    %c0_i32_1 = arith.constant 0 : i32
    return %c0_i32, %c0_i32_0 : i32, i32
  }
  func.func @transform_3(%arg0: i32) -> (i32, i32) {
    %c0_i32 = arith.constant 0 : i32
    %c0_i32_0 = arith.constant 0 : i32
    %c0_i32_1 = arith.constant 0 : i32
    return %c0_i32, %c0_i32_0 : i32, i32
  }
  func.func @transform_4(%arg0: i32) -> (i32, i32) {
    %c0_i32 = arith.constant 0 : i32
    %c0_i32_0 = arith.constant 0 : i32
    %c0_i32_1 = arith.constant 0 : i32
    return %c0_i32, %c0_i32_0 : i32, i32
  }
  func.func @transform_5(%arg0: i32) -> (i32, i32) {
    %c0_i32 = arith.constant 0 : i32
    %c0_i32_0 = arith.constant 0 : i32
    %c0_i32_1 = arith.constant 0 : i32
    return %c0_i32, %c0_i32_0 : i32, i32
  }
  func.func @transform_6(%arg0: i32) -> (i32, i32) {
    %c0_i32 = arith.constant 0 : i32
    %c0_i32_0 = arith.constant 0 : i32
    %c0_i32_1 = arith.constant 0 : i32
    return %c0_i32, %c0_i32_0 : i32, i32
  }
  func.func @transform_7(%arg0: i32) -> (i32, i32) {
    %c0_i32 = arith.constant 0 : i32
    %c0_i32_0 = arith.constant 0 : i32
    %c0_i32_1 = arith.constant 0 : i32
    return %c0_i32, %c0_i32_0 : i32, i32
  }
  func.func @transform_8(%arg0: i32) -> (i32, i32) {
    %c0_i32 = arith.constant 0 : i32
    %c0_i32_0 = arith.constant 0 : i32
    %c0_i32_1 = arith.constant 0 : i32
    return %c0_i32, %c0_i32_0 : i32, i32
  }
  func.func @transform_9(%arg0: i32) -> (i32, i32) {
    %c0_i32 = arith.constant 0 : i32
    %c0_i32_0 = arith.constant 0 : i32
    %c0_i32_1 = arith.constant 0 : i32
    return %c0_i32, %c0_i32_0 : i32, i32
  }
  func.func @transform_10(%arg0: i32) -> (i32, i32) {
    %c0_i32 = arith.constant 0 : i32
    %c0_i32_0 = arith.constant 0 : i32
    %c0_i32_1 = arith.constant 0 : i32
    return %c0_i32, %c0_i32_0 : i32, i32
  }
  func.func @transform_11(%arg0: i32) -> (i32, i32) {
    %c0_i32 = arith.constant 0 : i32
    %c0_i32_0 = arith.constant 0 : i32
    %c0_i32_1 = arith.constant 0 : i32
    return %c0_i32, %c0_i32_0 : i32, i32
  }
  func.func @transform_12(%arg0: i32) -> (i32, i32, i32) {
    %c0_i32 = arith.constant 0 : i32
    %c0_i32_0 = arith.constant 0 : i32
    %c0_i32_1 = arith.constant 0 : i32
    return %arg0, %c0_i32, %c0_i32_0 : i32, i32, i32
  }
}

</mosaic_0001>

<llo_original>
// kernel: tpu_custom_call.1
$region0: #{tpu_custom_call.1}
  #allocation0 [shape = 'u32[]', space=smem, size = 0x4, offset = 0x4, fixed_abs, tag = 'smem constant byte address 0x4 - core index']
  #allocation1 [shape = 'u32[144,128]{1,0:T(1,128)}', space=vmem, size = 0x12000, scoped, tag = 'internal scratch']
  %s0 = inlined_call_operand.hbm [shape: f32[2,8,128], index: 0, kind: input, shape index: {}]
  %s1 = inlined_call_operand.vmem [shape: f32[1,128], index: 1, kind: input, shape index: {}]
  %s2 = inlined_call_operand.vmem [shape: f32[1,128], index: 2, kind: input, shape index: {}]
  %s3 = inlined_call_operand.hbm [shape: bf16[128,384], index: 3, kind: input, shape index: {}]
  %s4 = inlined_call_operand.hbm [shape: bf16[128,128], index: 4, kind: input, shape index: {}]
  %s5 = inlined_call_operand.vmem [shape: f32[1,128], index: 5, kind: input, shape index: {}]
  %s6 = inlined_call_operand.vmem [shape: f32[1,128], index: 6, kind: input, shape index: {}]
  %s7 = inlined_call_operand.vmem [shape: f32[1,128], index: 7, kind: input, shape index: {}]
  %s8 = inlined_call_operand.hbm [shape: bf16[128,512], index: 8, kind: input, shape index: {}]
  %s9 = inlined_call_operand.vmem [shape: f32[1,512], index: 9, kind: input, shape index: {}]
  %s10 = inlined_call_operand.hbm [shape: bf16[512,128], index: 10, kind: input, shape index: {}]
  %s11 = inlined_call_operand.vmem [shape: f32[1,128], index: 11, kind: input, shape index: {}]
  %s12 = inlined_call_operand.hbm [shape: f32[2,8,128], index: 12, kind: output, shape index: {}]
  %s13 = sld [smem:[#allocation0]]
  $region101: #{tpu_custom_call.1} parent=0
    _
  %s15 = ssub.s32 1, %s13
  %s16 = scalar_select 0, %s15, %s13
  $region1: #{tpu_custom_call.1} parent=0
    #allocation2 [shape = 'u8[8192]{0}', space=vmem, size = 0x2000, scoped, tag = 'input window, operand 0']
    #allocation3 [shape = 's32[2]{0}', space=sflag, size = 0x8, scoped, tag = 'scoped memory for tpu_custom_call.1']
    #allocation4 [shape = 's32[2]{0}', space=sflag, size = 0x8, scoped, tag = 'scoped memory for tpu_custom_call.1']
    #allocation5 [shape = 'u8[98304]{0}', space=vmem, size = 0x18000, scoped, tag = 'input window, operand 3, single buffered']
    #allocation6 [shape = 's32[1]{0}', space=sflag, size = 0x4, scoped, tag = 'scoped memory for tpu_custom_call.1']
    #allocation7 [shape = 'u8[32768]{0}', space=vmem, size = 0x8000, scoped, tag = 'input window, operand 4, single buffered']
    #allocation8 [shape = 'u8[131072]{0}', space=vmem, size = 0x20000, scoped, tag = 'input window, operand 8, single buffered']
    #allocation9 [shape = 's32[1]{0}', space=sflag, size = 0x4, scoped, tag = 'scoped memory for tpu_custom_call.1']
    #allocation10 [shape = 'u8[131072]{0}', space=vmem, size = 0x20000, scoped, tag = 'input window, operand 10, single buffered']
    #allocation11 [shape = 'u8[8192]{0}', space=vmem, size = 0x2000, scoped, tag = 'output window, operand 0']
    %17 = vsyncpa [#allocation3], 0
    %s18 = scalar_lea.sflag [#allocation3], 1
    %19 = vsyncpa %s18, 0
    %20 = vsyncpa [#allocation6], 0
    %21 = vsyncpa [#allocation9], 0
    %22 = vsyncpa [#allocation4], 0
    %s23 = scalar_lea.sflag [#allocation4], 1
    %24 = vsyncpa %s23, 0
    loop: start=0, step=1, limit=4
    $region2: #{tpu_custom_call.1} parent=1 // loop_pre_header
      _
    $region3: #{tpu_custom_call.1} parent=1 // loop_header
      %s26 = sphi 0, %s30
      %p27 = scmp.ge.s32.totalorder %s26, 4
      %s36 = sphi 0, %s38
      %s39 = sphi 0, %s36
      %s40 = sphi 0, %s39
      %s56 = sphi 0, %s40
      %s60 = sphi 0, %s60
      %s62 = sphi 0, %s60
      %s63 = sphi 0, %s62
      %s77 = sphi 0, %s63
      %s81 = sphi 0, %s81
      %s83 = sphi 0, %s81
      %s84 = sphi 0, %s83
      %s98 = sphi 0, %s84
      %s102 = sphi 0, %s102
      %s104 = sphi 0, %s102
      %s105 = sphi 0, %s104
      %s119 = sphi 0, %s105
      %s123 = sphi 0, %s123
      %s125 = sphi 0, %s123
      %s126 = sphi 0, %s125
      %s140 = sphi 0, %s126
      %s144 = sphi 0, %s144
      %s146 = sphi 0, %s144
      %s147 = sphi 0, %s146
      %s161 = sphi 0, %s147
      %s165 = sphi 0, %s165
      %s167 = sphi 0, %s165
      %s168 = sphi 0, %s167
      %s182 = sphi 0, %s168
      %s186 = sphi 0, %s186
      %s188 = sphi 0, %s186
      %s189 = sphi 0, %s188
      %s203 = sphi 0, %s189
      %s207 = sphi 0, %s207
      %s209 = sphi 0, %s207
      %s210 = sphi 0, %s209
      %s224 = sphi 0, %s210
      %s228 = sphi 0, %s228
      %s230 = sphi 0, %s228
      %s231 = sphi 0, %s230
      %s245 = sphi 0, %s231
      %s249 = sphi 0, %s249
      %s251 = sphi 0, %s249
      %s252 = sphi 0, %s251
      %s266 = sphi 0, %s252
      %s270 = sphi 0, %s270
      %s272 = sphi 0, %s270
      %s273 = sphi 0, %s272
      %s287 = sphi 0, %s273
      %s293 = sphi 0, %s295
      %s296 = sphi 0, %s293
      %s297 = sphi 0, %s296
      %s313 = sphi 0, %s297
    $region4: #{tpu_custom_call.1} parent=1 // loop_header_branch
      %29 = sbr.rel (%p27) target = $region8
    $region5: #{tpu_custom_call.1} parent=1 // loop_body
      %s31 = ssub.s32 %s26, 1
      %s32 = ssub.s32 %s26, 2
      %s33 = sadd.s32 %s26, 1
      %s34 = ssub.s32 %s26, %s33
      %p35 = scmp.eq.s32.totalorder %s34, 0
      %s37 = sadd.s32 %s36, 1
      %s38 = scalar_select %p35, %s36, %s37
      %p41 = pneg %p35
      %p42 = scmp.eq.s32.totalorder %s26, 1
      %p43 = por %p41, %p42
      %p44 = scmp.ne.s32.totalorder %s36, %s39
      %p45 = scmp.eq.s32.totalorder %s26, 0
      %p46 = por %p44, %p45
      %p47 = scmp.ne.s32.totalorder %s36, %s39
      %p48 = scmp.eq.s32.totalorder %s31, 1
      %p49 = por %p47, %p48
      %p50 = scmp.ne.s32.totalorder %s39, %s40
      %p51 = scmp.eq.s32.totalorder %s31, 0
      %p52 = por %p50, %p51
      %p53 = scmp.ne.s32.totalorder %s39, %s40
      %p54 = scmp.eq.s32.totalorder %s32, 1
      %p55 = por %p53, %p54
      %p57 = scmp.ne.s32.totalorder %s40, %s56
      %p58 = scmp.eq.s32.totalorder %s32, 0
      %p59 = por %p57, %p58
      %s61 = sadd.s32 %s60, 1
      %p64 = scmp.eq.s32.totalorder %s26, 1
      %p65 = scmp.ne.s32.totalorder %s60, %s62
      %p66 = scmp.eq.s32.totalorder %s26, 0
      %p67 = por %p65, %p66
      %p68 = scmp.ne.s32.totalorder %s60, %s62
      %p69 = scmp.eq.s32.totalorder %s31, 1
      %p70 = por %p68, %p69
      %p71 = scmp.ne.s32.totalorder %s62, %s63
      %p72 = scmp.eq.s32.totalorder %s31, 0
      %p73 = por %p71, %p72
      %p74 = scmp.ne.s32.totalorder %s62, %s63
      %p75 = scmp.eq.s32.totalorder %s32, 1
      %p76 = por %p74, %p75
      %p78 = scmp.ne.s32.totalorder %s63, %s77
      %p79 = scmp.eq.s32.totalorder %s32, 0
      %p80 = por %p78, %p79
      %s82 = sadd.s32 %s81, 1
      %p85 = scmp.eq.s32.totalorder %s26, 1
      %p86 = scmp.ne.s32.totalorder %s81, %s83
      %p87 = scmp.eq.s32.totalorder %s26, 0
      %p88 = por %p86, %p87
      %p89 = scmp.ne.s32.totalorder %s81, %s83
      %p90 = scmp.eq.s32.totalorder %s31, 1
      %p91 = por %p89, %p90
      %p92 = scmp.ne.s32.totalorder %s83, %s84
      %p93 = scmp.eq.s32.totalorder %s31, 0
      %p94 = por %p92, %p93
      %p95 = scmp.ne.s32.totalorder %s83, %s84
      %p96 = scmp.eq.s32.totalorder %s32, 1
      %p97 = por %p95, %p96
      %p99 = scmp.ne.s32.totalorder %s84, %s98
      %p100 = scmp.eq.s32.totalorder %s32, 0
      %p101 = por %p99, %p100
      %s103 = sadd.s32 %s102, 1
      %p106 = scmp.eq.s32.totalorder %s26, 1
      %p107 = scmp.ne.s32.totalorder %s102, %s104
      %p108 = scmp.eq.s32.totalorder %s26, 0
      %p109 = por %p107, %p108
      %p110 = scmp.ne.s32.totalorder %s102, %s104
      %p111 = scmp.eq.s32.totalorder %s31, 1
      %p112 = por %p110, %p111
      %p113 = scmp.ne.s32.totalorder %s104, %s105
      %p114 = scmp.eq.s32.totalorder %s31, 0
      %p115 = por %p113, %p114
      %p116 = scmp.ne.s32.totalorder %s104, %s105
      %p117 = scmp.eq.s32.totalorder %s32, 1
      %p118 = por %p116, %p117
      %p120 = scmp.ne.s32.totalorder %s105, %s119
      %p121 = scmp.eq.s32.totalorder %s32, 0
      %p122 = por %p120, %p121
      %s124 = sadd.s32 %s123, 1
      %p127 = scmp.eq.s32.totalorder %s26, 1
      %p128 = scmp.ne.s32.totalorder %s123, %s125
      %p129 = scmp.eq.s32.totalorder %s26, 0
      %p130 = por %p128, %p129
      %p131 = scmp.ne.s32.totalorder %s123, %s125
      %p132 = scmp.eq.s32.totalorder %s31, 1
      %p133 = por %p131, %p132
      %p134 = scmp.ne.s32.totalorder %s125, %s126
      %p135 = scmp.eq.s32.totalorder %s31, 0
      %p136 = por %p134, %p135
      %p137 = scmp.ne.s32.totalorder %s125, %s126
      %p138 = scmp.eq.s32.totalorder %s32, 1
      %p139 = por %p137, %p138
      %p141 = scmp.ne.s32.totalorder %s126, %s140
      %p142 = scmp.eq.s32.totalorder %s32, 0
      %p143 = por %p141, %p142
      %s145 = sadd.s32 %s144, 1
      %p148 = scmp.eq.s32.totalorder %s26, 1
      %p149 = scmp.ne.s32.totalorder %s144, %s146
      %p150 = scmp.eq.s32.totalorder %s26, 0
      %p151 = por %p149, %p150
      %p152 = scmp.ne.s32.totalorder %s144, %s146
      %p153 = scmp.eq.s32.totalorder %s31, 1
      %p154 = por %p152, %p153
      %p155 = scmp.ne.s32.totalorder %s146, %s147
      %p156 = scmp.eq.s32.totalorder %s31, 0
      %p157 = por %p155, %p156
      %p158 = scmp.ne.s32.totalorder %s146, %s147
      %p159 = scmp.eq.s32.totalorder %s32, 1
      %p160 = por %p158, %p159
      %p162 = scmp.ne.s32.totalorder %s147, %s161
      %p163 = scmp.eq.s32.totalorder %s32, 0
      %p164 = por %p162, %p163
      %s166 = sadd.s32 %s165, 1
      %p169 = scmp.eq.s32.totalorder %s26, 1
      %p170 = scmp.ne.s32.totalorder %s165, %s167
      %p171 = scmp.eq.s32.totalorder %s26, 0
      %p172 = por %p170, %p171
      %p173 = scmp.ne.s32.totalorder %s165, %s167
      %p174 = scmp.eq.s32.totalorder %s31, 1
      %p175 = por %p173, %p174
      %p176 = scmp.ne.s32.totalorder %s167, %s168
      %p177 = scmp.eq.s32.totalorder %s31, 0
      %p178 = por %p176, %p177
      %p179 = scmp.ne.s32.totalorder %s167, %s168
      %p180 = scmp.eq.s32.totalorder %s32, 1
      %p181 = por %p179, %p180
      %p183 = scmp.ne.s32.totalorder %s168, %s182
      %p184 = scmp.eq.s32.totalorder %s32, 0
      %p185 = por %p183, %p184
      %s187 = sadd.s32 %s186, 1
      %p190 = scmp.eq.s32.totalorder %s26, 1
      %p191 = scmp.ne.s32.totalorder %s186, %s188
      %p192 = scmp.eq.s32.totalorder %s26, 0
      %p193 = por %p191, %p192
      %p194 = scmp.ne.s32.totalorder %s186, %s188
      %p195 = scmp.eq.s32.totalorder %s31, 1
      %p196 = por %p194, %p195
      %p197 = scmp.ne.s32.totalorder %s188, %s189
      %p198 = scmp.eq.s32.totalorder %s31, 0
      %p199 = por %p197, %p198
      %p200 = scmp.ne.s32.totalorder %s188, %s189
      %p201 = scmp.eq.s32.totalorder %s32, 1
      %p202 = por %p200, %p201
      %p204 = scmp.ne.s32.totalorder %s189, %s203
      %p205 = scmp.eq.s32.totalorder %s32, 0
      %p206 = por %p204, %p205
      %s208 = sadd.s32 %s207, 1
      %p211 = scmp.eq.s32.totalorder %s26, 1
      %p212 = scmp.ne.s32.totalorder %s207, %s209
      %p213 = scmp.eq.s32.totalorder %s26, 0
      %p214 = por %p212, %p213
      %p215 = scmp.ne.s32.totalorder %s207, %s209
      %p216 = scmp.eq.s32.totalorder %s31, 1
      %p217 = por %p215, %p216
      %p218 = scmp.ne.s32.totalorder %s209, %s210
      %p219 = scmp.eq.s32.totalorder %s31, 0
      %p220 = por %p218, %p219
      %p221 = scmp.ne.s32.totalorder %s209, %s210
      %p222 = scmp.eq.s32.totalorder %s32, 1
      %p223 = por %p221, %p222
      %p225 = scmp.ne.s32.totalorder %s210, %s224
      %p226 = scmp.eq.s32.totalorder %s32, 0
      %p227 = por %p225, %p226
      %s229 = sadd.s32 %s228, 1
      %p232 = scmp.eq.s32.totalorder %s26, 1
      %p233 = scmp.ne.s32.totalorder %s228, %s230
      %p234 = scmp.eq.s32.totalorder %s26, 0
      %p235 = por %p233, %p234
      %p236 = scmp.ne.s32.totalorder %s228, %s230
      %p237 = scmp.eq.s32.totalorder %s31, 1
      %p238 = por %p236, %p237
      %p239 = scmp.ne.s32.totalorder %s230, %s231
      %p240 = scmp.eq.s32.totalorder %s31, 0
      %p241 = por %p239, %p240
      %p242 = scmp.ne.s32.totalorder %s230, %s231
      %p243 = scmp.eq.s32.totalorder %s32, 1
      %p244 = por %p242, %p243
      %p246 = scmp.ne.s32.totalorder %s231, %s245
      %p247 = scmp.eq.s32.totalorder %s32, 0
      %p248 = por %p246, %p247
      %s250 = sadd.s32 %s249, 1
      %p253 = scmp.eq.s32.totalorder %s26, 1
      %p254 = scmp.ne.s32.totalorder %s249, %s251
      %p255 = scmp.eq.s32.totalorder %s26, 0
      %p256 = por %p254, %p255
      %p257 = scmp.ne.s32.totalorder %s249, %s251
      %p258 = scmp.eq.s32.totalorder %s31, 1
      %p259 = por %p257, %p258
      %p260 = scmp.ne.s32.totalorder %s251, %s252
      %p261 = scmp.eq.s32.totalorder %s31, 0
      %p262 = por %p260, %p261
      %p263 = scmp.ne.s32.totalorder %s251, %s252
      %p264 = scmp.eq.s32.totalorder %s32, 1
      %p265 = por %p263, %p264
      %p267 = scmp.ne.s32.totalorder %s252, %s266
      %p268 = scmp.eq.s32.totalorder %s32, 0
      %p269 = por %p267, %p268
      %s271 = sadd.s32 %s270, 1
      %p274 = scmp.eq.s32.totalorder %s26, 1
      %p275 = scmp.ne.s32.totalorder %s270, %s272
      %p276 = scmp.eq.s32.totalorder %s26, 0
      %p277 = por %p275, %p276
      %p278 = scmp.ne.s32.totalorder %s270, %s272
      %p279 = scmp.eq.s32.totalorder %s31, 1
      %p280 = por %p278, %p279
      %p281 = scmp.ne.s32.totalorder %s272, %s273
      %p282 = scmp.eq.s32.totalorder %s31, 0
      %p283 = por %p281, %p282
      %p284 = scmp.ne.s32.totalorder %s272, %s273
      %p285 = scmp.eq.s32.totalorder %s32, 1
      %p286 = por %p284, %p285
      %p288 = scmp.ne.s32.totalorder %s273, %s287
      %p289 = scmp.eq.s32.totalorder %s32, 0
      %p290 = por %p288, %p289
      %s291 = ssub.s32 %s26, %s33
      %p292 = scmp.eq.s32.totalorder %s291, 0
      %s294 = sadd.s32 %s293, 1
      %s295 = scalar_select %p292, %s293, %s294
      %p298 = pneg %p292
      %p299 = scmp.eq.s32.totalorder %s26, 1
      %p300 = por %p298, %p299
      %p301 = scmp.ne.s32.totalorder %s293, %s296
      %p302 = scmp.eq.s32.totalorder %s26, 0
      %p303 = por %p301, %p302
      %p304 = scmp.ne.s32.totalorder %s293, %s296
      %p305 = scmp.eq.s32.totalorder %s31, 1
      %p306 = por %p304, %p305
      %p307 = scmp.ne.s32.totalorder %s296, %s297
      %p308 = scmp.eq.s32.totalorder %s31, 0
      %p309 = por %p307, %p308
      %p310 = scmp.ne.s32.totalorder %s296, %s297
      %p311 = scmp.eq.s32.totalorder %s32, 1
      %p312 = por %p310, %p311
      %p314 = scmp.ne.s32.totalorder %s297, %s313
      %p315 = scmp.eq.s32.totalorder %s32, 0
      %p316 = por %p314, %p315
      %p317 = scmp.le.s32.totalorder 1, %s26
      %p318 = scmp.lt.s32.totalorder %s26, 3
      %p319 = pnand %p317, %p318
      %p320 = pneg %p319
      // Predicated region
      $region9: #{tpu_custom_call.1} parent=5 // pred_check
        _
      $region10: #{tpu_custom_call.1} parent=5 // pred_check_branch
        %322 = sbr.rel (%p319) target = $region12
      $region11: #{tpu_custom_call.1} parent=5 // pred_region
        %s323 = ssub.s32 %s26, 1
        // Predicated region
        $region13: #{tpu_custom_call.1} parent=11 // pred_check
          %p324 = pneg %p73
        $region14: #{tpu_custom_call.1} parent=11 // pred_check_branch
          %326 = sbr.rel (%p324) target = $region16
        $region15: #{tpu_custom_call.1} parent=11 // pred_region
          _
        $region16: #{tpu_custom_call.1} parent=11 // pred_fallthru
          _
        // Predicated region
        $region17: #{tpu_custom_call.1} parent=11 // pred_check
          %p327 = pneg %p94
        $region18: #{tpu_custom_call.1} parent=11 // pred_check_branch
          %329 = sbr.rel (%p327) target = $region20
        $region19: #{tpu_custom_call.1} parent=11 // pred_region
          _
        $region20: #{tpu_custom_call.1} parent=11 // pred_fallthru
          _
        // Predicated region
        $region21: #{tpu_custom_call.1} parent=11 // pred_check
          %p330 = pneg %p115
        $region22: #{tpu_custom_call.1} parent=11 // pred_check_branch
          %332 = sbr.rel (%p330) target = $region24
        $region23: #{tpu_custom_call.1} parent=11 // pred_region
          %s334 = ssub.s32 3072, 3072
          %335 = vsyncadd [#allocation6], %s334
          %s336 = sshll.u32 [#allocation5], 4
          %s337 = int_to_ptr.vmem [resolvable:$true] %s336
          %342 = dma.hbm_to_vmem [thread:$0]  %s3, 3072, %s337, [#allocation6], 192, 192, 12
        $region24: #{tpu_custom_call.1} parent=11 // pred_fallthru
          _
        // Predicated region
        $region25: #{tpu_custom_call.1} parent=11 // pred_check
          %p343 = pneg %p136
        $region26: #{tpu_custom_call.1} parent=11 // pred_check_branch
          %345 = sbr.rel (%p343) target = $region28
        $region27: #{tpu_custom_call.1} parent=11 // pred_region
          %s347 = ssub.s32 1024, 1024
          %348 = vsyncadd [#allocation6], %s347
          %s349 = sshll.u32 [#allocation7], 4
          %s350 = int_to_ptr.vmem [resolvable:$true] %s349
          %355 = dma.hbm_to_vmem [thread:$0]  %s4, 1024, %s350, [#allocation6], 64, 64, 4
        $region28: #{tpu_custom_call.1} parent=11 // pred_fallthru
          _
        // Predicated region
        $region29: #{tpu_custom_call.1} parent=11 // pred_check
          %p356 = pneg %p157
        $region30: #{tpu_custom_call.1} parent=11 // pred_check_branch
          %358 = sbr.rel (%p356) target = $region32
        $region31: #{tpu_custom_call.1} parent=11 // pred_region
          _
        $region32: #{tpu_custom_call.1} parent=11 // pred_fallthru
          _
        // Predicated region
        $region33: #{tpu_custom_call.1} parent=11 // pred_check
          %p359 = pneg %p178
        $region34: #{tpu_custom_call.1} parent=11 // pred_check_branch
          %361 = sbr.rel (%p359) target = $region36
        $region35: #{tpu_custom_call.1} parent=11 // pred_region
          _
        $region36: #{tpu_custom_call.1} parent=11 // pred_fallthru
          _
        // Predicated region
        $region37: #{tpu_custom_call.1} parent=11 // pred_check
          %p362 = pneg %p199
        $region38: #{tpu_custom_call.1} parent=11 // pred_check_branch
          %364 = sbr.rel (%p362) target = $region40
        $region39: #{tpu_custom_call.1} parent=11 // pred_region
          _
        $region40: #{tpu_custom_call.1} parent=11 // pred_fallthru
          _
        // Predicated region
        $region41: #{tpu_custom_call.1} parent=11 // pred_check
          %p365 = pneg %p220
        $region42: #{tpu_custom_call.1} parent=11 // pred_check_branch
          %367 = sbr.rel (%p365) target = $region44
        $region43: #{tpu_custom_call.1} parent=11 // pred_region
          %s369 = ssub.s32 4096, 4096
          %370 = vsyncadd [#allocation9], %s369
          %s371 = sshll.u32 [#allocation8], 4
          %s372 = int_to_ptr.vmem [resolvable:$true] %s371
          %377 = dma.hbm_to_vmem [thread:$0]  %s8, 4096, %s372, [#allocation9], 256, 256, 16
        $region44: #{tpu_custom_call.1} parent=11 // pred_fallthru
          _
        // Predicated region
        $region45: #{tpu_custom_call.1} parent=11 // pred_check
          %p378 = pneg %p241
        $region46: #{tpu_custom_call.1} parent=11 // pred_check_branch
          %380 = sbr.rel (%p378) target = $region48
        $region47: #{tpu_custom_call.1} parent=11 // pred_region
          _
        $region48: #{tpu_custom_call.1} parent=11 // pred_fallthru
          _
        // Predicated region
        $region49: #{tpu_custom_call.1} parent=11 // pred_check
          %p381 = pneg %p262
        $region50: #{tpu_custom_call.1} parent=11 // pred_check_branch
          %383 = sbr.rel (%p381) target = $region52
        $region51: #{tpu_custom_call.1} parent=11 // pred_region
          %s385 = ssub.s32 4096, 4096
          %386 = vsyncadd [#allocation9], %s385
          %s387 = sshll.u32 [#allocation10], 4
          %s388 = int_to_ptr.vmem [resolvable:$true] %s387
          %393 = dma.hbm_to_vmem [thread:$0]  %s10, 4096, %s388, [#allocation9], 64, 64, 4
        $region52: #{tpu_custom_call.1} parent=11 // pred_fallthru
          _
        // Predicated region
        $region53: #{tpu_custom_call.1} parent=11 // pred_check
          %p394 = pneg %p283
        $region54: #{tpu_custom_call.1} parent=11 // pred_check_branch
          %396 = sbr.rel (%p394) target = $region56
        $region55: #{tpu_custom_call.1} parent=11 // pred_region
          _
        $region56: #{tpu_custom_call.1} parent=11 // pred_fallthru
          _
      $region12: #{tpu_custom_call.1} parent=5 // pred_fallthru
        _
      %p397 = scmp.lt.s32.totalorder %s26, 2
      // Predicated region
      $region57: #{tpu_custom_call.1} parent=5 // pred_check
        %p398 = pneg %p397
      $region58: #{tpu_custom_call.1} parent=5 // pred_check_branch
        %400 = sbr.rel (%p398) target = $region60
      $region59: #{tpu_custom_call.1} parent=5 // pred_region
        // Predicated region
        $region61: #{tpu_custom_call.1} parent=59 // pred_check
          %p401 = pneg %p46
        $region62: #{tpu_custom_call.1} parent=59 // pred_check_branch
          %403 = sbr.rel (%p401) target = $region64
        $region63: #{tpu_custom_call.1} parent=59 // pred_region
          %s404 = sand.u32 %s36, 1
          %s405 = scalar_lea.sflag [#allocation3], %s404
          %s406 = sand.u32 %s36, 1
          %s407 = smul.addr %s406, 8
          %s408 = scalar_lea.vmem [#allocation2], %s407
          %s410 = ssub.s32 128, 128
          %411 = vsyncadd %s405, %s410
          %s412 = smul.addr %s26, 128
          %s413 = scalar_lea.hbm %s0, %s412
          %s415 = sshll.u32 %s408, 4
          %s416 = int_to_ptr.vmem [resolvable:$true] %s415
          %418 = dma.hbm_to_vmem [thread:$0]  %s413, 128, %s416, %s405
        $region64: #{tpu_custom_call.1} parent=59 // pred_fallthru
          _
      $region60: #{tpu_custom_call.1} parent=5 // pred_fallthru
        _
      %p419 = scmp.le.s32.totalorder 1, %s26
      %p420 = scmp.lt.s32.totalorder %s26, 3
      %p421 = pnand %p419, %p420
      %p422 = pneg %p421
      // Predicated region
      $region65: #{tpu_custom_call.1} parent=5 // pred_check
        _
      $region66: #{tpu_custom_call.1} parent=5 // pred_check_branch
        %424 = sbr.rel (%p421) target = $region68
      $region67: #{tpu_custom_call.1} parent=5 // pred_region
        %s425 = ssub.s32 %s26, 1
        %s426 = sand.u32 %s39, 1
        %s427 = scalar_lea.sflag [#allocation3], %s426
        %s428 = sand.u32 %s39, 1
        %s429 = smul.addr %s428, 8
        %s430 = scalar_lea.vmem [#allocation2], %s429
        // Predicated region
        $region69: #{tpu_custom_call.1} parent=67 // pred_check
          %p431 = pneg %p52
        $region70: #{tpu_custom_call.1} parent=67 // pred_check_branch
          %433 = sbr.rel (%p431) target = $region72
        $region71: #{tpu_custom_call.1} parent=67 // pred_region
          %434 = dma.done %s427, 128
        $region72: #{tpu_custom_call.1} parent=67 // pred_fallthru
          _
        // Predicated region
        $region73: #{tpu_custom_call.1} parent=67 // pred_check
          %p435 = pneg %p115
        $region74: #{tpu_custom_call.1} parent=67 // pred_check_branch
          %437 = sbr.rel (%p435) target = $region76
        $region75: #{tpu_custom_call.1} parent=67 // pred_region
          %438 = dma.done [#allocation6], 3072
        $region76: #{tpu_custom_call.1} parent=67 // pred_fallthru
          _
        // Predicated region
        $region77: #{tpu_custom_call.1} parent=67 // pred_check
          %p439 = pneg %p136
        $region78: #{tpu_custom_call.1} parent=67 // pred_check_branch
          %441 = sbr.rel (%p439) target = $region80
        $region79: #{tpu_custom_call.1} parent=67 // pred_region
          %442 = dma.done [#allocation6], 1024
        $region80: #{tpu_custom_call.1} parent=67 // pred_fallthru
          _
        // Predicated region
        $region81: #{tpu_custom_call.1} parent=67 // pred_check
          %p443 = pneg %p220
        $region82: #{tpu_custom_call.1} parent=67 // pred_check_branch
          %445 = sbr.rel (%p443) target = $region84
        $region83: #{tpu_custom_call.1} parent=67 // pred_region
          %446 = dma.done [#allocation9], 4096
        $region84: #{tpu_custom_call.1} parent=67 // pred_fallthru
          _
        // Predicated region
        $region85: #{tpu_custom_call.1} parent=67 // pred_check
          %p447 = pneg %p262
        $region86: #{tpu_custom_call.1} parent=67 // pred_check_branch
          %449 = sbr.rel (%p447) target = $region88
        $region87: #{tpu_custom_call.1} parent=67 // pred_region
          %450 = dma.done [#allocation9], 4096
        $region88: #{tpu_custom_call.1} parent=67 // pred_fallthru
          _
        %s451 = sand.u32 %s39, 1
        %s452 = scalar_lea.sflag [#allocation3], %s451
        %s453 = sand.u32 %s39, 1
        %s454 = smul.addr %s453, 8
        %s455 = scalar_lea.vmem [#allocation2], %s454
        %p456 = pneg %p52
        %p457 = pneg %p49
        %p458 = pneg %p73
        %p459 = pneg %p70
        %p460 = pneg %p94
        %p461 = pneg %p91
        %p462 = pneg %p115
        %p463 = pneg %p112
        %p464 = pneg %p136
        %p465 = pneg %p133
        %p466 = pneg %p157
        %p467 = pneg %p154
        %p468 = pneg %p178
        %p469 = pneg %p175
        %p470 = pneg %p199
        %p471 = pneg %p196
        %p472 = pneg %p220
        %p473 = pneg %p217
        %p474 = pneg %p241
        %p475 = pneg %p238
        %p476 = pneg %p262
        %p477 = pneg %p259
        %p478 = pneg %p283
        %p479 = pneg %p280
        %p480 = pneg %p309
        %p481 = pneg %p306
        %s482 = sand.u32 %s296, 1
        %s483 = scalar_lea.sflag [#allocation4], %s482
        %s484 = sand.u32 %s296, 1
        %s485 = smul.addr %s484, 8
        %s486 = scalar_lea.vmem [#allocation11], %s485
        %v488 = vld [vmem:[%s430] sm:$0xff]
        %v489 = vld [vmem:[%s1] sm:$0x1]
        %v490 = vld [vmem:[%s2] sm:$0x1]
        %491 = vadd.xlane.f32.xlu0 %v488
        %v492 = vpop.xlane.xlu0 %491
        %v493 = vrcp.pop 128.0
        %v494 = vmul.f32 %v492, %v493
        %v495 = vsub.f32 %v488, %v494
        %v496 = vmul.f32 %v495, %v495
        %497 = vadd.xlane.f32.xlu0 %v496
        %v498 = vpop.xlane.xlu0 %497
        %v499 = vmul.f32 %v498, %v493
        %v500 = vadd.f32 %v499, 1e-05
        %v501 = vrsqrt.pop %v500
        %v502 = vmul.f32 %v495, %v501
        %v504 = vlaneseq
        %v505 = vshrl.u32 %v504, 7
        %v506 = vsub.s32 0, %v505
        %v507 = vrot.slane %v489, %v506
        %v509 = vmul.f32 %v502, %v507
        %v511 = vlaneseq
        %v512 = vshrl.u32 %v511, 7
        %v513 = vsub.s32 0, %v512
        %v514 = vrot.slane %v490, %v513
        %v516 = vadd.f32 %v509, %v514
        %v517 = vpack.c.bf16 %v516, %v516
        %v518 = vld [vmem:[#allocation5] sm:$0xff]
        %v519 = vld [vmem:[#allocation5 + $0x8] sm:$0xf]
        %v520 = vld [vmem:[#allocation5 + $0xc] sm:$0xff]
        %v521 = vld [vmem:[#allocation5 + $0x14] sm:$0xf]
        %v522 = vld [vmem:[#allocation5 + $0x18] sm:$0xff]
        %v523 = vld [vmem:[#allocation5 + $0x20] sm:$0xf]
        %v524 = vld [vmem:[#allocation5 + $0x24] sm:$0xff]
        %v525 = vld [vmem:[#allocation5 + $0x2c] sm:$0xf]
        %v526 = vld [vmem:[#allocation5 + $0x30] sm:$0xff]
        %v527 = vld [vmem:[#allocation5 + $0x38] sm:$0xf]
        %v528 = vld [vmem:[#allocation5 + $0x3c] sm:$0xff]
        %v529 = vld [vmem:[#allocation5 + $0x44] sm:$0xf]
        %v530 = vld [vmem:[#allocation5 + $0x48] sm:$0xff]
        %v531 = vld [vmem:[#allocation5 + $0x50] sm:$0xf]
        %v532 = vld [vmem:[#allocation5 + $0x54] sm:$0xff]
        %v533 = vld [vmem:[#allocation5 + $0x5c] sm:$0xf]
        %v534 = vld [vmem:[#allocation5 + $0x60] sm:$0xff]
        %v535 = vld [vmem:[#allocation5 + $0x68] sm:$0xf]
        %v536 = vld [vmem:[#allocation5 + $0x6c] sm:$0xff]
        %v537 = vld [vmem:[#allocation5 + $0x74] sm:$0xf]
        %v538 = vld [vmem:[#allocation5 + $0x78] sm:$0xff]
        %v539 = vld [vmem:[#allocation5 + $0x80] sm:$0xf]
        %v540 = vld [vmem:[#allocation5 + $0x84] sm:$0xff]
        %v541 = vld [vmem:[#allocation5 + $0x8c] sm:$0xf]
        %v542 = vld [vmem:[#allocation5 + $0x90] sm:$0xff]
        %v543 = vld [vmem:[#allocation5 + $0x98] sm:$0xf]
        %v544 = vld [vmem:[#allocation5 + $0x9c] sm:$0xff]
        %v545 = vld [vmem:[#allocation5 + $0xa4] sm:$0xf]
        %v546 = vld [vmem:[#allocation5 + $0xa8] sm:$0xff]
        %v547 = vld [vmem:[#allocation5 + $0xb0] sm:$0xf]
        %v548 = vld [vmem:[#allocation5 + $0xb4] sm:$0xff]
        %v549 = vld [vmem:[#allocation5 + $0xbc] sm:$0xf]
        %v582 = vunpack.c.l.b16 %v518
        %v583 = vunpack.c.h.b16 %v518
        %v584 = vunpack.c.l.b16 %v519
        %v585 = vunpack.c.l.b16 %v520
        %v586 = vunpack.c.h.b16 %v520
        %v587 = vunpack.c.l.b16 %v521
        %v588 = vunpack.c.l.b16 %v522
        %v589 = vunpack.c.h.b16 %v522
        %v590 = vunpack.c.l.b16 %v523
        %v591 = vunpack.c.l.b16 %v524
        %v592 = vunpack.c.h.b16 %v524
        %v593 = vunpack.c.l.b16 %v525
        %v594 = vunpack.c.l.b16 %v526
        %v595 = vunpack.c.h.b16 %v526
        %v596 = vunpack.c.l.b16 %v527
        %v597 = vunpack.c.l.b16 %v528
        %v598 = vunpack.c.h.b16 %v528
        %v599 = vunpack.c.l.b16 %v529
        %v600 = vunpack.c.l.b16 %v530
        %v601 = vunpack.c.h.b16 %v530
        %v602 = vunpack.c.l.b16 %v531
        %v603 = vunpack.c.l.b16 %v532
        %v604 = vunpack.c.h.b16 %v532
        %v605 = vunpack.c.l.b16 %v533
        %v606 = vunpack.c.l.b16 %v534
        %v607 = vunpack.c.h.b16 %v534
        %v608 = vunpack.c.l.b16 %v535
        %v609 = vunpack.c.l.b16 %v536
        %v610 = vunpack.c.h.b16 %v536
        %v611 = vunpack.c.l.b16 %v537
        %v612 = vunpack.c.l.b16 %v538
        %v613 = vunpack.c.h.b16 %v538
        %v614 = vunpack.c.l.b16 %v539
        %v615 = vunpack.c.l.b16 %v540
        %v616 = vunpack.c.h.b16 %v540
        %v617 = vunpack.c.l.b16 %v541
        %v618 = vunpack.c.l.b16 %v542
        %v619 = vunpack.c.h.b16 %v542
        %v620 = vunpack.c.l.b16 %v543
        %v621 = vunpack.c.l.b16 %v544
        %v622 = vunpack.c.h.b16 %v544
        %v623 = vunpack.c.l.b16 %v545
        %v624 = vunpack.c.l.b16 %v546
        %v625 = vunpack.c.h.b16 %v546
        %v626 = vunpack.c.l.b16 %v547
        %v627 = vunpack.c.l.b16 %v548
        %v628 = vunpack.c.h.b16 %v548
        %v629 = vunpack.c.l.b16 %v549
        %v630 = vpack.c.b16 %v585, %v582
        %v631 = vpack.c.b16 %v586, %v583
        %v632 = vpack.c.b16 %v587, %v584
        %v633 = vpack.c.b16 %v591, %v588
        %v634 = vpack.c.b16 %v592, %v589
        %v635 = vpack.c.b16 %v593, %v590
        %v636 = vpack.c.b16 %v597, %v594
        %v637 = vpack.c.b16 %v598, %v595
        %v638 = vpack.c.b16 %v599, %v596
        %v639 = vpack.c.b16 %v603, %v600
        %v640 = vpack.c.b16 %v604, %v601
        %v641 = vpack.c.b16 %v605, %v602
        %v642 = vpack.c.b16 %v609, %v606
        %v643 = vpack.c.b16 %v610, %v607
        %v644 = vpack.c.b16 %v611, %v608
        %v645 = vpack.c.b16 %v615, %v612
        %v646 = vpack.c.b16 %v616, %v613
        %v647 = vpack.c.b16 %v617, %v614
        %v648 = vpack.c.b16 %v621, %v618
        %v649 = vpack.c.b16 %v622, %v619
        %v650 = vpack.c.b16 %v623, %v620
        %v651 = vpack.c.b16 %v627, %v624
        %v652 = vpack.c.b16 %v628, %v625
        %v653 = vpack.c.b16 %v629, %v626
        %678 = vmatprep.subr.bf16.mxu0 %v652
        %679 = vmatpush1.bf16.msra.mxu0 %v651
        %680 = vmatprep.subr.bf16.mxu0 %v649
        %681 = vmatpush1.bf16.msra.mxu0 %v648
        %682 = vmatprep.subr.bf16.mxu0 %v646
        %683 = vmatpush1.bf16.msra.mxu0 %v645
        %684 = vmatprep.subr.bf16.mxu0 %v643
        %685 = vmatpush1.bf16.msra.mxu0 %v642
        %686 = vmatprep.subr.bf16.mxu0 %v640
        %687 = vmatpush1.bf16.msra.mxu0 %v639
        %688 = vmatprep.subr.bf16.mxu0 %v637
        %689 = vmatpush1.bf16.msra.mxu0 %v636
        %690 = vmatprep.subr.bf16.mxu0 %v634
        %691 = vmatpush1.bf16.msra.mxu0 %v633
        %692 = vmatprep.subr.bf16.mxu0 %v631
        %693 = vmatpush1.bf16.msra.mxu0 %v630
        %694 = vmatprep.subr.bf16.mxu0 0
        %695 = vmatpush2.bf16.msra.mxu0 0
        %696 = vmatprep.subr.bf16.mxu0 0
        %697 = vmatpush2.bf16.msra.mxu0 0
        %698 = vmatprep.subr.bf16.mxu0 0
        %699 = vmatpush2.bf16.msra.mxu0 0
        %700 = vmatprep.subr.bf16.mxu0 0
        %701 = vmatpush2.bf16.msra.mxu0 0
        %702 = vmatprep.subr.bf16.mxu0 0
        %703 = vmatpush2.bf16.msra.mxu0 0
        %704 = vmatprep.subr.bf16.mxu0 0
        %705 = vmatpush2.bf16.msra.mxu0 0
        %706 = vmatprep.subr.bf16.mxu0 0
        %707 = vmatpush2.bf16.msra.mxu0 0
        %708 = vmatprep.subr.bf16.mxu0 0
        %709 = vmatpush2.bf16.msra.mxu0 0
        %710 = vmatprep.mubr.bf16.mxu0 0
        %711 = vmatmul.mubr.bf16.gmra.mxu0 %v517
        %v712 = vpop.f32.mrf.mxu0
        %v713 = vadd.f32 0.0, %v712
        %v714 = vpop.f32.mrf.mxu0
        %v715 = vadd.f32 0.0, %v714
        %v716 = vpop.f32.mrf.mxu0
        %v717 = vpop.f32.mrf.mxu0
        %718 = vdwg.mxu0
        %719 = vmatprep.subr.bf16.mxu0 0
        %720 = vmatpush1.bf16.msra.mxu0 %v653
        %721 = vmatprep.subr.bf16.mxu0 0
        %722 = vmatpush1.bf16.msra.mxu0 %v650
        %723 = vmatprep.subr.bf16.mxu0 0
        %724 = vmatpush1.bf16.msra.mxu0 %v647
        %725 = vmatprep.subr.bf16.mxu0 0
        %726 = vmatpush1.bf16.msra.mxu0 %v644
        %727 = vmatprep.subr.bf16.mxu0 0
        %728 = vmatpush1.bf16.msra.mxu0 %v641
        %729 = vmatprep.subr.bf16.mxu0 0
        %730 = vmatpush1.bf16.msra.mxu0 %v638
        %731 = vmatprep.subr.bf16.mxu0 0
        %732 = vmatpush1.bf16.msra.mxu0 %v635
        %733 = vmatprep.subr.bf16.mxu0 0
        %734 = vmatpush1.bf16.msra.mxu0 %v632
        %735 = vmatprep.subr.bf16.mxu0 0
        %736 = vmatpush2.bf16.msra.mxu0 0
        %737 = vmatprep.subr.bf16.mxu0 0
        %738 = vmatpush2.bf16.msra.mxu0 0
        %739 = vmatprep.subr.bf16.mxu0 0
        %740 = vmatpush2.bf16.msra.mxu0 0
        %741 = vmatprep.subr.bf16.mxu0 0
        %742 = vmatpush2.bf16.msra.mxu0 0
        %743 = vmatprep.subr.bf16.mxu0 0
        %744 = vmatpush2.bf16.msra.mxu0 0
        %745 = vmatprep.subr.bf16.mxu0 0
        %746 = vmatpush2.bf16.msra.mxu0 0
        %747 = vmatprep.subr.bf16.mxu0 0
        %748 = vmatpush2.bf16.msra.mxu0 0
        %749 = vmatprep.subr.bf16.mxu0 0
        %750 = vmatpush2.bf16.msra.mxu0 0
        %751 = vmatprep.mubr.bf16.mxu0 0
        %752 = vmatmul.mubr.bf16.gmra.mxu0 %v517
        %v753 = vpop.f32.mrf.mxu0
        %v754 = vadd.f32 0.0, %v753
        %v755 = vpop.f32.mrf.mxu0
        %v756 = vpop.f32.mrf.mxu0
        %v757 = vpop.f32.mrf.mxu0
        %758 = vdwg.mxu0
        %v759 = vmul.f32 %v713, 0.17677669
        %v760 = vpack.c.bf16 %v759, %v759
        %v761 = vpack.c.bf16 %v715, %v715
        %v762 = vpack.c.bf16 %v754, %v754
        %764 = vrot.lane.b32.xlu0 %v760, 96
        %v765 = vpop.permute.xlu0 %764
        %766 = vrot.lane.b32.xlu0 %v760, 64
        %v767 = vpop.permute.xlu0 %766
        %768 = vrot.lane.b32.xlu0 %v760, 32
        %v769 = vpop.permute.xlu0 %768
        %v771 = vunpack.c.l.s4 1983009808
        %v772 = vunpack.c.0.s8 %v771
        %v773 = vlaneseq
        %v774 = vshrl.u32 %v773, 7
        %v775 = vsub.s32 %v772, %v774
        %v776 = vrot.slane %v760, %v775
        %v779 = vunpack.c.l.s4 1983009808
        %v780 = vunpack.c.0.s8 %v779
        %v781 = vlaneseq
        %v782 = vshrl.u32 %v781, 7
        %v783 = vsub.s32 %v780, %v782
        %v784 = vrot.slane %v767, %v783
        %v785 = vcombine.low %v776, %v784
        %v786 = vcombine.high %v776, %v784
        %v788 = vunpack.c.l.s4 1934713408
        %v789 = vunpack.c.0.s8 %v788
        %v790 = vlaneseq
        %v791 = vshrl.u32 %v790, 7
        %v792 = vsub.s32 %v789, %v791
        %v793 = vrot.slane %v785, %v792
        %v795 = vunpack.c.l.s4 1934713408
        %v796 = vunpack.c.0.s8 %v795
        %v797 = vlaneseq
        %v798 = vshrl.u32 %v797, 7
        %v799 = vsub.s32 %v796, %v798
        %v800 = vrot.slane %v786, %v799
        %v801 = vcombine.high %v793, 0
        %v802 = vcombine.high %v800, 0
        %v805 = vunpack.c.l.s4 1983009808
        %v806 = vunpack.c.0.s8 %v805
        %v807 = vlaneseq
        %v808 = vshrl.u32 %v807, 7
        %v809 = vsub.s32 %v806, %v808
        %v810 = vrot.slane %v765, %v809
        %v813 = vunpack.c.l.s4 1983009808
        %v814 = vunpack.c.0.s8 %v813
        %v815 = vlaneseq
        %v816 = vshrl.u32 %v815, 7
        %v817 = vsub.s32 %v814, %v816
        %v818 = vrot.slane %v769, %v817
        %v819 = vcombine.low %v810, %v818
        %v820 = vcombine.high %v810, %v818
        %v822 = vunpack.c.l.s4 1934713408
        %v823 = vunpack.c.0.s8 %v822
        %v824 = vlaneseq
        %v825 = vshrl.u32 %v824, 7
        %v826 = vsub.s32 %v823, %v825
        %v827 = vrot.slane %v819, %v826
        %v829 = vunpack.c.l.s4 1934713408
        %v830 = vunpack.c.0.s8 %v829
        %v831 = vlaneseq
        %v832 = vshrl.u32 %v831, 7
        %v833 = vsub.s32 %v830, %v832
        %v834 = vrot.slane %v820, %v833
        %v835 = vcombine.high %v827, 0
        %v836 = vcombine.high %v834, 0
        %v839 = vpack.i.b16 %v827, %v793
        %v841 = vshrl.u32 %v793, 16
        %v842 = vshrl.u32 %v827, 16
        %v843 = vpack.i.b16 %v842, %v841
        %v847 = vpack.i.b16 %v835, %v801
        %v849 = vshrl.u32 %v801, 16
        %v850 = vshrl.u32 %v835, 16
        %v851 = vpack.i.b16 %v850, %v849
        %v855 = vpack.i.b16 %v834, %v800
        %v857 = vshrl.u32 %v800, 16
        %v858 = vshrl.u32 %v834, 16
        %v859 = vpack.i.b16 %v858, %v857
        %v863 = vpack.i.b16 %v836, %v802
        %v865 = vshrl.u32 %v802, 16
        %v866 = vshrl.u32 %v836, 16
        %v867 = vpack.i.b16 %v866, %v865
        %v869 = vcombine.low %v839, %v855
        %v871 = vunpack.c.l.s4 1983009808
        %v872 = vunpack.c.0.s8 %v871
        %v873 = vlaneseq
        %v874 = vshrl.u32 %v873, 7
        %v875 = vsub.s32 %v872, %v874
        %v876 = vrot.slane %v869, %v875
        %v877 = vcombine.low %v847, %v863
        %v879 = vunpack.c.l.s4 1983009808
        %v880 = vunpack.c.0.s8 %v879
        %v881 = vlaneseq
        %v882 = vshrl.u32 %v881, 7
        %v883 = vsub.s32 %v880, %v882
        %v884 = vrot.slane %v877, %v883
        %v885 = vcombine.low %v876, %v884
        %v887 = vunpack.c.l.s4 1934713408
        %v888 = vunpack.c.0.s8 %v887
        %v889 = vlaneseq
        %v890 = vshrl.u32 %v889, 7
        %v891 = vsub.s32 %v888, %v890
        %v892 = vrot.slane %v885, %v891
        %v893 = vcombine.high %v892, 0
        %v894 = vcombine.low %v843, %v859
        %v896 = vunpack.c.l.s4 1983009808
        %v897 = vunpack.c.0.s8 %v896
        %v898 = vlaneseq
        %v899 = vshrl.u32 %v898, 7
        %v900 = vsub.s32 %v897, %v899
        %v901 = vrot.slane %v894, %v900
        %v902 = vcombine.low %v851, %v867
        %v904 = vunpack.c.l.s4 1983009808
        %v905 = vunpack.c.0.s8 %v904
        %v906 = vlaneseq
        %v907 = vshrl.u32 %v906, 7
        %v908 = vsub.s32 %v905, %v907
        %v909 = vrot.slane %v902, %v908
        %v910 = vcombine.low %v901, %v909
        %v912 = vunpack.c.l.s4 1934713408
        %v913 = vunpack.c.0.s8 %v912
        %v914 = vlaneseq
        %v915 = vshrl.u32 %v914, 7
        %v916 = vsub.s32 %v913, %v915
        %v917 = vrot.slane %v910, %v916
        %v918 = vcombine.high %v917, 0
        %v921 = vpack.i.b16 %v917, %v892
        %v922 = vshrl.u32 %v892, 16
        %v923 = vshrl.u32 %v917, 16
        %v924 = vpack.i.b16 %v923, %v922
        %v927 = vpack.i.b16 %v918, %v893
        %v928 = vshrl.u32 %v893, 16
        %v929 = vshrl.u32 %v918, 16
        %v930 = vpack.i.b16 %v929, %v928
        %932 = vrot.lane.b32.xlu0 %v761, 96
        %v933 = vpop.permute.xlu0 %932
        %934 = vrot.lane.b32.xlu0 %v761, 64
        %v935 = vpop.permute.xlu0 %934
        %936 = vrot.lane.b32.xlu0 %v761, 32
        %v937 = vpop.permute.xlu0 %936
        %v939 = vunpack.c.l.s4 1983009808
        %v940 = vunpack.c.0.s8 %v939
        %v941 = vlaneseq
        %v942 = vshrl.u32 %v941, 7
        %v943 = vsub.s32 %v940, %v942
        %v944 = vrot.slane %v761, %v943
        %v947 = vunpack.c.l.s4 1983009808
        %v948 = vunpack.c.0.s8 %v947
        %v949 = vlaneseq
        %v950 = vshrl.u32 %v949, 7
        %v951 = vsub.s32 %v948, %v950
        %v952 = vrot.slane %v935, %v951
        %v953 = vcombine.low %v944, %v952
        %v954 = vcombine.high %v944, %v952
        %v956 = vunpack.c.l.s4 1934713408
        %v957 = vunpack.c.0.s8 %v956
        %v958 = vlaneseq
        %v959 = vshrl.u32 %v958, 7
        %v960 = vsub.s32 %v957, %v959
        %v961 = vrot.slane %v953, %v960
        %v963 = vunpack.c.l.s4 1934713408
        %v964 = vunpack.c.0.s8 %v963
        %v965 = vlaneseq
        %v966 = vshrl.u32 %v965, 7
        %v967 = vsub.s32 %v964, %v966
        %v968 = vrot.slane %v954, %v967
        %v969 = vcombine.high %v961, 0
        %v970 = vcombine.high %v968, 0
        %v973 = vunpack.c.l.s4 1983009808
        %v974 = vunpack.c.0.s8 %v973
        %v975 = vlaneseq
        %v976 = vshrl.u32 %v975, 7
        %v977 = vsub.s32 %v974, %v976
        %v978 = vrot.slane %v933, %v977
        %v981 = vunpack.c.l.s4 1983009808
        %v982 = vunpack.c.0.s8 %v981
        %v983 = vlaneseq
        %v984 = vshrl.u32 %v983, 7
        %v985 = vsub.s32 %v982, %v984
        %v986 = vrot.slane %v937, %v985
        %v987 = vcombine.low %v978, %v986
        %v988 = vcombine.high %v978, %v986
        %v990 = vunpack.c.l.s4 1934713408
        %v991 = vunpack.c.0.s8 %v990
        %v992 = vlaneseq
        %v993 = vshrl.u32 %v992, 7
        %v994 = vsub.s32 %v991, %v993
        %v995 = vrot.slane %v987, %v994
        %v997 = vunpack.c.l.s4 1934713408
        %v998 = vunpack.c.0.s8 %v997
        %v999 = vlaneseq
        %v1000 = vshrl.u32 %v999, 7
        %v1001 = vsub.s32 %v998, %v1000
        %v1002 = vrot.slane %v988, %v1001
        %v1003 = vcombine.high %v995, 0
        %v1004 = vcombine.high %v1002, 0
        %v1007 = vpack.i.b16 %v995, %v961
        %v1009 = vshrl.u32 %v961, 16
        %v1010 = vshrl.u32 %v995, 16
        %v1011 = vpack.i.b16 %v1010, %v1009
        %v1015 = vpack.i.b16 %v1003, %v969
        %v1017 = vshrl.u32 %v969, 16
        %v1018 = vshrl.u32 %v1003, 16
        %v1019 = vpack.i.b16 %v1018, %v1017
        %v1023 = vpack.i.b16 %v1002, %v968
        %v1025 = vshrl.u32 %v968, 16
        %v1026 = vshrl.u32 %v1002, 16
        %v1027 = vpack.i.b16 %v1026, %v1025
        %v1031 = vpack.i.b16 %v1004, %v970
        %v1033 = vshrl.u32 %v970, 16
        %v1034 = vshrl.u32 %v1004, 16
        %v1035 = vpack.i.b16 %v1034, %v1033
        %v1037 = vcombine.low %v1007, %v1023
        %v1039 = vunpack.c.l.s4 1983009808
        %v1040 = vunpack.c.0.s8 %v1039
        %v1041 = vlaneseq
        %v1042 = vshrl.u32 %v1041, 7
        %v1043 = vsub.s32 %v1040, %v1042
        %v1044 = vrot.slane %v1037, %v1043
        %v1045 = vcombine.low %v1015, %v1031
        %v1047 = vunpack.c.l.s4 1983009808
        %v1048 = vunpack.c.0.s8 %v1047
        %v1049 = vlaneseq
        %v1050 = vshrl.u32 %v1049, 7
        %v1051 = vsub.s32 %v1048, %v1050
        %v1052 = vrot.slane %v1045, %v1051
        %v1053 = vcombine.low %v1044, %v1052
        %v1055 = vunpack.c.l.s4 1934713408
        %v1056 = vunpack.c.0.s8 %v1055
        %v1057 = vlaneseq
        %v1058 = vshrl.u32 %v1057, 7
        %v1059 = vsub.s32 %v1056, %v1058
        %v1060 = vrot.slane %v1053, %v1059
        %v1061 = vcombine.high %v1060, 0
        %v1062 = vcombine.low %v1011, %v1027
        %v1064 = vunpack.c.l.s4 1983009808
        %v1065 = vunpack.c.0.s8 %v1064
        %v1066 = vlaneseq
        %v1067 = vshrl.u32 %v1066, 7
        %v1068 = vsub.s32 %v1065, %v1067
        %v1069 = vrot.slane %v1062, %v1068
        %v1070 = vcombine.low %v1019, %v1035
        %v1072 = vunpack.c.l.s4 1983009808
        %v1073 = vunpack.c.0.s8 %v1072
        %v1074 = vlaneseq
        %v1075 = vshrl.u32 %v1074, 7
        %v1076 = vsub.s32 %v1073, %v1075
        %v1077 = vrot.slane %v1070, %v1076
        %v1078 = vcombine.low %v1069, %v1077
        %v1080 = vunpack.c.l.s4 1934713408
        %v1081 = vunpack.c.0.s8 %v1080
        %v1082 = vlaneseq
        %v1083 = vshrl.u32 %v1082, 7
        %v1084 = vsub.s32 %v1081, %v1083
        %v1085 = vrot.slane %v1078, %v1084
        %v1086 = vcombine.high %v1085, 0
        %v1089 = vpack.i.b16 %v1085, %v1060
        %v1090 = vshrl.u32 %v1060, 16
        %v1091 = vshrl.u32 %v1085, 16
        %v1092 = vpack.i.b16 %v1091, %v1090
        %v1095 = vpack.i.b16 %v1086, %v1061
        %v1096 = vshrl.u32 %v1061, 16
        %v1097 = vshrl.u32 %v1086, 16
        %v1098 = vpack.i.b16 %v1097, %v1096
        %1100 = vrot.lane.b32.xlu0 %v762, 96
        %v1101 = vpop.permute.xlu0 %1100
        %1102 = vrot.lane.b32.xlu0 %v762, 64
        %v1103 = vpop.permute.xlu0 %1102
        %1104 = vrot.lane.b32.xlu0 %v762, 32
        %v1105 = vpop.permute.xlu0 %1104
        %v1107 = vunpack.c.l.s4 1983009808
        %v1108 = vunpack.c.0.s8 %v1107
        %v1109 = vlaneseq
        %v1110 = vshrl.u32 %v1109, 7
        %v1111 = vsub.s32 %v1108, %v1110
        %v1112 = vrot.slane %v762, %v1111
        %v1115 = vunpack.c.l.s4 1983009808
        %v1116 = vunpack.c.0.s8 %v1115
        %v1117 = vlaneseq
        %v1118 = vshrl.u32 %v1117, 7
        %v1119 = vsub.s32 %v1116, %v1118
        %v1120 = vrot.slane %v1103, %v1119
        %v1121 = vcombine.low %v1112, %v1120
        %v1122 = vcombine.high %v1112, %v1120
        %v1124 = vunpack.c.l.s4 1934713408
        %v1125 = vunpack.c.0.s8 %v1124
        %v1126 = vlaneseq
        %v1127 = vshrl.u32 %v1126, 7
        %v1128 = vsub.s32 %v1125, %v1127
        %v1129 = vrot.slane %v1121, %v1128
        %v1131 = vunpack.c.l.s4 1934713408
        %v1132 = vunpack.c.0.s8 %v1131
        %v1133 = vlaneseq
        %v1134 = vshrl.u32 %v1133, 7
        %v1135 = vsub.s32 %v1132, %v1134
        %v1136 = vrot.slane %v1122, %v1135
        %v1137 = vcombine.high %v1129, 0
        %v1138 = vcombine.high %v1136, 0
        %v1141 = vunpack.c.l.s4 1983009808
        %v1142 = vunpack.c.0.s8 %v1141
        %v1143 = vlaneseq
        %v1144 = vshrl.u32 %v1143, 7
        %v1145 = vsub.s32 %v1142, %v1144
        %v1146 = vrot.slane %v1101, %v1145
        %v1149 = vunpack.c.l.s4 1983009808
        %v1150 = vunpack.c.0.s8 %v1149
        %v1151 = vlaneseq
        %v1152 = vshrl.u32 %v1151, 7
        %v1153 = vsub.s32 %v1150, %v1152
        %v1154 = vrot.slane %v1105, %v1153
        %v1155 = vcombine.low %v1146, %v1154
        %v1156 = vcombine.high %v1146, %v1154
        %v1158 = vunpack.c.l.s4 1934713408
        %v1159 = vunpack.c.0.s8 %v1158
        %v1160 = vlaneseq
        %v1161 = vshrl.u32 %v1160, 7
        %v1162 = vsub.s32 %v1159, %v1161
        %v1163 = vrot.slane %v1155, %v1162
        %v1165 = vunpack.c.l.s4 1934713408
        %v1166 = vunpack.c.0.s8 %v1165
        %v1167 = vlaneseq
        %v1168 = vshrl.u32 %v1167, 7
        %v1169 = vsub.s32 %v1166, %v1168
        %v1170 = vrot.slane %v1156, %v1169
        %v1171 = vcombine.high %v1163, 0
        %v1172 = vcombine.high %v1170, 0
        %v1175 = vpack.i.b16 %v1163, %v1129
        %v1177 = vshrl.u32 %v1129, 16
        %v1178 = vshrl.u32 %v1163, 16
        %v1179 = vpack.i.b16 %v1178, %v1177
        %v1183 = vpack.i.b16 %v1171, %v1137
        %v1185 = vshrl.u32 %v1137, 16
        %v1186 = vshrl.u32 %v1171, 16
        %v1187 = vpack.i.b16 %v1186, %v1185
        %v1191 = vpack.i.b16 %v1170, %v1136
        %v1193 = vshrl.u32 %v1136, 16
        %v1194 = vshrl.u32 %v1170, 16
        %v1195 = vpack.i.b16 %v1194, %v1193
        %v1199 = vpack.i.b16 %v1172, %v1138
        %v1201 = vshrl.u32 %v1138, 16
        %v1202 = vshrl.u32 %v1172, 16
        %v1203 = vpack.i.b16 %v1202, %v1201
        %v1205 = vcombine.low %v1175, %v1191
        %v1207 = vunpack.c.l.s4 1983009808
        %v1208 = vunpack.c.0.s8 %v1207
        %v1209 = vlaneseq
        %v1210 = vshrl.u32 %v1209, 7
        %v1211 = vsub.s32 %v1208, %v1210
        %v1212 = vrot.slane %v1205, %v1211
        %v1213 = vcombine.low %v1183, %v1199
        %v1215 = vunpack.c.l.s4 1983009808
        %v1216 = vunpack.c.0.s8 %v1215
        %v1217 = vlaneseq
        %v1218 = vshrl.u32 %v1217, 7
        %v1219 = vsub.s32 %v1216, %v1218
        %v1220 = vrot.slane %v1213, %v1219
        %v1221 = vcombine.low %v1212, %v1220
        %v1223 = vunpack.c.l.s4 1934713408
        %v1224 = vunpack.c.0.s8 %v1223
        %v1225 = vlaneseq
        %v1226 = vshrl.u32 %v1225, 7
        %v1227 = vsub.s32 %v1224, %v1226
        %v1228 = vrot.slane %v1221, %v1227
        %v1229 = vcombine.high %v1228, 0
        %v1230 = vcombine.low %v1179, %v1195
        %v1232 = vunpack.c.l.s4 1983009808
        %v1233 = vunpack.c.0.s8 %v1232
        %v1234 = vlaneseq
        %v1235 = vshrl.u32 %v1234, 7
        %v1236 = vsub.s32 %v1233, %v1235
        %v1237 = vrot.slane %v1230, %v1236
        %v1238 = vcombine.low %v1187, %v1203
        %v1240 = vunpack.c.l.s4 1983009808
        %v1241 = vunpack.c.0.s8 %v1240
        %v1242 = vlaneseq
        %v1243 = vshrl.u32 %v1242, 7
        %v1244 = vsub.s32 %v1241, %v1243
        %v1245 = vrot.slane %v1238, %v1244
        %v1246 = vcombine.low %v1237, %v1245
        %v1248 = vunpack.c.l.s4 1934713408
        %v1249 = vunpack.c.0.s8 %v1248
        %v1250 = vlaneseq
        %v1251 = vshrl.u32 %v1250, 7
        %v1252 = vsub.s32 %v1249, %v1251
        %v1253 = vrot.slane %v1246, %v1252
        %v1254 = vcombine.high %v1253, 0
        %v1257 = vpack.i.b16 %v1253, %v1228
        %v1258 = vshrl.u32 %v1228, 16
        %v1259 = vshrl.u32 %v1253, 16
        %v1260 = vpack.i.b16 %v1259, %v1258
        %v1263 = vpack.i.b16 %v1254, %v1229
        %v1264 = vshrl.u32 %v1229, 16
        %v1265 = vshrl.u32 %v1254, 16
        %v1266 = vpack.i.b16 %v1265, %v1264
        %vm1267 = vcmask 261120
        %v1269 = vsel %vm1267, %v921, 0
        %v1272 = vsel %vm1267, %v1089, 0
        %1274 = vmatprep.subr.bf16.mxu0 0
        %1275 = vmatpush1.bf16.xpose.msra.mxu0 0
        %1276 = vmatprep.subr.bf16.mxu0 0
        %1277 = vmatpush1.bf16.xpose.msra.mxu0 0
        %1278 = vmatprep.subr.bf16.mxu0 0
        %1279 = vmatpush1.bf16.xpose.msra.mxu0 0
        %1280 = vmatprep.subr.bf16.mxu0 0
        %1281 = vmatpush1.bf16.xpose.msra.mxu0 0
        %1282 = vmatprep.subr.bf16.mxu0 0
        %1283 = vmatpush1.bf16.xpose.msra.mxu0 0
        %1284 = vmatprep.subr.bf16.mxu0 0
        %1285 = vmatpush1.bf16.xpose.msra.mxu0 0
        %1286 = vmatprep.subr.bf16.mxu0 0
        %1287 = vmatpush1.bf16.xpose.msra.mxu0 0
        %1288 = vmatprep.subr.bf16.mxu0 0
        %1289 = vmatpush1.bf16.xpose.msra.mxu0 %v1272
        %1290 = vmatprep.subr.bf16.mxu0 0
        %1291 = vmatpush2.bf16.xpose.msra.mxu0 0
        %1292 = vmatprep.subr.bf16.mxu0 0
        %1293 = vmatpush2.bf16.xpose.msra.mxu0 0
        %1294 = vmatprep.subr.bf16.mxu0 0
        %1295 = vmatpush2.bf16.xpose.msra.mxu0 0
        %1296 = vmatprep.subr.bf16.mxu0 0
        %1297 = vmatpush2.bf16.xpose.msra.mxu0 0
        %1298 = vmatprep.subr.bf16.mxu0 0
        %1299 = vmatpush2.bf16.xpose.msra.mxu0 0
        %1300 = vmatprep.subr.bf16.mxu0 0
        %1301 = vmatpush2.bf16.xpose.msra.mxu0 0
        %1302 = vmatprep.subr.bf16.mxu0 0
        %1303 = vmatpush2.bf16.xpose.msra.mxu0 0
        %1304 = vmatprep.subr.bf16.mxu0 0
        %1305 = vmatpush2.bf16.xpose.msra.mxu0 0
        %1306 = vmatprep.mubr.bf16.mxu0 0
        %1307 = vmatmul.mubr.bf16.gmra.mxu0 %v1269
        %v1308 = vpop.f32.mrf.mxu0
        %v1309 = vadd.f32 0.0, %v1308
        %v1310 = vpop.f32.mrf.mxu0
        %v1311 = vpop.f32.mrf.mxu0
        %v1312 = vpop.f32.mrf.mxu0
        %1313 = vdwg.mxu0
        %v1315 = vsel %vm1267, %v924, 0
        %v1318 = vsel %vm1267, %v1092, 0
        %1320 = vmatprep.subr.bf16.mxu0 0
        %1321 = vmatpush1.bf16.xpose.msra.mxu0 0
        %1322 = vmatprep.subr.bf16.mxu0 0
        %1323 = vmatpush1.bf16.xpose.msra.mxu0 0
        %1324 = vmatprep.subr.bf16.mxu0 0
        %1325 = vmatpush1.bf16.xpose.msra.mxu0 0
        %1326 = vmatprep.subr.bf16.mxu0 0
        %1327 = vmatpush1.bf16.xpose.msra.mxu0 0
        %1328 = vmatprep.subr.bf16.mxu0 0
        %1329 = vmatpush1.bf16.xpose.msra.mxu0 0
        %1330 = vmatprep.subr.bf16.mxu0 0
        %1331 = vmatpush1.bf16.xpose.msra.mxu0 0
        %1332 = vmatprep.subr.bf16.mxu0 0
        %1333 = vmatpush1.bf16.xpose.msra.mxu0 0
        %1334 = vmatprep.subr.bf16.mxu0 0
        %1335 = vmatpush1.bf16.xpose.msra.mxu0 %v1318
        %1336 = vmatprep.subr.bf16.mxu0 0
        %1337 = vmatpush2.bf16.xpose.msra.mxu0 0
        %1338 = vmatprep.subr.bf16.mxu0 0
        %1339 = vmatpush2.bf16.xpose.msra.mxu0 0
        %1340 = vmatprep.subr.bf16.mxu0 0
        %1341 = vmatpush2.bf16.xpose.msra.mxu0 0
        %1342 = vmatprep.subr.bf16.mxu0 0
        %1343 = vmatpush2.bf16.xpose.msra.mxu0 0
        %1344 = vmatprep.subr.bf16.mxu0 0
        %1345 = vmatpush2.bf16.xpose.msra.mxu0 0
        %1346 = vmatprep.subr.bf16.mxu0 0
        %1347 = vmatpush2.bf16.xpose.msra.mxu0 0
        %1348 = vmatprep.subr.bf16.mxu0 0
        %1349 = vmatpush2.bf16.xpose.msra.mxu0 0
        %1350 = vmatprep.subr.bf16.mxu0 0
        %1351 = vmatpush2.bf16.xpose.msra.mxu0 0
        %1352 = vmatprep.mubr.bf16.mxu0 0
        %1353 = vmatmul.mubr.bf16.gmra.mxu0 %v1315
        %v1354 = vpop.f32.mrf.mxu0
        %v1355 = vadd.f32 0.0, %v1354
        %v1356 = vpop.f32.mrf.mxu0
        %v1357 = vpop.f32.mrf.mxu0
        %v1358 = vpop.f32.mrf.mxu0
        %1359 = vdwg.mxu0
        %v1361 = vsel %vm1267, %v927, 0
        %v1364 = vsel %vm1267, %v1095, 0
        %1366 = vmatprep.subr.bf16.mxu0 0
        %1367 = vmatpush1.bf16.xpose.msra.mxu0 0
        %1368 = vmatprep.subr.bf16.mxu0 0
        %1369 = vmatpush1.bf16.xpose.msra.mxu0 0
        %1370 = vmatprep.subr.bf16.mxu0 0
        %1371 = vmatpush1.bf16.xpose.msra.mxu0 0
        %1372 = vmatprep.subr.bf16.mxu0 0
        %1373 = vmatpush1.bf16.xpose.msra.mxu0 0
        %1374 = vmatprep.subr.bf16.mxu0 0
        %1375 = vmatpush1.bf16.xpose.msra.mxu0 0
        %1376 = vmatprep.subr.bf16.mxu0 0
        %1377 = vmatpush1.bf16.xpose.msra.mxu0 0
        %1378 = vmatprep.subr.bf16.mxu0 0
        %1379 = vmatpush1.bf16.xpose.msra.mxu0 0
        %1380 = vmatprep.subr.bf16.mxu0 0
        %1381 = vmatpush1.bf16.xpose.msra.mxu0 %v1364
        %1382 = vmatprep.subr.bf16.mxu0 0
        %1383 = vmatpush2.bf16.xpose.msra.mxu0 0
        %1384 = vmatprep.subr.bf16.mxu0 0
        %1385 = vmatpush2.bf16.xpose.msra.mxu0 0
        %1386 = vmatprep.subr.bf16.mxu0 0
        %1387 = vmatpush2.bf16.xpose.msra.mxu0 0
        %1388 = vmatprep.subr.bf16.mxu0 0
        %1389 = vmatpush2.bf16.xpose.msra.mxu0 0
        %1390 = vmatprep.subr.bf16.mxu0 0
        %1391 = vmatpush2.bf16.xpose.msra.mxu0 0
        %1392 = vmatprep.subr.bf16.mxu0 0
        %1393 = vmatpush2.bf16.xpose.msra.mxu0 0
        %1394 = vmatprep.subr.bf16.mxu0 0
        %1395 = vmatpush2.bf16.xpose.msra.mxu0 0
        %1396 = vmatprep.subr.bf16.mxu0 0
        %1397 = vmatpush2.bf16.xpose.msra.mxu0 0
        %1398 = vmatprep.mubr.bf16.mxu0 0
        %1399 = vmatmul.mubr.bf16.gmra.mxu0 %v1361
        %v1400 = vpop.f32.mrf.mxu0
        %v1401 = vadd.f32 0.0, %v1400
        %v1402 = vpop.f32.mrf.mxu0
        %v1403 = vpop.f32.mrf.mxu0
        %v1404 = vpop.f32.mrf.mxu0
        %1405 = vdwg.mxu0
        %v1407 = vsel %vm1267, %v930, 0
        %v1410 = vsel %vm1267, %v1098, 0
        %1412 = vmatprep.subr.bf16.mxu0 0
        %1413 = vmatpush1.bf16.xpose.msra.mxu0 0
        %1414 = vmatprep.subr.bf16.mxu0 0
        %1415 = vmatpush1.bf16.xpose.msra.mxu0 0
        %1416 = vmatprep.subr.bf16.mxu0 0
        %1417 = vmatpush1.bf16.xpose.msra.mxu0 0
        %1418 = vmatprep.subr.bf16.mxu0 0
        %1419 = vmatpush1.bf16.xpose.msra.mxu0 0
        %1420 = vmatprep.subr.bf16.mxu0 0
        %1421 = vmatpush1.bf16.xpose.msra.mxu0 0
        %1422 = vmatprep.subr.bf16.mxu0 0
        %1423 = vmatpush1.bf16.xpose.msra.mxu0 0
        %1424 = vmatprep.subr.bf16.mxu0 0
        %1425 = vmatpush1.bf16.xpose.msra.mxu0 0
        %1426 = vmatprep.subr.bf16.mxu0 0
        %1427 = vmatpush1.bf16.xpose.msra.mxu0 %v1410
        %1428 = vmatprep.subr.bf16.mxu0 0
        %1429 = vmatpush2.bf16.xpose.msra.mxu0 0
        %1430 = vmatprep.subr.bf16.mxu0 0
        %1431 = vmatpush2.bf16.xpose.msra.mxu0 0
        %1432 = vmatprep.subr.bf16.mxu0 0
        %1433 = vmatpush2.bf16.xpose.msra.mxu0 0
        %1434 = vmatprep.subr.bf16.mxu0 0
        %1435 = vmatpush2.bf16.xpose.msra.mxu0 0
        %1436 = vmatprep.subr.bf16.mxu0 0
        %1437 = vmatpush2.bf16.xpose.msra.mxu0 0
        %1438 = vmatprep.subr.bf16.mxu0 0
        %1439 = vmatpush2.bf16.xpose.msra.mxu0 0
        %1440 = vmatprep.subr.bf16.mxu0 0
        %1441 = vmatpush2.bf16.xpose.msra.mxu0 0
        %1442 = vmatprep.subr.bf16.mxu0 0
        %1443 = vmatpush2.bf16.xpose.msra.mxu0 0
        %1444 = vmatprep.mubr.bf16.mxu0 0
        %1445 = vmatmul.mubr.bf16.gmra.mxu0 %v1407
        %v1446 = vpop.f32.mrf.mxu0
        %v1447 = vadd.f32 0.0, %v1446
        %v1448 = vpop.f32.mrf.mxu0
        %v1449 = vpop.f32.mrf.mxu0
        %v1450 = vpop.f32.mrf.mxu0
        %1451 = vdwg.mxu0
        %vm1452 = vcmask 64512
        %v1453 = vsel %vm1452, %v1309, -inf
        %1454 = vmax.xlane.f32.xlu0 %v1453
        %v1455 = vpop.xlane.xlu0 %1454
        %v1456 = vsel %vm1452, %v1355, -inf
        %1457 = vmax.xlane.f32.xlu0 %v1456
        %v1458 = vpop.xlane.xlu0 %1457
        %v1459 = vsel %vm1452, %v1401, -inf
        %1460 = vmax.xlane.f32.xlu0 %v1459
        %v1461 = vpop.xlane.xlu0 %1460
        %v1462 = vsel %vm1452, %v1447, -inf
        %1463 = vmax.xlane.f32.xlu0 %v1462
        %v1464 = vpop.xlane.xlu0 %1463
        %v1465 = vsub.f32 %v1309, %v1455
        %v1466 = vsub.f32 %v1355, %v1458
        %v1467 = vsub.f32 %v1401, %v1461
        %v1468 = vsub.f32 %v1447, %v1464
        %v1469 = vmul.f32 %v1465, 1.442695
        %v1470 = vpow.pop %v1469
        %v1471 = vmul.f32 %v1466, 1.442695
        %v1472 = vpow.pop %v1471
        %v1473 = vmul.f32 %v1467, 1.442695
        %v1474 = vpow.pop %v1473
        %v1475 = vmul.f32 %v1468, 1.442695
        %v1476 = vpow.pop %v1475
        %v1477 = vsel %vm1452, %v1470, 0.0
        %1478 = vadd.xlane.f32.xlu0 %v1477
        %v1479 = vpop.xlane.xlu0 %1478
        %v1480 = vsel %vm1452, %v1472, 0.0
        %1481 = vadd.xlane.f32.xlu0 %v1480
        %v1482 = vpop.xlane.xlu0 %1481
        %v1483 = vsel %vm1452, %v1474, 0.0
        %1484 = vadd.xlane.f32.xlu0 %v1483
        %v1485 = vpop.xlane.xlu0 %1484
        %v1486 = vsel %vm1452, %v1476, 0.0
        %1487 = vadd.xlane.f32.xlu0 %v1486
        %v1488 = vpop.xlane.xlu0 %1487
        %v1489 = vrcp.pop %v1479
        %v1490 = vrcp.pop %v1482
        %v1491 = vrcp.pop %v1485
        %v1492 = vrcp.pop %v1488
        %v1493 = vmul.f32 %v1470, %v1489
        %v1494 = vmul.f32 %v1472, %v1490
        %v1495 = vmul.f32 %v1474, %v1491
        %v1496 = vmul.f32 %v1476, %v1492
        %v1497 = vpack.c.bf16 %v1493, %v1493
        %v1498 = vpack.c.bf16 %v1494, %v1494
        %v1499 = vpack.c.bf16 %v1495, %v1495
        %v1500 = vpack.c.bf16 %v1496, %v1496
        %v1502 = vsel %vm1452, %v1497, 0
        %vm1504 = vcmask 1043456
        %v1506 = vsel %vm1504, %v1257, 0
        %1508 = vmatprep.subr.bf16.mxu0 0
        %1509 = vmatpush1.bf16.msra.mxu0 0
        %1510 = vmatprep.subr.bf16.mxu0 0
        %1511 = vmatpush1.bf16.msra.mxu0 0
        %1512 = vmatprep.subr.bf16.mxu0 0
        %1513 = vmatpush1.bf16.msra.mxu0 0
        %1514 = vmatprep.subr.bf16.mxu0 0
        %1515 = vmatpush1.bf16.msra.mxu0 0
        %1516 = vmatprep.subr.bf16.mxu0 0
        %1517 = vmatpush1.bf16.msra.mxu0 0
        %1518 = vmatprep.subr.bf16.mxu0 0
        %1519 = vmatpush1.bf16.msra.mxu0 0
        %1520 = vmatprep.subr.bf16.mxu0 0
        %1521 = vmatpush1.bf16.msra.mxu0 0
        %1522 = vmatprep.subr.bf16.mxu0 0
        %1523 = vmatpush1.bf16.msra.mxu0 %v1506
        %1524 = vmatprep.subr.bf16.mxu0 0
        %1525 = vmatpush2.bf16.msra.mxu0 0
        %1526 = vmatprep.subr.bf16.mxu0 0
        %1527 = vmatpush2.bf16.msra.mxu0 0
        %1528 = vmatprep.subr.bf16.mxu0 0
        %1529 = vmatpush2.bf16.msra.mxu0 0
        %1530 = vmatprep.subr.bf16.mxu0 0
        %1531 = vmatpush2.bf16.msra.mxu0 0
        %1532 = vmatprep.subr.bf16.mxu0 0
        %1533 = vmatpush2.bf16.msra.mxu0 0
        %1534 = vmatprep.subr.bf16.mxu0 0
        %1535 = vmatpush2.bf16.msra.mxu0 0
        %1536 = vmatprep.subr.bf16.mxu0 0
        %1537 = vmatpush2.bf16.msra.mxu0 0
        %1538 = vmatprep.subr.bf16.mxu0 0
        %1539 = vmatpush2.bf16.msra.mxu0 0
        %1540 = vmatprep.mubr.bf16.mxu0 0
        %1541 = vmatmul.mubr.bf16.gmra.mxu0 %v1502
        %v1542 = vpop.f32.mrf.mxu0
        %v1543 = vadd.f32 0.0, %v1542
        %v1544 = vpop.f32.mrf.mxu0
        %v1545 = vpop.f32.mrf.mxu0
        %v1546 = vpop.f32.mrf.mxu0
        %1547 = vdwg.mxu0
        %v1549 = vsel %vm1452, %v1498, 0
        %v1552 = vsel %vm1504, %v1260, 0
        %1554 = vmatprep.subr.bf16.mxu0 0
        %1555 = vmatpush1.bf16.msra.mxu0 0
        %1556 = vmatprep.subr.bf16.mxu0 0
        %1557 = vmatpush1.bf16.msra.mxu0 0
        %1558 = vmatprep.subr.bf16.mxu0 0
        %1559 = vmatpush1.bf16.msra.mxu0 0
        %1560 = vmatprep.subr.bf16.mxu0 0
        %1561 = vmatpush1.bf16.msra.mxu0 0
        %1562 = vmatprep.subr.bf16.mxu0 0
        %1563 = vmatpush1.bf16.msra.mxu0 0
        %1564 = vmatprep.subr.bf16.mxu0 0
        %1565 = vmatpush1.bf16.msra.mxu0 0
        %1566 = vmatprep.subr.bf16.mxu0 0
        %1567 = vmatpush1.bf16.msra.mxu0 0
        %1568 = vmatprep.subr.bf16.mxu0 0
        %1569 = vmatpush1.bf16.msra.mxu0 %v1552
        %1570 = vmatprep.subr.bf16.mxu0 0
        %1571 = vmatpush2.bf16.msra.mxu0 0
        %1572 = vmatprep.subr.bf16.mxu0 0
        %1573 = vmatpush2.bf16.msra.mxu0 0
        %1574 = vmatprep.subr.bf16.mxu0 0
        %1575 = vmatpush2.bf16.msra.mxu0 0
        %1576 = vmatprep.subr.bf16.mxu0 0
        %1577 = vmatpush2.bf16.msra.mxu0 0
        %1578 = vmatprep.subr.bf16.mxu0 0
        %1579 = vmatpush2.bf16.msra.mxu0 0
        %1580 = vmatprep.subr.bf16.mxu0 0
        %1581 = vmatpush2.bf16.msra.mxu0 0
        %1582 = vmatprep.subr.bf16.mxu0 0
        %1583 = vmatpush2.bf16.msra.mxu0 0
        %1584 = vmatprep.subr.bf16.mxu0 0
        %1585 = vmatpush2.bf16.msra.mxu0 0
        %1586 = vmatprep.mubr.bf16.mxu0 0
        %1587 = vmatmul.mubr.bf16.gmra.mxu0 %v1549
        %v1588 = vpop.f32.mrf.mxu0
        %v1589 = vadd.f32 0.0, %v1588
        %v1590 = vpop.f32.mrf.mxu0
        %v1591 = vpop.f32.mrf.mxu0
        %v1592 = vpop.f32.mrf.mxu0
        %1593 = vdwg.mxu0
        %v1595 = vsel %vm1452, %v1499, 0
        %v1598 = vsel %vm1504, %v1263, 0
        %1600 = vmatprep.subr.bf16.mxu0 0
        %1601 = vmatpush1.bf16.msra.mxu0 0
        %1602 = vmatprep.subr.bf16.mxu0 0
        %1603 = vmatpush1.bf16.msra.mxu0 0
        %1604 = vmatprep.subr.bf16.mxu0 0
        %1605 = vmatpush1.bf16.msra.mxu0 0
        %1606 = vmatprep.subr.bf16.mxu0 0
        %1607 = vmatpush1.bf16.msra.mxu0 0
        %1608 = vmatprep.subr.bf16.mxu0 0
        %1609 = vmatpush1.bf16.msra.mxu0 0
        %1610 = vmatprep.subr.bf16.mxu0 0
        %1611 = vmatpush1.bf16.msra.mxu0 0
        %1612 = vmatprep.subr.bf16.mxu0 0
        %1613 = vmatpush1.bf16.msra.mxu0 0
        %1614 = vmatprep.subr.bf16.mxu0 0
        %1615 = vmatpush1.bf16.msra.mxu0 %v1598
        %1616 = vmatprep.subr.bf16.mxu0 0
        %1617 = vmatpush2.bf16.msra.mxu0 0
        %1618 = vmatprep.subr.bf16.mxu0 0
        %1619 = vmatpush2.bf16.msra.mxu0 0
        %1620 = vmatprep.subr.bf16.mxu0 0
        %1621 = vmatpush2.bf16.msra.mxu0 0
        %1622 = vmatprep.subr.bf16.mxu0 0
        %1623 = vmatpush2.bf16.msra.mxu0 0
        %1624 = vmatprep.subr.bf16.mxu0 0
        %1625 = vmatpush2.bf16.msra.mxu0 0
        %1626 = vmatprep.subr.bf16.mxu0 0
        %1627 = vmatpush2.bf16.msra.mxu0 0
        %1628 = vmatprep.subr.bf16.mxu0 0
        %1629 = vmatpush2.bf16.msra.mxu0 0
        %1630 = vmatprep.subr.bf16.mxu0 0
        %1631 = vmatpush2.bf16.msra.mxu0 0
        %1632 = vmatprep.mubr.bf16.mxu0 0
        %1633 = vmatmul.mubr.bf16.gmra.mxu0 %v1595
        %v1634 = vpop.f32.mrf.mxu0
        %v1635 = vadd.f32 0.0, %v1634
        %v1636 = vpop.f32.mrf.mxu0
        %v1637 = vpop.f32.mrf.mxu0
        %v1638 = vpop.f32.mrf.mxu0
        %1639 = vdwg.mxu0
        %v1641 = vsel %vm1452, %v1500, 0
        %v1644 = vsel %vm1504, %v1266, 0
        %1646 = vmatprep.subr.bf16.mxu0 0
        %1647 = vmatpush1.bf16.msra.mxu0 0
        %1648 = vmatprep.subr.bf16.mxu0 0
        %1649 = vmatpush1.bf16.msra.mxu0 0
        %1650 = vmatprep.subr.bf16.mxu0 0
        %1651 = vmatpush1.bf16.msra.mxu0 0
        %1652 = vmatprep.subr.bf16.mxu0 0
        %1653 = vmatpush1.bf16.msra.mxu0 0
        %1654 = vmatprep.subr.bf16.mxu0 0
        %1655 = vmatpush1.bf16.msra.mxu0 0
        %1656 = vmatprep.subr.bf16.mxu0 0
        %1657 = vmatpush1.bf16.msra.mxu0 0
        %1658 = vmatprep.subr.bf16.mxu0 0
        %1659 = vmatpush1.bf16.msra.mxu0 0
        %1660 = vmatprep.subr.bf16.mxu0 0
        %1661 = vmatpush1.bf16.msra.mxu0 %v1644
        %1662 = vmatprep.subr.bf16.mxu0 0
        %1663 = vmatpush2.bf16.msra.mxu0 0
        %1664 = vmatprep.subr.bf16.mxu0 0
        %1665 = vmatpush2.bf16.msra.mxu0 0
        %1666 = vmatprep.subr.bf16.mxu0 0
        %1667 = vmatpush2.bf16.msra.mxu0 0
        %1668 = vmatprep.subr.bf16.mxu0 0
        %1669 = vmatpush2.bf16.msra.mxu0 0
        %1670 = vmatprep.subr.bf16.mxu0 0
        %1671 = vmatpush2.bf16.msra.mxu0 0
        %1672 = vmatprep.subr.bf16.mxu0 0
        %1673 = vmatpush2.bf16.msra.mxu0 0
        %1674 = vmatprep.subr.bf16.mxu0 0
        %1675 = vmatpush2.bf16.msra.mxu0 0
        %1676 = vmatprep.subr.bf16.mxu0 0
        %1677 = vmatpush2.bf16.msra.mxu0 0
        %1678 = vmatprep.mubr.bf16.mxu0 0
        %1679 = vmatmul.mubr.bf16.gmra.mxu0 %v1641
        %v1680 = vpop.f32.mrf.mxu0
        %v1681 = vadd.f32 0.0, %v1680
        %v1682 = vpop.f32.mrf.mxu0
        %v1683 = vpop.f32.mrf.mxu0
        %v1684 = vpop.f32.mrf.mxu0
        %1685 = vdwg.mxu0
        %v1686 = vcombine.low %v1543, %v1635
        %v1687 = vcombine.high %v1543, %v1635
        %v1689 = vunpack.c.l.s4 1983009808
        %v1690 = vunpack.c.0.s8 %v1689
        %v1691 = vlaneseq
        %v1692 = vshrl.u32 %v1691, 7
        %v1693 = vsub.s32 %v1690, %v1692
        %v1694 = vrot.slane %v1686, %v1693
        %v1696 = vunpack.c.l.s4 1983009808
        %v1697 = vunpack.c.0.s8 %v1696
        %v1698 = vlaneseq
        %v1699 = vshrl.u32 %v1698, 7
        %v1700 = vsub.s32 %v1697, %v1699
        %v1701 = vrot.slane %v1687, %v1700
        %v1702 = vcombine.low %v1589, %v1681
        %v1703 = vcombine.high %v1589, %v1681
        %v1705 = vunpack.c.l.s4 1983009808
        %v1706 = vunpack.c.0.s8 %v1705
        %v1707 = vlaneseq
        %v1708 = vshrl.u32 %v1707, 7
        %v1709 = vsub.s32 %v1706, %v1708
        %v1710 = vrot.slane %v1702, %v1709
        %v1712 = vunpack.c.l.s4 1983009808
        %v1713 = vunpack.c.0.s8 %v1712
        %v1714 = vlaneseq
        %v1715 = vshrl.u32 %v1714, 7
        %v1716 = vsub.s32 %v1713, %v1715
        %v1717 = vrot.slane %v1703, %v1716
        %v1718 = vcombine.low %v1694, %v1710
        %v1719 = vcombine.high %v1694, %v1710
        %v1721 = vunpack.c.l.s4 1934713408
        %v1722 = vunpack.c.0.s8 %v1721
        %v1723 = vlaneseq
        %v1724 = vshrl.u32 %v1723, 7
        %v1725 = vsub.s32 %v1722, %v1724
        %v1726 = vrot.slane %v1718, %v1725
        %v1728 = vunpack.c.l.s4 1934713408
        %v1729 = vunpack.c.0.s8 %v1728
        %v1730 = vlaneseq
        %v1731 = vshrl.u32 %v1730, 7
        %v1732 = vsub.s32 %v1729, %v1731
        %v1733 = vrot.slane %v1719, %v1732
        %v1734 = vcombine.low %v1701, %v1717
        %v1735 = vcombine.high %v1701, %v1717
        %v1737 = vunpack.c.l.s4 1934713408
        %v1738 = vunpack.c.0.s8 %v1737
        %v1739 = vlaneseq
        %v1740 = vshrl.u32 %v1739, 7
        %v1741 = vsub.s32 %v1738, %v1740
        %v1742 = vrot.slane %v1734, %v1741
        %v1744 = vunpack.c.l.s4 1934713408
        %v1745 = vunpack.c.0.s8 %v1744
        %v1746 = vlaneseq
        %v1747 = vshrl.u32 %v1746, 7
        %v1748 = vsub.s32 %v1745, %v1747
        %v1749 = vrot.slane %v1735, %v1748
        %v1750 = vcombine.high %v1726, 0.0
        %v1751 = vcombine.high %v1733, 0.0
        %v1752 = vcombine.high %v1742, 0.0
        %v1753 = vcombine.high %v1749, 0.0
        %v1754 = vcombine.low %v1726, %v1733
        %v1756 = vunpack.c.l.s4 1983009808
        %v1757 = vunpack.c.0.s8 %v1756
        %v1758 = vlaneseq
        %v1759 = vshrl.u32 %v1758, 7
        %v1760 = vsub.s32 %v1757, %v1759
        %v1761 = vrot.slane %v1754, %v1760
        %v1762 = vcombine.low %v1750, %v1751
        %v1764 = vunpack.c.l.s4 1983009808
        %v1765 = vunpack.c.0.s8 %v1764
        %v1766 = vlaneseq
        %v1767 = vshrl.u32 %v1766, 7
        %v1768 = vsub.s32 %v1765, %v1767
        %v1769 = vrot.slane %v1762, %v1768
        %v1770 = vcombine.low %v1742, %v1749
        %v1772 = vunpack.c.l.s4 1983009808
        %v1773 = vunpack.c.0.s8 %v1772
        %v1774 = vlaneseq
        %v1775 = vshrl.u32 %v1774, 7
        %v1776 = vsub.s32 %v1773, %v1775
        %v1777 = vrot.slane %v1770, %v1776
        %v1778 = vcombine.low %v1752, %v1753
        %v1780 = vunpack.c.l.s4 1983009808
        %v1781 = vunpack.c.0.s8 %v1780
        %v1782 = vlaneseq
        %v1783 = vshrl.u32 %v1782, 7
        %v1784 = vsub.s32 %v1781, %v1783
        %v1785 = vrot.slane %v1778, %v1784
        %v1786 = vcombine.low %v1761, %v1769
        %v1787 = vcombine.high %v1761, %v1769
        %v1789 = vunpack.c.l.s4 1934713408
        %v1790 = vunpack.c.0.s8 %v1789
        %v1791 = vlaneseq
        %v1792 = vshrl.u32 %v1791, 7
        %v1793 = vsub.s32 %v1790, %v1792
        %v1794 = vrot.slane %v1786, %v1793
        %v1796 = vunpack.c.l.s4 1934713408
        %v1797 = vunpack.c.0.s8 %v1796
        %v1798 = vlaneseq
        %v1799 = vshrl.u32 %v1798, 7
        %v1800 = vsub.s32 %v1797, %v1799
        %v1801 = vrot.slane %v1787, %v1800
        %v1802 = vcombine.low %v1777, %v1785
        %v1803 = vcombine.high %v1777, %v1785
        %v1805 = vunpack.c.l.s4 1934713408
        %v1806 = vunpack.c.0.s8 %v1805
        %v1807 = vlaneseq
        %v1808 = vshrl.u32 %v1807, 7
        %v1809 = vsub.s32 %v1806, %v1808
        %v1810 = vrot.slane %v1802, %v1809
        %v1812 = vunpack.c.l.s4 1934713408
        %v1813 = vunpack.c.0.s8 %v1812
        %v1814 = vlaneseq
        %v1815 = vshrl.u32 %v1814, 7
        %v1816 = vsub.s32 %v1813, %v1815
        %v1817 = vrot.slane %v1803, %v1816
        %v1818 = vcombine.low %v1794, %v1810
        %v1819 = vcombine.high %v1794, %v1810
        %v1820 = vcombine.low %v1801, %v1817
        %v1821 = vcombine.high %v1801, %v1817
        %1823 = vrot.lane.b32.xlu0 %v1819, 32
        %v1824 = vpop.permute.xlu0 %1823
        %1827 = vrot.lane.b32.xlu0 %v1820, 64
        %v1828 = vpop.permute.xlu0 %1827
        %1831 = vrot.lane.b32.xlu0 %v1821, 96
        %v1832 = vpop.permute.xlu0 %1831
        %v1834 = vsel %vm1267, %v1818, %v1824
        %vm1835 = vcmask 523264
        %v1836 = vsel %vm1835, %v1834, %v1828
        %vm1837 = vcmask 785408
        %v1838 = vsel %vm1837, %v1836, %v1832
        %v1839 = vpack.c.bf16 %v1838, %v1838
        %v1840 = vld [vmem:[#allocation7] sm:$0xf]
        %v1841 = vld [vmem:[#allocation7 + $0x4] sm:$0xf]
        %v1842 = vld [vmem:[#allocation7 + $0x8] sm:$0xf]
        %v1843 = vld [vmem:[#allocation7 + $0xc] sm:$0xf]
        %v1844 = vld [vmem:[#allocation7 + $0x10] sm:$0xf]
        %v1845 = vld [vmem:[#allocation7 + $0x14] sm:$0xf]
        %v1846 = vld [vmem:[#allocation7 + $0x18] sm:$0xf]
        %v1847 = vld [vmem:[#allocation7 + $0x1c] sm:$0xf]
        %v1848 = vld [vmem:[#allocation7 + $0x20] sm:$0xf]
        %v1849 = vld [vmem:[#allocation7 + $0x24] sm:$0xf]
        %v1850 = vld [vmem:[#allocation7 + $0x28] sm:$0xf]
        %v1851 = vld [vmem:[#allocation7 + $0x2c] sm:$0xf]
        %v1852 = vld [vmem:[#allocation7 + $0x30] sm:$0xf]
        %v1853 = vld [vmem:[#allocation7 + $0x34] sm:$0xf]
        %v1854 = vld [vmem:[#allocation7 + $0x38] sm:$0xf]
        %v1855 = vld [vmem:[#allocation7 + $0x3c] sm:$0xf]
        %v1856 = vld [vmem:[%s5] sm:$0x1]
        %v1858 = vlaneseq
        %v1859 = vshrl.u32 %v1858, 7
        %v1860 = vsub.s32 0, %v1859
        %v1861 = vrot.slane %v1856, %v1860
        %v1879 = vunpack.c.l.b16 %v1840
        %v1880 = vunpack.c.l.b16 %v1841
        %v1881 = vunpack.c.l.b16 %v1842
        %v1882 = vunpack.c.l.b16 %v1843
        %v1883 = vunpack.c.l.b16 %v1844
        %v1884 = vunpack.c.l.b16 %v1845
        %v1885 = vunpack.c.l.b16 %v1846
        %v1886 = vunpack.c.l.b16 %v1847
        %v1887 = vunpack.c.l.b16 %v1848
        %v1888 = vunpack.c.l.b16 %v1849
        %v1889 = vunpack.c.l.b16 %v1850
        %v1890 = vunpack.c.l.b16 %v1851
        %v1891 = vunpack.c.l.b16 %v1852
        %v1892 = vunpack.c.l.b16 %v1853
        %v1893 = vunpack.c.l.b16 %v1854
        %v1894 = vunpack.c.l.b16 %v1855
        %v1895 = vpack.c.b16 %v1880, %v1879
        %v1896 = vpack.c.b16 %v1882, %v1881
        %v1897 = vpack.c.b16 %v1884, %v1883
        %v1898 = vpack.c.b16 %v1886, %v1885
        %v1899 = vpack.c.b16 %v1888, %v1887
        %v1900 = vpack.c.b16 %v1890, %v1889
        %v1901 = vpack.c.b16 %v1892, %v1891
        %v1902 = vpack.c.b16 %v1894, %v1893
        %1911 = vmatprep.subr.bf16.mxu0 0
        %1912 = vmatpush1.bf16.msra.mxu0 %v1902
        %1913 = vmatprep.subr.bf16.mxu0 0
        %1914 = vmatpush1.bf16.msra.mxu0 %v1901
        %1915 = vmatprep.subr.bf16.mxu0 0
        %1916 = vmatpush1.bf16.msra.mxu0 %v1900
        %1917 = vmatprep.subr.bf16.mxu0 0
        %1918 = vmatpush1.bf16.msra.mxu0 %v1899
        %1919 = vmatprep.subr.bf16.mxu0 0
        %1920 = vmatpush1.bf16.msra.mxu0 %v1898
        %1921 = vmatprep.subr.bf16.mxu0 0
        %1922 = vmatpush1.bf16.msra.mxu0 %v1897
        %1923 = vmatprep.subr.bf16.mxu0 0
        %1924 = vmatpush1.bf16.msra.mxu0 %v1896
        %1925 = vmatprep.subr.bf16.mxu0 0
        %1926 = vmatpush1.bf16.msra.mxu0 %v1895
        %1927 = vmatprep.subr.bf16.mxu0 0
        %1928 = vmatpush2.bf16.msra.mxu0 0
        %1929 = vmatprep.subr.bf16.mxu0 0
        %1930 = vmatpush2.bf16.msra.mxu0 0
        %1931 = vmatprep.subr.bf16.mxu0 0
        %1932 = vmatpush2.bf16.msra.mxu0 0
        %1933 = vmatprep.subr.bf16.mxu0 0
        %1934 = vmatpush2.bf16.msra.mxu0 0
        %1935 = vmatprep.subr.bf16.mxu0 0
        %1936 = vmatpush2.bf16.msra.mxu0 0
        %1937 = vmatprep.subr.bf16.mxu0 0
        %1938 = vmatpush2.bf16.msra.mxu0 0
        %1939 = vmatprep.subr.bf16.mxu0 0
        %1940 = vmatpush2.bf16.msra.mxu0 0
        %1941 = vmatprep.subr.bf16.mxu0 0
        %1942 = vmatpush2.bf16.msra.mxu0 0
        %1943 = vmatprep.mubr.bf16.mxu0 0
        %1944 = vmatmul.mubr.bf16.gmra.mxu0 %v1839
        %v1945 = vpop.f32.mrf.mxu0
        %v1946 = vadd.f32 %v1861, %v1945
        %v1947 = vpop.f32.mrf.mxu0
        %v1948 = vpop.f32.mrf.mxu0
        %v1949 = vpop.f32.mrf.mxu0
        %1950 = vdwg.mxu0
        %v1951 = vadd.f32 %v488, %v1946
        %v1952 = vld [vmem:[%s6] sm:$0x1]
        %v1953 = vld [vmem:[%s7] sm:$0x1]
        %1954 = vadd.xlane.f32.xlu0 %v1951
        %v1955 = vpop.xlane.xlu0 %1954
        %v1956 = vmul.f32 %v1955, %v493
        %v1957 = vsub.f32 %v1951, %v1956
        %v1958 = vmul.f32 %v1957, %v1957
        %1959 = vadd.xlane.f32.xlu0 %v1958
        %v1960 = vpop.xlane.xlu0 %1959
        %v1961 = vmul.f32 %v1960, %v493
        %v1962 = vadd.f32 %v1961, 1e-05
        %v1963 = vrsqrt.pop %v1962
        %v1964 = vmul.f32 %v1957, %v1963
        %v1966 = vlaneseq
        %v1967 = vshrl.u32 %v1966, 7
        %v1968 = vsub.s32 0, %v1967
        %v1969 = vrot.slane %v1952, %v1968
        %v1971 = vmul.f32 %v1964, %v1969
        %v1973 = vlaneseq
        %v1974 = vshrl.u32 %v1973, 7
        %v1975 = vsub.s32 0, %v1974
        %v1976 = vrot.slane %v1953, %v1975
        %v1978 = vadd.f32 %v1971, %v1976
        %v1979 = vpack.c.bf16 %v1978, %v1978
        %v1980 = vld [vmem:[#allocation8] sm:$0xff]
        %v1981 = vld [vmem:[#allocation8 + $0x8] sm:$0xff]
        %v1982 = vld [vmem:[#allocation8 + $0x10] sm:$0xff]
        %v1983 = vld [vmem:[#allocation8 + $0x18] sm:$0xff]
        %v1984 = vld [vmem:[#allocation8 + $0x20] sm:$0xff]
        %v1985 = vld [vmem:[#allocation8 + $0x28] sm:$0xff]
        %v1986 = vld [vmem:[#allocation8 + $0x30] sm:$0xff]
        %v1987 = vld [vmem:[#allocation8 + $0x38] sm:$0xff]
        %v1988 = vld [vmem:[#allocation8 + $0x40] sm:$0xff]
        %v1989 = vld [vmem:[#allocation8 + $0x48] sm:$0xff]
        %v1990 = vld [vmem:[#allocation8 + $0x50] sm:$0xff]
        %v1991 = vld [vmem:[#allocation8 + $0x58] sm:$0xff]
        %v1992 = vld [vmem:[#allocation8 + $0x60] sm:$0xff]
        %v1993 = vld [vmem:[#allocation8 + $0x68] sm:$0xff]
        %v1994 = vld [vmem:[#allocation8 + $0x70] sm:$0xff]
        %v1995 = vld [vmem:[#allocation8 + $0x78] sm:$0xff]
        %v1996 = vld [vmem:[#allocation8 + $0x80] sm:$0xff]
        %v1997 = vld [vmem:[#allocation8 + $0x88] sm:$0xff]
        %v1998 = vld [vmem:[#allocation8 + $0x90] sm:$0xff]
        %v1999 = vld [vmem:[#allocation8 + $0x98] sm:$0xff]
        %v2000 = vld [vmem:[#allocation8 + $0xa0] sm:$0xff]
        %v2001 = vld [vmem:[#allocation8 + $0xa8] sm:$0xff]
        %v2002 = vld [vmem:[#allocation8 + $0xb0] sm:$0xff]
        %v2003 = vld [vmem:[#allocation8 + $0xb8] sm:$0xff]
        %v2004 = vld [vmem:[#allocation8 + $0xc0] sm:$0xff]
        %v2005 = vld [vmem:[#allocation8 + $0xc8] sm:$0xff]
        %v2006 = vld [vmem:[#allocation8 + $0xd0] sm:$0xff]
        %v2007 = vld [vmem:[#allocation8 + $0xd8] sm:$0xff]
        %v2008 = vld [vmem:[#allocation8 + $0xe0] sm:$0xff]
        %v2009 = vld [vmem:[#allocation8 + $0xe8] sm:$0xff]
        %v2010 = vld [vmem:[#allocation8 + $0xf0] sm:$0xff]
        %v2011 = vld [vmem:[#allocation8 + $0xf8] sm:$0xff]
        %v2012 = vld [vmem:[%s9] sm:$0xf]
        %v2014 = vlaneseq
        %v2015 = vshrl.u32 %v2014, 7
        %v2016 = vsub.s32 0, %v2015
        %v2017 = vrot.slane %v2012, %v2016
        %v2018 = vlaneseq
        %v2019 = vshrl.u32 %v2018, 7
        %v2020 = vsub.s32 1, %v2019
        %v2021 = vrot.slane %v2012, %v2020
        %v2022 = vlaneseq
        %v2023 = vshrl.u32 %v2022, 7
        %v2024 = vsub.s32 2, %v2023
        %v2025 = vrot.slane %v2012, %v2024
        %v2026 = vlaneseq
        %v2027 = vshrl.u32 %v2026, 7
        %v2028 = vsub.s32 3, %v2027
        %v2029 = vrot.slane %v2012, %v2028
        %v2066 = vunpack.c.l.b16 %v1980
        %v2067 = vunpack.c.h.b16 %v1980
        %v2068 = vunpack.c.l.b16 %v1981
        %v2069 = vunpack.c.h.b16 %v1981
        %v2070 = vunpack.c.l.b16 %v1982
        %v2071 = vunpack.c.h.b16 %v1982
        %v2072 = vunpack.c.l.b16 %v1983
        %v2073 = vunpack.c.h.b16 %v1983
        %v2074 = vunpack.c.l.b16 %v1984
        %v2075 = vunpack.c.h.b16 %v1984
        %v2076 = vunpack.c.l.b16 %v1985
        %v2077 = vunpack.c.h.b16 %v1985
        %v2078 = vunpack.c.l.b16 %v1986
        %v2079 = vunpack.c.h.b16 %v1986
        %v2080 = vunpack.c.l.b16 %v1987
        %v2081 = vunpack.c.h.b16 %v1987
        %v2082 = vunpack.c.l.b16 %v1988
        %v2083 = vunpack.c.h.b16 %v1988
        %v2084 = vunpack.c.l.b16 %v1989
        %v2085 = vunpack.c.h.b16 %v1989
        %v2086 = vunpack.c.l.b16 %v1990
        %v2087 = vunpack.c.h.b16 %v1990
        %v2088 = vunpack.c.l.b16 %v1991
        %v2089 = vunpack.c.h.b16 %v1991
        %v2090 = vunpack.c.l.b16 %v1992
        %v2091 = vunpack.c.h.b16 %v1992
        %v2092 = vunpack.c.l.b16 %v1993
        %v2093 = vunpack.c.h.b16 %v1993
        %v2094 = vunpack.c.l.b16 %v1994
        %v2095 = vunpack.c.h.b16 %v1994
        %v2096 = vunpack.c.l.b16 %v1995
        %v2097 = vunpack.c.h.b16 %v1995
        %v2098 = vunpack.c.l.b16 %v1996
        %v2099 = vunpack.c.h.b16 %v1996
        %v2100 = vunpack.c.l.b16 %v1997
        %v2101 = vunpack.c.h.b16 %v1997
        %v2102 = vunpack.c.l.b16 %v1998
        %v2103 = vunpack.c.h.b16 %v1998
        %v2104 = vunpack.c.l.b16 %v1999
        %v2105 = vunpack.c.h.b16 %v1999
        %v2106 = vunpack.c.l.b16 %v2000
        %v2107 = vunpack.c.h.b16 %v2000
        %v2108 = vunpack.c.l.b16 %v2001
        %v2109 = vunpack.c.h.b16 %v2001
        %v2110 = vunpack.c.l.b16 %v2002
        %v2111 = vunpack.c.h.b16 %v2002
        %v2112 = vunpack.c.l.b16 %v2003
        %v2113 = vunpack.c.h.b16 %v2003
        %v2114 = vunpack.c.l.b16 %v2004
        %v2115 = vunpack.c.h.b16 %v2004
        %v2116 = vunpack.c.l.b16 %v2005
        %v2117 = vunpack.c.h.b16 %v2005
        %v2118 = vunpack.c.l.b16 %v2006
        %v2119 = vunpack.c.h.b16 %v2006
        %v2120 = vunpack.c.l.b16 %v2007
        %v2121 = vunpack.c.h.b16 %v2007
        %v2122 = vunpack.c.l.b16 %v2008
        %v2123 = vunpack.c.h.b16 %v2008
        %v2124 = vunpack.c.l.b16 %v2009
        %v2125 = vunpack.c.h.b16 %v2009
        %v2126 = vunpack.c.l.b16 %v2010
        %v2127 = vunpack.c.h.b16 %v2010
        %v2128 = vunpack.c.l.b16 %v2011
        %v2129 = vunpack.c.h.b16 %v2011
        %v2130 = vpack.c.b16 %v2070, %v2066
        %v2131 = vpack.c.b16 %v2071, %v2067
        %v2132 = vpack.c.b16 %v2072, %v2068
        %v2133 = vpack.c.b16 %v2073, %v2069
        %v2134 = vpack.c.b16 %v2078, %v2074
        %v2135 = vpack.c.b16 %v2079, %v2075
        %v2136 = vpack.c.b16 %v2080, %v2076
        %v2137 = vpack.c.b16 %v2081, %v2077
        %v2138 = vpack.c.b16 %v2086, %v2082
        %v2139 = vpack.c.b16 %v2087, %v2083
        %v2140 = vpack.c.b16 %v2088, %v2084
        %v2141 = vpack.c.b16 %v2089, %v2085
        %v2142 = vpack.c.b16 %v2094, %v2090
        %v2143 = vpack.c.b16 %v2095, %v2091
        %v2144 = vpack.c.b16 %v2096, %v2092
        %v2145 = vpack.c.b16 %v2097, %v2093
        %v2146 = vpack.c.b16 %v2102, %v2098
        %v2147 = vpack.c.b16 %v2103, %v2099
        %v2148 = vpack.c.b16 %v2104, %v2100
        %v2149 = vpack.c.b16 %v2105, %v2101
        %v2150 = vpack.c.b16 %v2110, %v2106
        %v2151 = vpack.c.b16 %v2111, %v2107
        %v2152 = vpack.c.b16 %v2112, %v2108
        %v2153 = vpack.c.b16 %v2113, %v2109
        %v2154 = vpack.c.b16 %v2118, %v2114
        %v2155 = vpack.c.b16 %v2119, %v2115
        %v2156 = vpack.c.b16 %v2120, %v2116
        %v2157 = vpack.c.b16 %v2121, %v2117
        %v2158 = vpack.c.b16 %v2126, %v2122
        %v2159 = vpack.c.b16 %v2127, %v2123
        %v2160 = vpack.c.b16 %v2128, %v2124
        %v2161 = vpack.c.b16 %v2129, %v2125
        %2194 = vmatprep.subr.bf16.mxu0 %v2159
        %2195 = vmatpush1.bf16.msra.mxu0 %v2158
        %2196 = vmatprep.subr.bf16.mxu0 %v2155
        %2197 = vmatpush1.bf16.msra.mxu0 %v2154
        %2198 = vmatprep.subr.bf16.mxu0 %v2151
        %2199 = vmatpush1.bf16.msra.mxu0 %v2150
        %2200 = vmatprep.subr.bf16.mxu0 %v2147
        %2201 = vmatpush1.bf16.msra.mxu0 %v2146
        %2202 = vmatprep.subr.bf16.mxu0 %v2143
        %2203 = vmatpush1.bf16.msra.mxu0 %v2142
        %2204 = vmatprep.subr.bf16.mxu0 %v2139
        %2205 = vmatpush1.bf16.msra.mxu0 %v2138
        %2206 = vmatprep.subr.bf16.mxu0 %v2135
        %2207 = vmatpush1.bf16.msra.mxu0 %v2134
        %2208 = vmatprep.subr.bf16.mxu0 %v2131
        %2209 = vmatpush1.bf16.msra.mxu0 %v2130
        %2210 = vmatprep.subr.bf16.mxu0 0
        %2211 = vmatpush2.bf16.msra.mxu0 0
        %2212 = vmatprep.subr.bf16.mxu0 0
        %2213 = vmatpush2.bf16.msra.mxu0 0
        %2214 = vmatprep.subr.bf16.mxu0 0
        %2215 = vmatpush2.bf16.msra.mxu0 0
        %2216 = vmatprep.subr.bf16.mxu0 0
        %2217 = vmatpush2.bf16.msra.mxu0 0
        %2218 = vmatprep.subr.bf16.mxu0 0
        %2219 = vmatpush2.bf16.msra.mxu0 0
        %2220 = vmatprep.subr.bf16.mxu0 0
        %2221 = vmatpush2.bf16.msra.mxu0 0
        %2222 = vmatprep.subr.bf16.mxu0 0
        %2223 = vmatpush2.bf16.msra.mxu0 0
        %2224 = vmatprep.subr.bf16.mxu0 0
        %2225 = vmatpush2.bf16.msra.mxu0 0
        %2226 = vmatprep.mubr.bf16.mxu0 0
        %2227 = vmatmul.mubr.bf16.gmra.mxu0 %v1979
        %v2228 = vpop.f32.mrf.mxu0
        %v2229 = vadd.f32 %v2017, %v2228
        %v2230 = vpop.f32.mrf.mxu0
        %v2231 = vadd.f32 %v2021, %v2230
        %v2232 = vpop.f32.mrf.mxu0
        %v2233 = vpop.f32.mrf.mxu0
        %2234 = vdwg.mxu0
        %2235 = vmatprep.subr.bf16.mxu0 %v2161
        %2236 = vmatpush1.bf16.msra.mxu0 %v2160
        %2237 = vmatprep.subr.bf16.mxu0 %v2157
        %2238 = vmatpush1.bf16.msra.mxu0 %v2156
        %2239 = vmatprep.subr.bf16.mxu0 %v2153
        %2240 = vmatpush1.bf16.msra.mxu0 %v2152
        %2241 = vmatprep.subr.bf16.mxu0 %v2149
        %2242 = vmatpush1.bf16.msra.mxu0 %v2148
        %2243 = vmatprep.subr.bf16.mxu0 %v2145
        %2244 = vmatpush1.bf16.msra.mxu0 %v2144
        %2245 = vmatprep.subr.bf16.mxu0 %v2141
        %2246 = vmatpush1.bf16.msra.mxu0 %v2140
        %2247 = vmatprep.subr.bf16.mxu0 %v2137
        %2248 = vmatpush1.bf16.msra.mxu0 %v2136
        %2249 = vmatprep.subr.bf16.mxu0 %v2133
        %2250 = vmatpush1.bf16.msra.mxu0 %v2132
        %2251 = vmatprep.subr.bf16.mxu0 0
        %2252 = vmatpush2.bf16.msra.mxu0 0
        %2253 = vmatprep.subr.bf16.mxu0 0
        %2254 = vmatpush2.bf16.msra.mxu0 0
        %2255 = vmatprep.subr.bf16.mxu0 0
        %2256 = vmatpush2.bf16.msra.mxu0 0
        %2257 = vmatprep.subr.bf16.mxu0 0
        %2258 = vmatpush2.bf16.msra.mxu0 0
        %2259 = vmatprep.subr.bf16.mxu0 0
        %2260 = vmatpush2.bf16.msra.mxu0 0
        %2261 = vmatprep.subr.bf16.mxu0 0
        %2262 = vmatpush2.bf16.msra.mxu0 0
        %2263 = vmatprep.subr.bf16.mxu0 0
        %2264 = vmatpush2.bf16.msra.mxu0 0
        %2265 = vmatprep.subr.bf16.mxu0 0
        %2266 = vmatpush2.bf16.msra.mxu0 0
        %2267 = vmatprep.mubr.bf16.mxu0 0
        %2268 = vmatmul.mubr.bf16.gmra.mxu0 %v1979
        %v2269 = vpop.f32.mrf.mxu0
        %v2270 = vadd.f32 %v2025, %v2269
        %v2271 = vpop.f32.mrf.mxu0
        %v2272 = vadd.f32 %v2029, %v2271
        %v2273 = vpop.f32.mrf.mxu0
        %v2274 = vpop.f32.mrf.mxu0
        %2275 = vdwg.mxu0
        %v2276 = vmul.f32 %v2229, 0.5
        %v2277 = vmul.f32 %v2231, 0.5
        %v2278 = vmul.f32 %v2270, 0.5
        %v2279 = vmul.f32 %v2272, 0.5
        %v2280 = vmul.f32 %v2229, 0.70710677
        %v2281 = vmul.f32 %v2231, 0.70710677
        %v2282 = vmul.f32 %v2270, 0.70710677
        %v2283 = vmul.f32 %v2272, 0.70710677
        %v2284 = vand.u32 2147483647, %v2280
        %v2285 = vand.u32 2147483647, %v2281
        %v2286 = vand.u32 2147483647, %v2282
        %v2287 = vand.u32 2147483647, %v2283
        %v2288 = vmul.f32 %v2284, 0.3275911
        %v2289 = vmul.f32 %v2285, 0.3275911
        %v2290 = vmul.f32 %v2286, 0.3275911
        %v2291 = vmul.f32 %v2287, 0.3275911
        %v2292 = vadd.f32 %v2288, 1.0
        %v2293 = vadd.f32 %v2289, 1.0
        %v2294 = vadd.f32 %v2290, 1.0
        %v2295 = vadd.f32 %v2291, 1.0
        %v2296 = vrcp.pop %v2292
        %v2297 = vmul.f32 1.0, %v2296
        %v2298 = vrcp.pop %v2293
        %v2299 = vmul.f32 1.0, %v2298
        %v2300 = vrcp.pop %v2294
        %v2301 = vmul.f32 1.0, %v2300
        %v2302 = vrcp.pop %v2295
        %v2303 = vmul.f32 1.0, %v2302
        %v2304 = vmul.f32 %v2297, 1.0614054
        %v2305 = vmul.f32 %v2299, 1.0614054
        %v2306 = vmul.f32 %v2301, 1.0614054
        %v2307 = vmul.f32 %v2303, 1.0614054
        %v2308 = vadd.f32 %v2304, -1.4531521
        %v2309 = vadd.f32 %v2305, -1.4531521
        %v2310 = vadd.f32 %v2306, -1.4531521
        %v2311 = vadd.f32 %v2307, -1.4531521
        %v2312 = vmul.f32 %v2308, %v2297
        %v2313 = vmul.f32 %v2309, %v2299
        %v2314 = vmul.f32 %v2310, %v2301
        %v2315 = vmul.f32 %v2311, %v2303
        %v2316 = vadd.f32 %v2312, 1.4214138
        %v2317 = vadd.f32 %v2313, 1.4214138
        %v2318 = vadd.f32 %v2314, 1.4214138
        %v2319 = vadd.f32 %v2315, 1.4214138
        %v2320 = vmul.f32 %v2316, %v2297
        %v2321 = vmul.f32 %v2317, %v2299
        %v2322 = vmul.f32 %v2318, %v2301
        %v2323 = vmul.f32 %v2319, %v2303
        %v2324 = vadd.f32 %v2320, -0.28449672
        %v2325 = vadd.f32 %v2321, -0.28449672
        %v2326 = vadd.f32 %v2322, -0.28449672
        %v2327 = vadd.f32 %v2323, -0.28449672
        %v2328 = vmul.f32 %v2324, %v2297
        %v2329 = vmul.f32 %v2325, %v2299
        %v2330 = vmul.f32 %v2326, %v2301
        %v2331 = vmul.f32 %v2327, %v2303
        %v2332 = vadd.f32 %v2328, 0.2548296
        %v2333 = vadd.f32 %v2329, 0.2548296
        %v2334 = vadd.f32 %v2330, 0.2548296
        %v2335 = vadd.f32 %v2331, 0.2548296
        %v2336 = vmul.f32 %v2332, %v2297
        %v2337 = vmul.f32 %v2333, %v2299
        %v2338 = vmul.f32 %v2334, %v2301
        %v2339 = vmul.f32 %v2335, %v2303
        %v2340 = vsub.f32 0.0, %v2284
        %v2341 = vsub.f32 0.0, %v2285
        %v2342 = vsub.f32 0.0, %v2286
        %v2343 = vsub.f32 0.0, %v2287
        %v2344 = vmul.f32 %v2340, %v2284
        %v2345 = vmul.f32 %v2341, %v2285
        %v2346 = vmul.f32 %v2342, %v2286
        %v2347 = vmul.f32 %v2343, %v2287
        %v2348 = vmul.f32 %v2344, 1.442695
        %v2349 = vpow.pop %v2348
        %v2350 = vmul.f32 %v2345, 1.442695
        %v2351 = vpow.pop %v2350
        %v2352 = vmul.f32 %v2346, 1.442695
        %v2353 = vpow.pop %v2352
        %v2354 = vmul.f32 %v2347, 1.442695
        %v2355 = vpow.pop %v2354
        %v2356 = vmul.f32 %v2336, %v2349
        %v2357 = vmul.f32 %v2337, %v2351
        %v2358 = vmul.f32 %v2338, %v2353
        %v2359 = vmul.f32 %v2339, %v2355
        %v2360 = vsub.f32 1.0, %v2356
        %v2361 = vsub.f32 1.0, %v2357
        %v2362 = vsub.f32 1.0, %v2358
        %v2363 = vsub.f32 1.0, %v2359
        %vm2364 = vcmp.ge.f32.partialorder %v2280, 0.0
        %vm2365 = vcmp.ge.f32.partialorder %v2281, 0.0
        %vm2366 = vcmp.ge.f32.partialorder %v2282, 0.0
        %vm2367 = vcmp.ge.f32.partialorder %v2283, 0.0
        %v2368 = vsub.f32 0.0, %v2360
        %v2369 = vsub.f32 0.0, %v2361
        %v2370 = vsub.f32 0.0, %v2362
        %v2371 = vsub.f32 0.0, %v2363
        %v2372 = vsel %vm2364, %v2360, %v2368
        %v2373 = vsel %vm2365, %v2361, %v2369
        %v2374 = vsel %vm2366, %v2362, %v2370
        %v2375 = vsel %vm2367, %v2363, %v2371
        %v2376 = vadd.f32 %v2372, 1.0
        %v2377 = vadd.f32 %v2373, 1.0
        %v2378 = vadd.f32 %v2374, 1.0
        %v2379 = vadd.f32 %v2375, 1.0
        %v2380 = vmul.f32 %v2276, %v2376
        %v2381 = vmul.f32 %v2277, %v2377
        %v2382 = vmul.f32 %v2278, %v2378
        %v2383 = vmul.f32 %v2279, %v2379
        %v2384 = vpack.c.bf16 %v2380, %v2380
        %v2385 = vpack.c.bf16 %v2381, %v2381
        %v2386 = vpack.c.bf16 %v2382, %v2382
        %v2387 = vpack.c.bf16 %v2383, %v2383
        %v2388 = vld [vmem:[#allocation10] sm:$0xf]
        %v2389 = vld [vmem:[#allocation10 + $0x4] sm:$0xf]
        %v2390 = vld [vmem:[#allocation10 + $0x8] sm:$0xf]
        %v2391 = vld [vmem:[#allocation10 + $0xc] sm:$0xf]
        %v2392 = vld [vmem:[#allocation10 + $0x10] sm:$0xf]
        %v2393 = vld [vmem:[#allocation10 + $0x14] sm:$0xf]
        %v2394 = vld [vmem:[#allocation10 + $0x18] sm:$0xf]
        %v2395 = vld [vmem:[#allocation10 + $0x1c] sm:$0xf]
        %v2396 = vld [vmem:[#allocation10 + $0x20] sm:$0xf]
        %v2397 = vld [vmem:[#allocation10 + $0x24] sm:$0xf]
        %v2398 = vld [vmem:[#allocation10 + $0x28] sm:$0xf]
        %v2399 = vld [vmem:[#allocation10 + $0x2c] sm:$0xf]
        %v2400 = vld [vmem:[#allocation10 + $0x30] sm:$0xf]
        %v2401 = vld [vmem:[#allocation10 + $0x34] sm:$0xf]
        %v2402 = vld [vmem:[#allocation10 + $0x38] sm:$0xf]
        %v2403 = vld [vmem:[#allocation10 + $0x3c] sm:$0xf]
        %v2404 = vld [vmem:[#allocation10 + $0x40] sm:$0xf]
        %v2405 = vld [vmem:[#allocation10 + $0x44] sm:$0xf]
        %v2406 = vld [vmem:[#allocation10 + $0x48] sm:$0xf]
        %v2407 = vld [vmem:[#allocation10 + $0x4c] sm:$0xf]
        %v2408 = vld [vmem:[#allocation10 + $0x50] sm:$0xf]
        %v2409 = vld [vmem:[#allocation10 + $0x54] sm:$0xf]
        %v2410 = vld [vmem:[#allocation10 + $0x58] sm:$0xf]
        %v2411 = vld [vmem:[#allocation10 + $0x5c] sm:$0xf]
        %v2412 = vld [vmem:[#allocation10 + $0x60] sm:$0xf]
        %v2413 = vld [vmem:[#allocation10 + $0x64] sm:$0xf]
        %v2414 = vld [vmem:[#allocation10 + $0x68] sm:$0xf]
        %v2415 = vld [vmem:[#allocation10 + $0x6c] sm:$0xf]
        %v2416 = vld [vmem:[#allocation10 + $0x70] sm:$0xf]
        %v2417 = vld [vmem:[#allocation10 + $0x74] sm:$0xf]
        %v2418 = vld [vmem:[#allocation10 + $0x78] sm:$0xf]
        %v2419 = vld [vmem:[#allocation10 + $0x7c] sm:$0xf]
        %v2420 = vld [vmem:[#allocation10 + $0x80] sm:$0xf]
        %v2421 = vld [vmem:[#allocation10 + $0x84] sm:$0xf]
        %v2422 = vld [vmem:[#allocation10 + $0x88] sm:$0xf]
        %v2423 = vld [vmem:[#allocation10 + $0x8c] sm:$0xf]
        %v2424 = vld [vmem:[#allocation10 + $0x90] sm:$0xf]
        %v2425 = vld [vmem:[#allocation10 + $0x94] sm:$0xf]
        %v2426 = vld [vmem:[#allocation10 + $0x98] sm:$0xf]
        %v2427 = vld [vmem:[#allocation10 + $0x9c] sm:$0xf]
        %v2428 = vld [vmem:[#allocation10 + $0xa0] sm:$0xf]
        %v2429 = vld [vmem:[#allocation10 + $0xa4] sm:$0xf]
        %v2430 = vld [vmem:[#allocation10 + $0xa8] sm:$0xf]
        %v2431 = vld [vmem:[#allocation10 + $0xac] sm:$0xf]
        %v2432 = vld [vmem:[#allocation10 + $0xb0] sm:$0xf]
        %v2433 = vld [vmem:[#allocation10 + $0xb4] sm:$0xf]
        %v2434 = vld [vmem:[#allocation10 + $0xb8] sm:$0xf]
        %v2435 = vld [vmem:[#allocation10 + $0xbc] sm:$0xf]
        %v2436 = vld [vmem:[#allocation10 + $0xc0] sm:$0xf]
        %v2437 = vld [vmem:[#allocation10 + $0xc4] sm:$0xf]
        %v2438 = vld [vmem:[#allocation10 + $0xc8] sm:$0xf]
        %v2439 = vld [vmem:[#allocation10 + $0xcc] sm:$0xf]
        %v2440 = vld [vmem:[#allocation10 + $0xd0] sm:$0xf]
        %v2441 = vld [vmem:[#allocation10 + $0xd4] sm:$0xf]
        %v2442 = vld [vmem:[#allocation10 + $0xd8] sm:$0xf]
        %v2443 = vld [vmem:[#allocation10 + $0xdc] sm:$0xf]
        %v2444 = vld [vmem:[#allocation10 + $0xe0] sm:$0xf]
        %v2445 = vld [vmem:[#allocation10 + $0xe4] sm:$0xf]
        %v2446 = vld [vmem:[#allocation10 + $0xe8] sm:$0xf]
        %v2447 = vld [vmem:[#allocation10 + $0xec] sm:$0xf]
        %v2448 = vld [vmem:[#allocation10 + $0xf0] sm:$0xf]
        %v2449 = vld [vmem:[#allocation10 + $0xf4] sm:$0xf]
        %v2450 = vld [vmem:[#allocation10 + $0xf8] sm:$0xf]
        %v2451 = vld [vmem:[#allocation10 + $0xfc] sm:$0xf]
        %v2452 = vld [vmem:[%s11] sm:$0x1]
        %v2454 = vlaneseq
        %v2455 = vshrl.u32 %v2454, 7
        %v2456 = vsub.s32 0, %v2455
        %v2457 = vrot.slane %v2452, %v2456
        %v2523 = vunpack.c.l.b16 %v2388
        %v2524 = vunpack.c.l.b16 %v2389
        %v2525 = vunpack.c.l.b16 %v2390
        %v2526 = vunpack.c.l.b16 %v2391
        %v2527 = vunpack.c.l.b16 %v2392
        %v2528 = vunpack.c.l.b16 %v2393
        %v2529 = vunpack.c.l.b16 %v2394
        %v2530 = vunpack.c.l.b16 %v2395
        %v2531 = vunpack.c.l.b16 %v2396
        %v2532 = vunpack.c.l.b16 %v2397
        %v2533 = vunpack.c.l.b16 %v2398
        %v2534 = vunpack.c.l.b16 %v2399
        %v2535 = vunpack.c.l.b16 %v2400
        %v2536 = vunpack.c.l.b16 %v2401
        %v2537 = vunpack.c.l.b16 %v2402
        %v2538 = vunpack.c.l.b16 %v2403
        %v2539 = vunpack.c.l.b16 %v2404
        %v2540 = vunpack.c.l.b16 %v2405
        %v2541 = vunpack.c.l.b16 %v2406
        %v2542 = vunpack.c.l.b16 %v2407
        %v2543 = vunpack.c.l.b16 %v2408
        %v2544 = vunpack.c.l.b16 %v2409
        %v2545 = vunpack.c.l.b16 %v2410
        %v2546 = vunpack.c.l.b16 %v2411
        %v2547 = vunpack.c.l.b16 %v2412
        %v2548 = vunpack.c.l.b16 %v2413
        %v2549 = vunpack.c.l.b16 %v2414
        %v2550 = vunpack.c.l.b16 %v2415
        %v2551 = vunpack.c.l.b16 %v2416
        %v2552 = vunpack.c.l.b16 %v2417
        %v2553 = vunpack.c.l.b16 %v2418
        %v2554 = vunpack.c.l.b16 %v2419
        %v2555 = vunpack.c.l.b16 %v2420
        %v2556 = vunpack.c.l.b16 %v2421
        %v2557 = vunpack.c.l.b16 %v2422
        %v2558 = vunpack.c.l.b16 %v2423
        %v2559 = vunpack.c.l.b16 %v2424
        %v2560 = vunpack.c.l.b16 %v2425
        %v2561 = vunpack.c.l.b16 %v2426
        %v2562 = vunpack.c.l.b16 %v2427
        %v2563 = vunpack.c.l.b16 %v2428
        %v2564 = vunpack.c.l.b16 %v2429
        %v2565 = vunpack.c.l.b16 %v2430
        %v2566 = vunpack.c.l.b16 %v2431
        %v2567 = vunpack.c.l.b16 %v2432
        %v2568 = vunpack.c.l.b16 %v2433
        %v2569 = vunpack.c.l.b16 %v2434
        %v2570 = vunpack.c.l.b16 %v2435
        %v2571 = vunpack.c.l.b16 %v2436
        %v2572 = vunpack.c.l.b16 %v2437
        %v2573 = vunpack.c.l.b16 %v2438
        %v2574 = vunpack.c.l.b16 %v2439
        %v2575 = vunpack.c.l.b16 %v2440
        %v2576 = vunpack.c.l.b16 %v2441
        %v2577 = vunpack.c.l.b16 %v2442
        %v2578 = vunpack.c.l.b16 %v2443
        %v2579 = vunpack.c.l.b16 %v2444
        %v2580 = vunpack.c.l.b16 %v2445
        %v2581 = vunpack.c.l.b16 %v2446
        %v2582 = vunpack.c.l.b16 %v2447
        %v2583 = vunpack.c.l.b16 %v2448
        %v2584 = vunpack.c.l.b16 %v2449
        %v2585 = vunpack.c.l.b16 %v2450
        %v2586 = vunpack.c.l.b16 %v2451
        %v2587 = vpack.c.b16 %v2524, %v2523
        %v2588 = vpack.c.b16 %v2526, %v2525
        %v2589 = vpack.c.b16 %v2528, %v2527
        %v2590 = vpack.c.b16 %v2530, %v2529
        %v2591 = vpack.c.b16 %v2532, %v2531
        %v2592 = vpack.c.b16 %v2534, %v2533
        %v2593 = vpack.c.b16 %v2536, %v2535
        %v2594 = vpack.c.b16 %v2538, %v2537
        %v2595 = vpack.c.b16 %v2540, %v2539
        %v2596 = vpack.c.b16 %v2542, %v2541
        %v2597 = vpack.c.b16 %v2544, %v2543
        %v2598 = vpack.c.b16 %v2546, %v2545
        %v2599 = vpack.c.b16 %v2548, %v2547
        %v2600 = vpack.c.b16 %v2550, %v2549
        %v2601 = vpack.c.b16 %v2552, %v2551
        %v2602 = vpack.c.b16 %v2554, %v2553
        %v2603 = vpack.c.b16 %v2556, %v2555
        %v2604 = vpack.c.b16 %v2558, %v2557
        %v2605 = vpack.c.b16 %v2560, %v2559
        %v2606 = vpack.c.b16 %v2562, %v2561
        %v2607 = vpack.c.b16 %v2564, %v2563
        %v2608 = vpack.c.b16 %v2566, %v2565
        %v2609 = vpack.c.b16 %v2568, %v2567
        %v2610 = vpack.c.b16 %v2570, %v2569
        %v2611 = vpack.c.b16 %v2572, %v2571
        %v2612 = vpack.c.b16 %v2574, %v2573
        %v2613 = vpack.c.b16 %v2576, %v2575
        %v2614 = vpack.c.b16 %v2578, %v2577
        %v2615 = vpack.c.b16 %v2580, %v2579
        %v2616 = vpack.c.b16 %v2582, %v2581
        %v2617 = vpack.c.b16 %v2584, %v2583
        %v2618 = vpack.c.b16 %v2586, %v2585
        %2651 = vmatprep.subr.bf16.mxu0 0
        %2652 = vmatpush1.bf16.msra.mxu0 %v2594
        %2653 = vmatprep.subr.bf16.mxu0 0
        %2654 = vmatpush1.bf16.msra.mxu0 %v2593
        %2655 = vmatprep.subr.bf16.mxu0 0
        %2656 = vmatpush1.bf16.msra.mxu0 %v2592
        %2657 = vmatprep.subr.bf16.mxu0 0
        %2658 = vmatpush1.bf16.msra.mxu0 %v2591
        %2659 = vmatprep.subr.bf16.mxu0 0
        %2660 = vmatpush1.bf16.msra.mxu0 %v2590
        %2661 = vmatprep.subr.bf16.mxu0 0
        %2662 = vmatpush1.bf16.msra.mxu0 %v2589
        %2663 = vmatprep.subr.bf16.mxu0 0
        %2664 = vmatpush1.bf16.msra.mxu0 %v2588
        %2665 = vmatprep.subr.bf16.mxu0 0
        %2666 = vmatpush1.bf16.msra.mxu0 %v2587
        %2667 = vmatprep.subr.bf16.mxu0 0
        %2668 = vmatpush2.bf16.msra.mxu0 %v2602
        %2669 = vmatprep.subr.bf16.mxu0 0
        %2670 = vmatpush2.bf16.msra.mxu0 %v2601
        %2671 = vmatprep.subr.bf16.mxu0 0
        %2672 = vmatpush2.bf16.msra.mxu0 %v2600
        %2673 = vmatprep.subr.bf16.mxu0 0
        %2674 = vmatpush2.bf16.msra.mxu0 %v2599
        %2675 = vmatprep.subr.bf16.mxu0 0
        %2676 = vmatpush2.bf16.msra.mxu0 %v2598
        %2677 = vmatprep.subr.bf16.mxu0 0
        %2678 = vmatpush2.bf16.msra.mxu0 %v2597
        %2679 = vmatprep.subr.bf16.mxu0 0
        %2680 = vmatpush2.bf16.msra.mxu0 %v2596
        %2681 = vmatprep.subr.bf16.mxu0 0
        %2682 = vmatpush2.bf16.msra.mxu0 %v2595
        %2683 = vmatprep.mubr.bf16.mxu0 %v2385
        %2684 = vmatmul.mubr.bf16.gmra.mxu0 %v2384
        %v2685 = vpop.f32.mrf.mxu0
        %v2686 = vadd.f32 %v2457, %v2685
        %v2687 = vpop.f32.mrf.mxu0
        %v2688 = vpop.f32.mrf.mxu0
        %v2689 = vpop.f32.mrf.mxu0
        %2690 = vdwg.mxu0
        %2691 = vmatprep.subr.bf16.mxu0 0
        %2692 = vmatpush1.bf16.msra.mxu0 %v2610
        %2693 = vmatprep.subr.bf16.mxu0 0
        %2694 = vmatpush1.bf16.msra.mxu0 %v2609
        %2695 = vmatprep.subr.bf16.mxu0 0
        %2696 = vmatpush1.bf16.msra.mxu0 %v2608
        %2697 = vmatprep.subr.bf16.mxu0 0
        %2698 = vmatpush1.bf16.msra.mxu0 %v2607
        %2699 = vmatprep.subr.bf16.mxu0 0
        %2700 = vmatpush1.bf16.msra.mxu0 %v2606
        %2701 = vmatprep.subr.bf16.mxu0 0
        %2702 = vmatpush1.bf16.msra.mxu0 %v2605
        %2703 = vmatprep.subr.bf16.mxu0 0
        %2704 = vmatpush1.bf16.msra.mxu0 %v2604
        %2705 = vmatprep.subr.bf16.mxu0 0
        %2706 = vmatpush1.bf16.msra.mxu0 %v2603
        %2707 = vmatprep.subr.bf16.mxu0 0
        %2708 = vmatpush2.bf16.msra.mxu0 %v2618
        %2709 = vmatprep.subr.bf16.mxu0 0
        %2710 = vmatpush2.bf16.msra.mxu0 %v2617
        %2711 = vmatprep.subr.bf16.mxu0 0
        %2712 = vmatpush2.bf16.msra.mxu0 %v2616
        %2713 = vmatprep.subr.bf16.mxu0 0
        %2714 = vmatpush2.bf16.msra.mxu0 %v2615
        %2715 = vmatprep.subr.bf16.mxu0 0
        %2716 = vmatpush2.bf16.msra.mxu0 %v2614
        %2717 = vmatprep.subr.bf16.mxu0 0
        %2718 = vmatpush2.bf16.msra.mxu0 %v2613
        %2719 = vmatprep.subr.bf16.mxu0 0
        %2720 = vmatpush2.bf16.msra.mxu0 %v2612
        %2721 = vmatprep.subr.bf16.mxu0 0
        %2722 = vmatpush2.bf16.msra.mxu0 %v2611
        %2723 = vmatprep.mubr.bf16.mxu0 %v2387
        %2724 = vmatmul.mubr.bf16.gmra.mxu0 %v2386
        %v2725 = vpop.f32.mrf.mxu0
        %v2726 = vadd.f32 %v2686, %v2725
        %v2727 = vpop.f32.mrf.mxu0
        %v2728 = vpop.f32.mrf.mxu0
        %v2729 = vpop.f32.mrf.mxu0
        %2730 = vdwg.mxu0
        %v2731 = vadd.f32 %v1951, %v2726
        %2732 = vst [vmem:[%s486] sm:$0xff] %v2731
        %s2733 = sand.u32 %s296, 1
        %s2734 = scalar_lea.sflag [#allocation4], %s2733
        %s2735 = sand.u32 %s296, 1
        %s2736 = smul.addr %s2735, 8
        %s2737 = scalar_lea.vmem [#allocation11], %s2736
        // Predicated region
        $region89: #{tpu_custom_call.1} parent=67 // pred_check
          %p2738 = pneg %p306
        $region90: #{tpu_custom_call.1} parent=67 // pred_check_branch
          %2740 = sbr.rel (%p2738) target = $region92
        $region91: #{tpu_custom_call.1} parent=67 // pred_region
          %s2742 = ssub.s32 128, 128
          %2743 = vsyncadd %s2734, %s2742
          %s2744 = smul.addr %s31, 128
          %s2745 = scalar_lea.hbm %s12, %s2744
          %s2747 = sshll.u32 %s2737, 4
          %s2748 = int_to_ptr.vmem [resolvable:$true] %s2747
          %2750 = dma.vmem_to_hbm [thread:$0]  %s2748, 128, %s2745, %s2734
        $region92: #{tpu_custom_call.1} parent=67 // pred_fallthru
          _
      $region68: #{tpu_custom_call.1} parent=5 // pred_fallthru
        _
      %p2751 = scmp.le.s32.totalorder 2, %s26
      // Predicated region
      $region93: #{tpu_custom_call.1} parent=5 // pred_check
        %p2752 = pneg %p2751
      $region94: #{tpu_custom_call.1} parent=5 // pred_check_branch
        %2754 = sbr.rel (%p2752) target = $region96
      $region95: #{tpu_custom_call.1} parent=5 // pred_region
        %s2755 = ssub.s32 %s26, 2
        // Predicated region
        $region97: #{tpu_custom_call.1} parent=95 // pred_check
          %p2756 = pneg %p312
        $region98: #{tpu_custom_call.1} parent=95 // pred_check_branch
          %2758 = sbr.rel (%p2756) target = $region100
        $region99: #{tpu_custom_call.1} parent=95 // pred_region
          %s2759 = sand.u32 %s297, 1
          %s2760 = scalar_lea.sflag [#allocation4], %s2759
          %s2761 = sand.u32 %s297, 1
          %s2762 = smul.addr %s2761, 8
          %s2763 = scalar_lea.vmem [#allocation11], %s2762
          %2764 = dma.done %s2760, 128
        $region100: #{tpu_custom_call.1} parent=95 // pred_fallthru
          _
      $region96: #{tpu_custom_call.1} parent=5 // pred_fallthru
        _
    $region6: #{tpu_custom_call.1} parent=1 // loop_footer
      %s30 = sadd.s32 1, %s26
    $region7: #{tpu_custom_call.1} parent=1 // loop_footer_branch
      %25 = sbr.rel target = $region3
    $region8: #{tpu_custom_call.1} parent=1 // loop_exit
      _
    %2765 = vsyncpa [#allocation3], 1
    %s2766 = scalar_lea.sflag [#allocation3], 1
    %2767 = vsyncpa %s2766, 1
    %2768 = vsyncpa [#allocation6], 1
    %2769 = vsyncpa [#allocation9], 1
    %2770 = vsyncpa [#allocation4], 1
    %s2771 = scalar_lea.sflag [#allocation4], 1
    %2772 = vsyncpa %s2771, 1

// kernel: tpu_custom_call.1
$region0: #{tpu_custom_call.1}
  #allocation0 [shape = 'u32[]', space=smem, size = 0x4, offset = 0x4, fixed_abs, tag = 'smem constant byte address 0x4 - core index']
  #allocation1 [shape = 'u32[144,128]{1,0:T(1,128)}', space=vmem, size = 0x12000, scoped, tag = 'internal scratch']
  %s0 = inlined_call_operand.hbm [shape: f32[2,8,128], index: 0, kind: input, shape index: {}]
  %s1 = inlined_call_operand.vmem [shape: f32[1,128], index: 1, kind: input, shape index: {}]
  %s2 = inlined_call_operand.vmem [shape: f32[1,128], index: 2, kind: input, shape index: {}]
  %s3 = inlined_call_operand.hbm [shape: bf16[128,384], index: 3, kind: input, shape index: {}]
  %s4 = inlined_call_operand.hbm [shape: bf16[128,128], index: 4, kind: input, shape index: {}]
  %s5 = inlined_call_operand.vmem [shape: f32[1,128], index: 5, kind: input, shape index: {}]
  %s6 = inlined_call_operand.vmem [shape: f32[1,128], index: 6, kind: input, shape index: {}]
  %s7 = inlined_call_operand.vmem [shape: f32[1,128], index: 7, kind: input, shape index: {}]
  %s8 = inlined_call_operand.hbm [shape: bf16[128,512], index: 8, kind: input, shape index: {}]
  %s9 = inlined_call_operand.vmem [shape: f32[1,512], index: 9, kind: input, shape index: {}]
  %s10 = inlined_call_operand.hbm [shape: bf16[512,128], index: 10, kind: input, shape index: {}]
  %s11 = inlined_call_operand.vmem [shape: f32[1,128], index: 11, kind: input, shape index: {}]
  %s12 = inlined_call_operand.hbm [shape: f32[2,8,128], index: 12, kind: output, shape index: {}]
  %s13 = sld [smem:[#allocation0]]
  $region101: #{tpu_custom_call.1} parent=0
    _
  %s15 = ssub.s32 1, %s13
  %s16 = scalar_select 0, %s15, %s13
  $region1: #{tpu_custom_call.1} parent=0
    #allocation2 [shape = 'u8[8192]{0}', space=vmem, size = 0x2000, scoped, tag = 'input window, operand 0']
    #allocation3 [shape = 's32[2]{0}', space=sflag, size = 0x8, scoped, tag = 'scoped memory for tpu_custom_call.1']
    #allocation4 [shape = 's32[2]{0}', space=sflag, size = 0x8, scoped, tag = 'scoped memory for tpu_custom_call.1']
    #allocation5 [shape = 'u8[98304]{0}', space=vmem, size = 0x18000, scoped, tag = 'input window, operand 3, single buffered']
    #allocation6 [shape = 's32[1]{0}', space=sflag, size = 0x4, scoped, tag = 'scoped memory for tpu_custom_call.1']
    #allocation7 [shape = 'u8[32768]{0}', space=vmem, size = 0x8000, scoped, tag = 'input window, operand 4, single buffered']
    #allocation8 [shape = 'u8[131072]{0}', space=vmem, size = 0x20000, scoped, tag = 'input window, operand 8, single buffered']
    #allocation9 [shape = 's32[1]{0}', space=sflag, size = 0x4, scoped, tag = 'scoped memory for tpu_custom_call.1']
    #allocation10 [shape = 'u8[131072]{0}', space=vmem, size = 0x20000, scoped, tag = 'input window, operand 10, single buffered']
    #allocation11 [shape = 'u8[8192]{0}', space=vmem, size = 0x2000, scoped, tag = 'output window, operand 0']
    %17 = vsyncpa [#allocation3], 0
    %s18 = scalar_lea.sflag [#allocation3], 1
    %19 = vsyncpa %s18, 0
    %20 = vsyncpa [#allocation6], 0
    %21 = vsyncpa [#allocation9], 0
    %22 = vsyncpa [#allocation4], 0
    %s23 = scalar_lea.sflag [#allocation4], 1
    %24 = vsyncpa %s23, 0
    loop: start=0, step=1, limit=4
    $region2: #{tpu_custom_call.1} parent=1 // loop_pre_header
      _
    $region3: #{tpu_custom_call.1} parent=1 // loop_header
      %s26 = sphi 0, %s30
      %p27 = scmp.ge.s32.totalorder %s26, 4
      %s36 = sphi 0, %s38
      %s39 = sphi 0, %s36
      %s40 = sphi 0, %s39
      %s56 = sphi 0, %s40
      %s60 = sphi 0, %s60
      %s62 = sphi 0, %s60
      %s63 = sphi 0, %s62
      %s77 = sphi 0, %s63
      %s81 = sphi 0, %s81
      %s83 = sphi 0, %s81
      %s84 = sphi 0, %s83
      %s98 = sphi 0, %s84
      %s102 = sphi 0, %s102
      %s104 = sphi 0, %s102
      %s105 = sphi 0, %s104
      %s119 = sphi 0, %s105
      %s123 = sphi 0, %s123
      %s125 = sphi 0, %s123
      %s126 = sphi 0, %s125
      %s140 = sphi 0, %s126
      %s144 = sphi 0, %s144
      %s146 = sphi 0, %s144
      %s147 = sphi 0, %s146
      %s161 = sphi 0, %s147
      %s165 = sphi 0, %s165
      %s167 = sphi 0, %s165
      %s168 = sphi 0, %s167
      %s182 = sphi 0, %s168
      %s186 = sphi 0, %s186
      %s188 = sphi 0, %s186
      %s189 = sphi 0, %s188
      %s203 = sphi 0, %s189
      %s207 = sphi 0, %s207
      %s209 = sphi 0, %s207
      %s210 = sphi 0, %s209
      %s224 = sphi 0, %s210
      %s228 = sphi 0, %s228
      %s230 = sphi 0, %s228
      %s231 = sphi 0, %s230
      %s245 = sphi 0, %s231
      %s249 = sphi 0, %s249
      %s251 = sphi 0, %s249
      %s252 = sphi 0, %s251
      %s266 = sphi 0, %s252
      %s270 = sphi 0, %s270
      %s272 = sphi 0, %s270
      %s273 = sphi 0, %s272
      %s287 = sphi 0, %s273
      %s293 = sphi 0, %s295
      %s296 = sphi 0, %s293
      %s297 = sphi 0, %s296
      %s313 = sphi 0, %s297
    $region4: #{tpu_custom_call.1} parent=1 // loop_header_branch
      %29 = sbr.rel (%p27) target = $region8
    $region5: #{tpu_custom_call.1} parent=1 // loop_body
      %s31 = ssub.s32 %s26, 1
      %s32 = ssub.s32 %s26, 2
      %s33 = sadd.s32 %s26, 1
      %s34 = ssub.s32 %s26, %s33
      %p35 = scmp.eq.s32.totalorder %s34, 0
      %s37 = sadd.s32 %s36, 1
      %s38 = scalar_select %p35, %s36, %s37
      %p41 = pneg %p35
      %p42 = scmp.eq.s32.totalorder %s26, 1
      %p43 = por %p41, %p42
      %p44 = scmp.ne.s32.totalorder %s36, %s39
      %p45 = scmp.eq.s32.totalorder %s26, 0
      %p46 = por %p44, %p45
      %p47 = scmp.ne.s32.totalorder %s36, %s39
      %p48 = scmp.eq.s32.totalorder %s31, 1
      %p49 = por %p47, %p48
      %p50 = scmp.ne.s32.totalorder %s39, %s40
      %p51 = scmp.eq.s32.totalorder %s31, 0
      %p52 = por %p50, %p51
      %p53 = scmp.ne.s32.totalorder %s39, %s40
      %p54 = scmp.eq.s32.totalorder %s32, 1
      %p55 = por %p53, %p54
      %p57 = scmp.ne.s32.totalorder %s40, %s56
      %p58 = scmp.eq.s32.totalorder %s32, 0
      %p59 = por %p57, %p58
      %s61 = sadd.s32 %s60, 1
      %p64 = scmp.eq.s32.totalorder %s26, 1
      %p65 = scmp.ne.s32.totalorder %s60, %s62
      %p66 = scmp.eq.s32.totalorder %s26, 0
      %p67 = por %p65, %p66
      %p68 = scmp.ne.s32.totalorder %s60, %s62
      %p69 = scmp.eq.s32.totalorder %s31, 1
      %p70 = por %p68, %p69
      %p71 = scmp.ne.s32.totalorder %s62, %s63
      %p72 = scmp.eq.s32.totalorder %s31, 0
      %p73 = por %p71, %p72
      %p74 = scmp.ne.s32.totalorder %s62, %s63
      %p75 = scmp.eq.s32.totalorder %s32, 1
      %p76 = por %p74, %p75
      %p78 = scmp.ne.s32.totalorder %s63, %s77
      %p79 = scmp.eq.s32.totalorder %s32, 0
      %p80 = por %p78, %p79
      %s82 = sadd.s32 %s81, 1
      %p85 = scmp.eq.s32.totalorder %s26, 1
      %p86 = scmp.ne.s32.totalorder %s81, %s83
      %p87 = scmp.eq.s32.totalorder %s26, 0
      %p88 = por %p86, %p87
      %p89 = scmp.ne.s32.totalorder %s81, %s83
      %p90 = scmp.eq.s32.totalorder %s31, 1
      %p91 = por %p89, %p90
      %p92 = scmp.ne.s32.totalorder %s83, %s84
      %p93 = scmp.eq.s32.totalorder %s31, 0
      %p94 = por %p92, %p93
      %p95 = scmp.ne.s32.totalorder %s83, %s84
      %p96 = scmp.eq.s32.totalorder %s32, 1
      %p97 = por %p95, %p96
      %p99 = scmp.ne.s32.totalorder %s84, %s98
      %p100 = scmp.eq.s32.totalorder %s32, 0
      %p101 = por %p99, %p100
      %s103 = sadd.s32 %s102, 1
      %p106 = scmp.eq.s32.totalorder %s26, 1
      %p107 = scmp.ne.s32.totalorder %s102, %s104
      %p108 = scmp.eq.s32.totalorder %s26, 0
      %p109 = por %p107, %p108
      %p110 = scmp.ne.s32.totalorder %s102, %s104
      %p111 = scmp.eq.s32.totalorder %s31, 1
      %p112 = por %p110, %p111
      %p113 = scmp.ne.s32.totalorder %s104, %s105
      %p114 = scmp.eq.s32.totalorder %s31, 0
      %p115 = por %p113, %p114
      %p116 = scmp.ne.s32.totalorder %s104, %s105
      %p117 = scmp.eq.s32.totalorder %s32, 1
      %p118 = por %p116, %p117
      %p120 = scmp.ne.s32.totalorder %s105, %s119
      %p121 = scmp.eq.s32.totalorder %s32, 0
      %p122 = por %p120, %p121
      %s124 = sadd.s32 %s123, 1
      %p127 = scmp.eq.s32.totalorder %s26, 1
      %p128 = scmp.ne.s32.totalorder %s123, %s125
      %p129 = scmp.eq.s32.totalorder %s26, 0
      %p130 = por %p128, %p129
      %p131 = scmp.ne.s32.totalorder %s123, %s125
      %p132 = scmp.eq.s32.totalorder %s31, 1
      %p133 = por %p131, %p132
      %p134 = scmp.ne.s32.totalorder %s125, %s126
      %p135 = scmp.eq.s32.totalorder %s31, 0
      %p136 = por %p134, %p135
      %p137 = scmp.ne.s32.totalorder %s125, %s126
      %p138 = scmp.eq.s32.totalorder %s32, 1
      %p139 = por %p137, %p138
      %p141 = scmp.ne.s32.totalorder %s126, %s140
      %p142 = scmp.eq.s32.totalorder %s32, 0
      %p143 = por %p141, %p142
      %s145 = sadd.s32 %s144, 1
      %p148 = scmp.eq.s32.totalorder %s26, 1
      %p149 = scmp.ne.s32.totalorder %s144, %s146
      %p150 = scmp.eq.s32.totalorder %s26, 0
      %p151 = por %p149, %p150
      %p152 = scmp.ne.s32.totalorder %s144, %s146
      %p153 = scmp.eq.s32.totalorder %s31, 1
      %p154 = por %p152, %p153
      %p155 = scmp.ne.s32.totalorder %s146, %s147
      %p156 = scmp.eq.s32.totalorder %s31, 0
      %p157 = por %p155, %p156
      %p158 = scmp.ne.s32.totalorder %s146, %s147
      %p159 = scmp.eq.s32.totalorder %s32, 1
      %p160 = por %p158, %p159
      %p162 = scmp.ne.s32.totalorder %s147, %s161
      %p163 = scmp.eq.s32.totalorder %s32, 0
      %p164 = por %p162, %p163
      %s166 = sadd.s32 %s165, 1
      %p169 = scmp.eq.s32.totalorder %s26, 1
      %p170 = scmp.ne.s32.totalorder %s165, %s167
      %p171 = scmp.eq.s32.totalorder %s26, 0
      %p172 = por %p170, %p171
      %p173 = scmp.ne.s32.totalorder %s165, %s167
      %p174 = scmp.eq.s32.totalorder %s31, 1
      %p175 = por %p173, %p174
      %p176 = scmp.ne.s32.totalorder %s167, %s168
      %p177 = scmp.eq.s32.totalorder %s31, 0
      %p178 = por %p176, %p177
      %p179 = scmp.ne.s32.totalorder %s167, %s168
      %p180 = scmp.eq.s32.totalorder %s32, 1
      %p181 = por %p179, %p180
      %p183 = scmp.ne.s32.totalorder %s168, %s182
      %p184 = scmp.eq.s32.totalorder %s32, 0
      %p185 = por %p183, %p184
      %s187 = sadd.s32 %s186, 1
      %p190 = scmp.eq.s32.totalorder %s26, 1
      %p191 = scmp.ne.s32.totalorder %s186, %s188
      %p192 = scmp.eq.s32.totalorder %s26, 0
      %p193 = por %p191, %p192
      %p194 = scmp.ne.s32.totalorder %s186, %s188
      %p195 = scmp.eq.s32.totalorder %s31, 1
      %p196 = por %p194, %p195
      %p197 = scmp.ne.s32.totalorder %s188, %s189
      %p198 = scmp.eq.s32.totalorder %s31, 0
      %p199 = por %p197, %p198
      %p200 = scmp.ne.s32.totalorder %s188, %s189
      %p201 = scmp.eq.s32.totalorder %s32, 1
      %p202 = por %p200, %p201
      %p204 = scmp.ne.s32.totalorder %s189, %s203
      %p205 = scmp.eq.s32.totalorder %s32, 0
      %p206 = por %p204, %p205
      %s208 = sadd.s32 %s207, 1
      %p211 = scmp.eq.s32.totalorder %s26, 1
      %p212 = scmp.ne.s32.totalorder %s207, %s209
      %p213 = scmp.eq.s32.totalorder %s26, 0
      %p214 = por %p212, %p213
      %p215 = scmp.ne.s32.totalorder %s207, %s209
      %p216 = scmp.eq.s32.totalorder %s31, 1
      %p217 = por %p215, %p216
      %p218 = scmp.ne.s32.totalorder %s209, %s210
      %p219 = scmp.eq.s32.totalorder %s31, 0
      %p220 = por %p218, %p219
      %p221 = scmp.ne.s32.totalorder %s209, %s210
      %p222 = scmp.eq.s32.totalorder %s32, 1
      %p223 = por %p221, %p222
      %p225 = scmp.ne.s32.totalorder %s210, %s224
      %p226 = scmp.eq.s32.totalorder %s32, 0
      %p227 = por %p225, %p226
      %s229 = sadd.s32 %s228, 1
      %p232 = scmp.eq.s32.totalorder %s26, 1
      %p233 = scmp.ne.s32.totalorder %s228, %s230
      %p234 = scmp.eq.s32.totalorder %s26, 0
      %p235 = por %p233, %p234
      %p236 = scmp.ne.s32.totalorder %s228, %s230
      %p237 = scmp.eq.s32.totalorder %s31, 1
      %p238 = por %p236, %p237
      %p239 = scmp.ne.s32.totalorder %s230, %s231
      %p240 = scmp.eq.s32.totalorder %s31, 0
      %p241 = por %p239, %p240
      %p242 = scmp.ne.s32.totalorder %s230, %s231
      %p243 = scmp.eq.s32.totalorder %s32, 1
      %p244 = por %p242, %p243
      %p246 = scmp.ne.s32.totalorder %s231, %s245
      %p247 = scmp.eq.s32.totalorder %s32, 0
      %p248 = por %p246, %p247
      %s250 = sadd.s32 %s249, 1
      %p253 = scmp.eq.s32.totalorder %s26, 1
      %p254 = scmp.ne.s32.totalorder %s249, %s251
      %p255 = scmp.eq.s32.totalorder %s26, 0
      %p256 = por %p254, %p255
      %p257 = scmp.ne.s32.totalorder %s249, %s251
      %p258 = scmp.eq.s32.totalorder %s31, 1
      %p259 = por %p257, %p258
      %p260 = scmp.ne.s32.totalorder %s251, %s252
      %p261 = scmp.eq.s32.totalorder %s31, 0
      %p262 = por %p260, %p261
      %p263 = scmp.ne.s32.totalorder %s251, %s252
      %p264 = scmp.eq.s32.totalorder %s32, 1
      %p265 = por %p263, %p264
      %p267 = scmp.ne.s32.totalorder %s252, %s266
      %p268 = scmp.eq.s32.totalorder %s32, 0
      %p269 = por %p267, %p268
      %s271 = sadd.s32 %s270, 1
      %p274 = scmp.eq.s32.totalorder %s26, 1
      %p275 = scmp.ne.s32.totalorder %s270, %s272
      %p276 = scmp.eq.s32.totalorder %s26, 0
      %p277 = por %p275, %p276
      %p278 = scmp.ne.s32.totalorder %s270, %s272
      %p279 = scmp.eq.s32.totalorder %s31, 1
      %p280 = por %p278, %p279
      %p281 = scmp.ne.s32.totalorder %s272, %s273
      %p282 = scmp.eq.s32.totalorder %s31, 0
      %p283 = por %p281, %p282
      %p284 = scmp.ne.s32.totalorder %s272, %s273
      %p285 = scmp.eq.s32.totalorder %s32, 1
      %p286 = por %p284, %p285
      %p288 = scmp.ne.s32.totalorder %s273, %s287
      %p289 = scmp.eq.s32.totalorder %s32, 0
      %p290 = por %p288, %p289
      %s291 = ssub.s32 %s26, %s33
      %p292 = scmp.eq.s32.totalorder %s291, 0
      %s294 = sadd.s32 %s293, 1
      %s295 = scalar_select %p292, %s293, %s294
      %p298 = pneg %p292
      %p299 = scmp.eq.s32.totalorder %s26, 1
      %p300 = por %p298, %p299
      %p301 = scmp.ne.s32.totalorder %s293, %s296
      %p302 = scmp.eq.s32.totalorder %s26, 0
      %p303 = por %p301, %p302
      %p304 = scmp.ne.s32.totalorder %s293, %s296
      %p305 = scmp.eq.s32.totalorder %s31, 1
      %p306 = por %p304, %p305
      %p307 = scmp.ne.s32.totalorder %s296, %s297
      %p308 = scmp.eq.s32.totalorder %s31, 0
      %p309 = por %p307, %p308
      %p310 = scmp.ne.s32.totalorder %s296, %s297
      %p311 = scmp.eq.s32.totalorder %s32, 1
      %p312 = por %p310, %p311
      %p314 = scmp.ne.s32.totalorder %s297, %s313
      %p315 = scmp.eq.s32.totalorder %s32, 0
      %p316 = por %p314, %p315
      %p317 = scmp.le.s32.totalorder 1, %s26
      %p318 = scmp.lt.s32.totalorder %s26, 3
      %p319 = pnand %p317, %p318
      %p320 = pneg %p319
      // Predicated region
      $region9: #{tpu_custom_call.1} parent=5 // pred_check
        _
      $region10: #{tpu_custom_call.1} parent=5 // pred_check_branch
        %322 = sbr.rel (%p319) target = $region12
      $region11: #{tpu_custom_call.1} parent=5 // pred_region
        %s323 = ssub.s32 %s26, 1
        // Predicated region
        $region13: #{tpu_custom_call.1} parent=11 // pred_check
          %p324 = pneg %p73
        $region14: #{tpu_custom_call.1} parent=11 // pred_check_branch
          %326 = sbr.rel (%p324) target = $region16
        $region15: #{tpu_custom_call.1} parent=11 // pred_region
          _
        $region16: #{tpu_custom_call.1} parent=11 // pred_fallthru
          _
        // Predicated region
        $region17: #{tpu_custom_call.1} parent=11 // pred_check
          %p327 = pneg %p94
        $region18: #{tpu_custom_call.1} parent=11 // pred_check_branch
          %329 = sbr.rel (%p327) target = $region20
        $region19: #{tpu_custom_call.1} parent=11 // pred_region
          _
        $region20: #{tpu_custom_call.1} parent=11 // pred_fallthru
          _
        // Predicated region
        $region21: #{tpu_custom_call.1} parent=11 // pred_check
          %p330 = pneg %p115
        $region22: #{tpu_custom_call.1} parent=11 // pred_check_branch
          %332 = sbr.rel (%p330) target = $region24
        $region23: #{tpu_custom_call.1} parent=11 // pred_region
          %s334 = ssub.s32 3072, 3072
          %335 = vsyncadd [#allocation6], %s334
          %s336 = sshll.u32 [#allocation5], 4
          %s337 = int_to_ptr.vmem [resolvable:$true] %s336
          %342 = dma.hbm_to_vmem [thread:$0]  %s3, 3072, %s337, [#allocation6], 192, 192, 12
        $region24: #{tpu_custom_call.1} parent=11 // pred_fallthru
          _
        // Predicated region
        $region25: #{tpu_custom_call.1} parent=11 // pred_check
          %p343 = pneg %p136
        $region26: #{tpu_custom_call.1} parent=11 // pred_check_branch
          %345 = sbr.rel (%p343) target = $region28
        $region27: #{tpu_custom_call.1} parent=11 // pred_region
          %s347 = ssub.s32 1024, 1024
          %348 = vsyncadd [#allocation6], %s347
          %s349 = sshll.u32 [#allocation7], 4
          %s350 = int_to_ptr.vmem [resolvable:$true] %s349
          %355 = dma.hbm_to_vmem [thread:$0]  %s4, 1024, %s350, [#allocation6], 64, 64, 4
        $region28: #{tpu_custom_call.1} parent=11 // pred_fallthru
          _
        // Predicated region
        $region29: #{tpu_custom_call.1} parent=11 // pred_check
          %p356 = pneg %p157
        $region30: #{tpu_custom_call.1} parent=11 // pred_check_branch
          %358 = sbr.rel (%p356) target = $region32
        $region31: #{tpu_custom_call.1} parent=11 // pred_region
          _
        $region32: #{tpu_custom_call.1} parent=11 // pred_fallthru
          _
        // Predicated region
        $region33: #{tpu_custom_call.1} parent=11 // pred_check
          %p359 = pneg %p178
        $region34: #{tpu_custom_call.1} parent=11 // pred_check_branch
          %361 = sbr.rel (%p359) target = $region36
        $region35: #{tpu_custom_call.1} parent=11 // pred_region
          _
        $region36: #{tpu_custom_call.1} parent=11 // pred_fallthru
          _
        // Predicated region
        $region37: #{tpu_custom_call.1} parent=11 // pred_check
          %p362 = pneg %p199
        $region38: #{tpu_custom_call.1} parent=11 // pred_check_branch
          %364 = sbr.rel (%p362) target = $region40
        $region39: #{tpu_custom_call.1} parent=11 // pred_region
          _
        $region40: #{tpu_custom_call.1} parent=11 // pred_fallthru
          _
        // Predicated region
        $region41: #{tpu_custom_call.1} parent=11 // pred_check
          %p365 = pneg %p220
        $region42: #{tpu_custom_call.1} parent=11 // pred_check_branch
          %367 = sbr.rel (%p365) target = $region44
        $region43: #{tpu_custom_call.1} parent=11 // pred_region
          %s369 = ssub.s32 4096, 4096
          %370 = vsyncadd [#allocation9], %s369
          %s371 = sshll.u32 [#allocation8], 4
          %s372 = int_to_ptr.vmem [resolvable:$true] %s371
          %377 = dma.hbm_to_vmem [thread:$0]  %s8, 4096, %s372, [#allocation9], 256, 256, 16
        $region44: #{tpu_custom_call.1} parent=11 // pred_fallthru
          _
        // Predicated region
        $region45: #{tpu_custom_call.1} parent=11 // pred_check
          %p378 = pneg %p241
        $region46: #{tpu_custom_call.1} parent=11 // pred_check_branch
          %380 = sbr.rel (%p378) target = $region48
        $region47: #{tpu_custom_call.1} parent=11 // pred_region
          _
        $region48: #{tpu_custom_call.1} parent=11 // pred_fallthru
          _
        // Predicated region
        $region49: #{tpu_custom_call.1} parent=11 // pred_check
          %p381 = pneg %p262
        $region50: #{tpu_custom_call.1} parent=11 // pred_check_branch
          %383 = sbr.rel (%p381) target = $region52
        $region51: #{tpu_custom_call.1} parent=11 // pred_region
          %s385 = ssub.s32 4096, 4096
          %386 = vsyncadd [#allocation9], %s385
          %s387 = sshll.u32 [#allocation10], 4
          %s388 = int_to_ptr.vmem [resolvable:$true] %s387
          %393 = dma.hbm_to_vmem [thread:$0]  %s10, 4096, %s388, [#allocation9], 64, 64, 4
        $region52: #{tpu_custom_call.1} parent=11 // pred_fallthru
          _
        // Predicated region
        $region53: #{tpu_custom_call.1} parent=11 // pred_check
          %p394 = pneg %p283
        $region54: #{tpu_custom_call.1} parent=11 // pred_check_branch
          %396 = sbr.rel (%p394) target = $region56
        $region55: #{tpu_custom_call.1} parent=11 // pred_region
          _
        $region56: #{tpu_custom_call.1} parent=11 // pred_fallthru
          _
      $region12: #{tpu_custom_call.1} parent=5 // pred_fallthru
        _
      %p397 = scmp.lt.s32.totalorder %s26, 2
      // Predicated region
      $region57: #{tpu_custom_call.1} parent=5 // pred_check
        %p398 = pneg %p397
      $region58: #{tpu_custom_call.1} parent=5 // pred_check_branch
        %400 = sbr.rel (%p398) target = $region60
      $region59: #{tpu_custom_call.1} parent=5 // pred_region
        // Predicated region
        $region61: #{tpu_custom_call.1} parent=59 // pred_check
          %p401 = pneg %p46
        $region62: #{tpu_custom_call.1} parent=59 // pred_check_branch
          %403 = sbr.rel (%p401) target = $region64
        $region63: #{tpu_custom_call.1} parent=59 // pred_region
          %s404 = sand.u32 %s36, 1
          %s405 = scalar_lea.sflag [#allocation3], %s404
          %s406 = sand.u32 %s36, 1
          %s407 = smul.addr %s406, 8
          %s408 = scalar_lea.vmem [#allocation2], %s407
          %s410 = ssub.s32 128, 128
          %411 = vsyncadd %s405, %s410
          %s412 = smul.addr %s26, 128
          %s413 = scalar_lea.hbm %s0, %s412
          %s415 = sshll.u32 %s408, 4
          %s416 = int_to_ptr.vmem [resolvable:$true] %s415
          %418 = dma.hbm_to_vmem [thread:$0]  %s413, 128, %s416, %s405
        $region64: #{tpu_custom_call.1} parent=59 // pred_fallthru
          _
      $region60: #{tpu_custom_call.1} parent=5 // pred_fallthru
        _
      %p419 = scmp.le.s32.totalorder 1, %s26
      %p420 = scmp.lt.s32.totalorder %s26, 3
      %p421 = pnand %p419, %p420
      %p422 = pneg %p421
      // Predicated region
      $region65: #{tpu_custom_call.1} parent=5 // pred_check
        _
      $region66: #{tpu_custom_call.1} parent=5 // pred_check_branch
        %424 = sbr.rel (%p421) target = $region68
      $region67: #{tpu_custom_call.1} parent=5 // pred_region
        %s425 = ssub.s32 %s26, 1
        %s426 = sand.u32 %s39, 1
        %s427 = scalar_lea.sflag [#allocation3], %s426
        %s428 = sand.u32 %s39, 1
        %s429 = smul.addr %s428, 8
        %s430 = scalar_lea.vmem [#allocation2], %s429
        // Predicated region
        $region69: #{tpu_custom_call.1} parent=67 // pred_check
          %p431 = pneg %p52
        $region70: #{tpu_custom_call.1} parent=67 // pred_check_branch
          %433 = sbr.rel (%p431) target = $region72
        $region71: #{tpu_custom_call.1} parent=67 // pred_region
          %434 = dma.done %s427, 128
        $region72: #{tpu_custom_call.1} parent=67 // pred_fallthru
          _
        // Predicated region
        $region73: #{tpu_custom_call.1} parent=67 // pred_check
          %p435 = pneg %p115
        $region74: #{tpu_custom_call.1} parent=67 // pred_check_branch
          %437 = sbr.rel (%p435) target = $region76
        $region75: #{tpu_custom_call.1} parent=67 // pred_region
          %438 = dma.done [#allocation6], 3072
        $region76: #{tpu_custom_call.1} parent=67 // pred_fallthru
          _
        // Predicated region
        $region77: #{tpu_custom_call.1} parent=67 // pred_check
          %p439 = pneg %p136
        $region78: #{tpu_custom_call.1} parent=67 // pred_check_branch
          %441 = sbr.rel (%p439) target = $region80
        $region79: #{tpu_custom_call.1} parent=67 // pred_region
          %442 = dma.done [#allocation6], 1024
        $region80: #{tpu_custom_call.1} parent=67 // pred_fallthru
          _
        // Predicated region
        $region81: #{tpu_custom_call.1} parent=67 // pred_check
          %p443 = pneg %p220
        $region82: #{tpu_custom_call.1} parent=67 // pred_check_branch
          %445 = sbr.rel (%p443) target = $region84
        $region83: #{tpu_custom_call.1} parent=67 // pred_region
          %446 = dma.done [#allocation9], 4096
        $region84: #{tpu_custom_call.1} parent=67 // pred_fallthru
          _
        // Predicated region
        $region85: #{tpu_custom_call.1} parent=67 // pred_check
          %p447 = pneg %p262
        $region86: #{tpu_custom_call.1} parent=67 // pred_check_branch
          %449 = sbr.rel (%p447) target = $region88
        $region87: #{tpu_custom_call.1} parent=67 // pred_region
          %450 = dma.done [#allocation9], 4096
        $region88: #{tpu_custom_call.1} parent=67 // pred_fallthru
          _
        %s451 = sand.u32 %s39, 1
        %s452 = scalar_lea.sflag [#allocation3], %s451
        %s453 = sand.u32 %s39, 1
        %s454 = smul.addr %s453, 8
        %s455 = scalar_lea.vmem [#allocation2], %s454
        %p456 = pneg %p52
        %p457 = pneg %p49
        %p458 = pneg %p73
        %p459 = pneg %p70
        %p460 = pneg %p94
        %p461 = pneg %p91
        %p462 = pneg %p115
        %p463 = pneg %p112
        %p464 = pneg %p136
        %p465 = pneg %p133
        %p466 = pneg %p157
        %p467 = pneg %p154
        %p468 = pneg %p178
        %p469 = pneg %p175
        %p470 = pneg %p199
        %p471 = pneg %p196
        %p472 = pneg %p220
        %p473 = pneg %p217
        %p474 = pneg %p241
        %p475 = pneg %p238
        %p476 = pneg %p262
        %p477 = pneg %p259
        %p478 = pneg %p283
        %p479 = pneg %p280
        %p480 = pneg %p309
        %p481 = pneg %p306
        %s482 = sand.u32 %s296, 1
        %s483 = scalar_lea.sflag [#allocation4], %s482
        %s484 = sand.u32 %s296, 1
        %s485 = smul.addr %s484, 8
        %s486 = scalar_lea.vmem [#allocation11], %s485
        %v488 = vld [vmem:[%s430] sm:$0xff]
        %v489 = vld [vmem:[%s1] sm:$0x1]
        %v490 = vld [vmem:[%s2] sm:$0x1]
        %491 = vadd.xlane.f32.xlu0 %v488
        %v492 = vpop.xlane.xlu0 %491
        %v493 = vrcp.pop 128.0
        %v494 = vmul.f32 %v492, %v493
        %v495 = vsub.f32 %v488, %v494
        %v496 = vmul.f32 %v495, %v495
        %497 = vadd.xlane.f32.xlu0 %v496
        %v498 = vpop.xlane.xlu0 %497
        %v499 = vmul.f32 %v498, %v493
        %v500 = vadd.f32 %v499, 1e-05
        %v501 = vrsqrt.pop %v500
        %v502 = vmul.f32 %v495, %v501
        %v504 = vlaneseq
        %v505 = vshrl.u32 %v504, 7
        %v506 = vsub.s32 0, %v505
        %v507 = vrot.slane %v489, %v506
        %v509 = vmul.f32 %v502, %v507
        %v511 = vlaneseq
        %v512 = vshrl.u32 %v511, 7
        %v513 = vsub.s32 0, %v512
        %v514 = vrot.slane %v490, %v513
        %v516 = vadd.f32 %v509, %v514
        %v517 = vpack.c.bf16 %v516, %v516
        %v518 = vld [vmem:[#allocation5] sm:$0xff]
        %v519 = vld [vmem:[#allocation5 + $0x8] sm:$0xf]
        %v520 = vld [vmem:[#allocation5 + $0xc] sm:$0xff]
        %v521 = vld [vmem:[#allocation5 + $0x14] sm:$0xf]
        %v522 = vld [vmem:[#allocation5 + $0x18] sm:$0xff]
        %v523 = vld [vmem:[#allocation5 + $0x20] sm:$0xf]
        %v524 = vld [vmem:[#allocation5 + $0x24] sm:$0xff]
        %v525 = vld [vmem:[#allocation5 + $0x2c] sm:$0xf]
        %v526 = vld [vmem:[#allocation5 + $0x30] sm:$0xff]
        %v527 = vld [vmem:[#allocation5 + $0x38] sm:$0xf]
        %v528 = vld [vmem:[#allocation5 + $0x3c] sm:$0xff]
        %v529 = vld [vmem:[#allocation5 + $0x44] sm:$0xf]
        %v530 = vld [vmem:[#allocation5 + $0x48] sm:$0xff]
        %v531 = vld [vmem:[#allocation5 + $0x50] sm:$0xf]
        %v532 = vld [vmem:[#allocation5 + $0x54] sm:$0xff]
        %v533 = vld [vmem:[#allocation5 + $0x5c] sm:$0xf]
        %v534 = vld [vmem:[#allocation5 + $0x60] sm:$0xff]
        %v535 = vld [vmem:[#allocation5 + $0x68] sm:$0xf]
        %v536 = vld [vmem:[#allocation5 + $0x6c] sm:$0xff]
        %v537 = vld [vmem:[#allocation5 + $0x74] sm:$0xf]
        %v538 = vld [vmem:[#allocation5 + $0x78] sm:$0xff]
        %v539 = vld [vmem:[#allocation5 + $0x80] sm:$0xf]
        %v540 = vld [vmem:[#allocation5 + $0x84] sm:$0xff]
        %v541 = vld [vmem:[#allocation5 + $0x8c] sm:$0xf]
        %v542 = vld [vmem:[#allocation5 + $0x90] sm:$0xff]
        %v543 = vld [vmem:[#allocation5 + $0x98] sm:$0xf]
        %v544 = vld [vmem:[#allocation5 + $0x9c] sm:$0xff]
        %v545 = vld [vmem:[#allocation5 + $0xa4] sm:$0xf]
        %v546 = vld [vmem:[#allocation5 + $0xa8] sm:$0xff]
        %v547 = vld [vmem:[#allocation5 + $0xb0] sm:$0xf]
        %v548 = vld [vmem:[#allocation5 + $0xb4] sm:$0xff]
        %v549 = vld [vmem:[#allocation5 + $0xbc] sm:$0xf]
        %v582 = vunpack.c.l.b16 %v518
        %v583 = vunpack.c.h.b16 %v518
        %v584 = vunpack.c.l.b16 %v519
        %v585 = vunpack.c.l.b16 %v520
        %v586 = vunpack.c.h.b16 %v520
        %v587 = vunpack.c.l.b16 %v521
        %v588 = vunpack.c.l.b16 %v522
        %v589 = vunpack.c.h.b16 %v522
        %v590 = vunpack.c.l.b16 %v523
        %v591 = vunpack.c.l.b16 %v524
        %v592 = vunpack.c.h.b16 %v524
        %v593 = vunpack.c.l.b16 %v525
        %v594 = vunpack.c.l.b16 %v526
        %v595 = vunpack.c.h.b16 %v526
        %v596 = vunpack.c.l.b16 %v527
        %v597 = vunpack.c.l.b16 %v528
        %v598 = vunpack.c.h.b16 %v528
        %v599 = vunpack.c.l.b16 %v529
        %v600 = vunpack.c.l.b16 %v530
        %v601 = vunpack.c.h.b16 %v530
        %v602 = vunpack.c.l.b16 %v531
        %v603 = vunpack.c.l.b16 %v532
        %v604 = vunpack.c.h.b16 %v532
        %v605 = vunpack.c.l.b16 %v533
        %v606 = vunpack.c.l.b16 %v534
        %v607 = vunpack.c.h.b16 %v534
        %v608 = vunpack.c.l.b16 %v535
        %v609 = vunpack.c.l.b16 %v536
        %v610 = vunpack.c.h.b16 %v536
        %v611 = vunpack.c.l.b16 %v537
        %v612 = vunpack.c.l.b16 %v538
        %v613 = vunpack.c.h.b16 %v538
        %v614 = vunpack.c.l.b16 %v539
        %v615 = vunpack.c.l.b16 %v540
        %v616 = vunpack.c.h.b16 %v540
        %v617 = vunpack.c.l.b16 %v541
        %v618 = vunpack.c.l.b16 %v542
        %v619 = vunpack.c.h.b16 %v542
        %v620 = vunpack.c.l.b16 %v543
        %v621 = vunpack.c.l.b16 %v544
        %v622 = vunpack.c.h.b16 %v544
        %v623 = vunpack.c.l.b16 %v545
        %v624 = vunpack.c.l.b16 %v546
        %v625 = vunpack.c.h.b16 %v546
        %v626 = vunpack.c.l.b16 %v547
        %v627 = vunpack.c.l.b16 %v548
        %v628 = vunpack.c.h.b16 %v548
        %v629 = vunpack.c.l.b16 %v549
        %v630 = vpack.c.b16 %v585, %v582
        %v631 = vpack.c.b16 %v586, %v583
        %v632 = vpack.c.b16 %v587, %v584
        %v633 = vpack.c.b16 %v591, %v588
        %v634 = vpack.c.b16 %v592, %v589
        %v635 = vpack.c.b16 %v593, %v590
        %v636 = vpack.c.b16 %v597, %v594
        %v637 = vpack.c.b16 %v598, %v595
        %v638 = vpack.c.b16 %v599, %v596
        %v639 = vpack.c.b16 %v603, %v600
        %v640 = vpack.c.b16 %v604, %v601
        %v641 = vpack.c.b16 %v605, %v602
        %v642 = vpack.c.b16 %v609, %v606
        %v643 = vpack.c.b16 %v610, %v607
        %v644 = vpack.c.b16 %v611, %v608
        %v645 = vpack.c.b16 %v615, %v612
        %v646 = vpack.c.b16 %v616, %v613
        %v647 = vpack.c.b16 %v617, %v614
        %v648 = vpack.c.b16 %v621, %v618
        %v649 = vpack.c.b16 %v622, %v619
        %v650 = vpack.c.b16 %v623, %v620
        %v651 = vpack.c.b16 %v627, %v624
        %v652 = vpack.c.b16 %v628, %v625
        %v653 = vpack.c.b16 %v629, %v626
        %678 = vmatprep.subr.bf16.mxu0 %v652
        %679 = vmatpush1.bf16.msra.mxu0 %v651
        %680 = vmatprep.subr.bf16.mxu0 %v649
        %681 = vmatpush1.bf16.msra.mxu0 %v648
        %682 = vmatprep.subr.bf16.mxu0 %v646
        %683 = vmatpush1.bf16.msra.mxu0 %v645
        %684 = vmatprep.subr.bf16.mxu0 %v643
        %685 = vmatpush1.bf16.msra.mxu0 %v642
        %686 = vmatprep.subr.bf16.mxu0 %v640
        %687 = vmatpush1.bf16.msra.mxu0 %v639
        %688 = vmatprep.subr.bf16.mxu0 %v637
        %689 = vmatpush1.bf16.msra.mxu0 %v636
        %690 = vmatprep.subr.bf16.mxu0 %v634
        %691 = vmatpush1.bf16.msra.mxu0 %v633
        %692 = vmatprep.subr.bf16.mxu0 %v631
        %693 = vmatpush1.bf16.msra.mxu0 %v630
        %694 = vmatprep.subr.bf16.mxu0 0
        %695 = vmatpush2.bf16.msra.mxu0 0
        %696 = vmatprep.subr.bf16.mxu0 0
        %697 = vmatpush2.bf16.msra.mxu0 0
        %698 = vmatprep.subr.bf16.mxu0 0
        %699 = vmatpush2.bf16.msra.mxu0 0
        %700 = vmatprep.subr.bf16.mxu0 0
        %701 = vmatpush2.bf16.msra.mxu0 0
        %702 = vmatprep.subr.bf16.mxu0 0
        %703 = vmatpush2.bf16.msra.mxu0 0
        %704 = vmatprep.subr.bf16.mxu0 0
        %705 = vmatpush2.bf16.msra.mxu0 0
        %706 = vmatprep.subr.bf16.mxu0 0
        %707 = vmatpush2.bf16.msra.mxu0 0
        %708 = vmatprep.subr.bf16.mxu0 0
        %709 = vmatpush2.bf16.msra.mxu0 0
        %710 = vmatprep.mubr.bf16.mxu0 0
        %711 = vmatmul.mubr.bf16.gmra.mxu0 %v517
        %v712 = vpop.f32.mrf.mxu0
        %v713 = vadd.f32 0.0, %v712
        %v714 = vpop.f32.mrf.mxu0
        %v715 = vadd.f32 0.0, %v714
        %v716 = vpop.f32.mrf.mxu0
        %v717 = vpop.f32.mrf.mxu0
        %718 = vdwg.mxu0
        %719 = vmatprep.subr.bf16.mxu0 0
        %720 = vmatpush1.bf16.msra.mxu0 %v653
        %721 = vmatprep.subr.bf16.mxu0 0
        %722 = vmatpush1.bf16.msra.mxu0 %v650
        %723 = vmatprep.subr.bf16.mxu0 0
        %724 = vmatpush1.bf16.msra.mxu0 %v647
        %725 = vmatprep.subr.bf16.mxu0 0
        %726 = vmatpush1.bf16.msra.mxu0 %v644
        %727 = vmatprep.subr.bf16.mxu0 0
        %728 = vmatpush1.bf16.msra.mxu0 %v641
        %729 = vmatprep.subr.bf16.mxu0 0
        %730 = vmatpush1.bf16.msra.mxu0 %v638
        %731 = vmatprep.subr.bf16.mxu0 0
        %732 = vmatpush1.bf16.msra.mxu0 %v635
        %733 = vmatprep.subr.bf16.mxu0 0
        %734 = vmatpush1.bf16.msra.mxu0 %v632
        %735 = vmatprep.subr.bf16.mxu0 0
        %736 = vmatpush2.bf16.msra.mxu0 0
        %737 = vmatprep.subr.bf16.mxu0 0
        %738 = vmatpush2.bf16.msra.mxu0 0
        %739 = vmatprep.subr.bf16.mxu0 0
        %740 = vmatpush2.bf16.msra.mxu0 0
        %741 = vmatprep.subr.bf16.mxu0 0
        %742 = vmatpush2.bf16.msra.mxu0 0
        %743 = vmatprep.subr.bf16.mxu0 0
        %744 = vmatpush2.bf16.msra.mxu0 0
        %745 = vmatprep.subr.bf16.mxu0 0
        %746 = vmatpush2.bf16.msra.mxu0 0
        %747 = vmatprep.subr.bf16.mxu0 0
        %748 = vmatpush2.bf16.msra.mxu0 0
        %749 = vmatprep.subr.bf16.mxu0 0
        %750 = vmatpush2.bf16.msra.mxu0 0
        %751 = vmatprep.mubr.bf16.mxu0 0
        %752 = vmatmul.mubr.bf16.gmra.mxu0 %v517
        %v753 = vpop.f32.mrf.mxu0
        %v754 = vadd.f32 0.0, %v753
        %v755 = vpop.f32.mrf.mxu0
        %v756 = vpop.f32.mrf.mxu0
        %v757 = vpop.f32.mrf.mxu0
        %758 = vdwg.mxu0
        %v759 = vmul.f32 %v713, 0.17677669
        %v760 = vpack.c.bf16 %v759, %v759
        %v761 = vpack.c.bf16 %v715, %v715
        %v762 = vpack.c.bf16 %v754, %v754
        %764 = vrot.lane.b32.xlu0 %v760, 96
        %v765 = vpop.permute.xlu0 %764
        %766 = vrot.lane.b32.xlu0 %v760, 64
        %v767 = vpop.permute.xlu0 %766
        %768 = vrot.lane.b32.xlu0 %v760, 32
        %v769 = vpop.permute.xlu0 %768
        %v771 = vunpack.c.l.s4 1983009808
        %v772 = vunpack.c.0.s8 %v771
        %v773 = vlaneseq
        %v774 = vshrl.u32 %v773, 7
        %v775 = vsub.s32 %v772, %v774
        %v776 = vrot.slane %v760, %v775
        %v779 = vunpack.c.l.s4 1983009808
        %v780 = vunpack.c.0.s8 %v779
        %v781 = vlaneseq
        %v782 = vshrl.u32 %v781, 7
        %v783 = vsub.s32 %v780, %v782
        %v784 = vrot.slane %v767, %v783
        %v785 = vcombine.low %v776, %v784
        %v786 = vcombine.high %v776, %v784
        %v788 = vunpack.c.l.s4 1934713408
        %v789 = vunpack.c.0.s8 %v788
        %v790 = vlaneseq
        %v791 = vshrl.u32 %v790, 7
        %v792 = vsub.s32 %v789, %v791
        %v793 = vrot.slane %v785, %v792
        %v795 = vunpack.c.l.s4 1934713408
        %v796 = vunpack.c.0.s8 %v795
        %v797 = vlaneseq
        %v798 = vshrl.u32 %v797, 7
        %v799 = vsub.s32 %v796, %v798
        %v800 = vrot.slane %v786, %v799
        %v801 = vcombine.high %v793, 0
        %v802 = vcombine.high %v800, 0
        %v805 = vunpack.c.l.s4 1983009808
        %v806 = vunpack.c.0.s8 %v805
        %v807 = vlaneseq
        %v808 = vshrl.u32 %v807, 7
        %v809 = vsub.s32 %v806, %v808
        %v810 = vrot.slane %v765, %v809
        %v813 = vunpack.c.l.s4 1983009808
        %v814 = vunpack.c.0.s8 %v813
        %v815 = vlaneseq
        %v816 = vshrl.u32 %v815, 7
        %v817 = vsub.s32 %v814, %v816
        %v818 = vrot.slane %v769, %v817
        %v819 = vcombine.low %v810, %v818
        %v820 = vcombine.high %v810, %v818
        %v822 = vunpack.c.l.s4 1934713408
        %v823 = vunpack.c.0.s8 %v822
        %v824 = vlaneseq
        %v825 = vshrl.u32 %v824, 7
        %v826 = vsub.s32 %v823, %v825
        %v827 = vrot.slane %v819, %v826
        %v829 = vunpack.c.l.s4 1934713408
        %v830 = vunpack.c.0.s8 %v829
        %v831 = vlaneseq
        %v832 = vshrl.u32 %v831, 7
        %v833 = vsub.s32 %v830, %v832
        %v834 = vrot.slane %v820, %v833
        %v835 = vcombine.high %v827, 0
        %v836 = vcombine.high %v834, 0
        %v839 = vpack.i.b16 %v827, %v793
        %v841 = vshrl.u32 %v793, 16
        %v842 = vshrl.u32 %v827, 16
        %v843 = vpack.i.b16 %v842, %v841
        %v847 = vpack.i.b16 %v835, %v801
        %v849 = vshrl.u32 %v801, 16
        %v850 = vshrl.u32 %v835, 16
        %v851 = vpack.i.b16 %v850, %v849
        %v855 = vpack.i.b16 %v834, %v800
        %v857 = vshrl.u32 %v800, 16
        %v858 = vshrl.u32 %v834, 16
        %v859 = vpack.i.b16 %v858, %v857
        %v863 = vpack.i.b16 %v836, %v802
        %v865 = vshrl.u32 %v802, 16
        %v866 = vshrl.u32 %v836, 16
        %v867 = vpack.i.b16 %v866, %v865
        %v869 = vcombine.low %v839, %v855
        %v871 = vunpack.c.l.s4 1983009808
        %v872 = vunpack.c.0.s8 %v871
        %v873 = vlaneseq
        %v874 = vshrl.u32 %v873, 7
        %v875 = vsub.s32 %v872, %v874
        %v876 = vrot.slane %v869, %v875
        %v877 = vcombine.low %v847, %v863
        %v879 = vunpack.c.l.s4 1983009808
        %v880 = vunpack.c.0.s8 %v879
        %v881 = vlaneseq
        %v882 = vshrl.u32 %v881, 7
        %v883 = vsub.s32 %v880, %v882
        %v884 = vrot.slane %v877, %v883
        %v885 = vcombine.low %v876, %v884
        %v887 = vunpack.c.l.s4 1934713408
        %v888 = vunpack.c.0.s8 %v887
        %v889 = vlaneseq
        %v890 = vshrl.u32 %v889, 7
        %v891 = vsub.s32 %v888, %v890
        %v892 = vrot.slane %v885, %v891
        %v893 = vcombine.high %v892, 0
        %v894 = vcombine.low %v843, %v859
        %v896 = vunpack.c.l.s4 1983009808
        %v897 = vunpack.c.0.s8 %v896
        %v898 = vlaneseq
        %v899 = vshrl.u32 %v898, 7
        %v900 = vsub.s32 %v897, %v899
        %v901 = vrot.slane %v894, %v900
        %v902 = vcombine.low %v851, %v867
        %v904 = vunpack.c.l.s4 1983009808
        %v905 = vunpack.c.0.s8 %v904
        %v906 = vlaneseq
        %v907 = vshrl.u32 %v906, 7
        %v908 = vsub.s32 %v905, %v907
        %v909 = vrot.slane %v902, %v908
        %v910 = vcombine.low %v901, %v909
        %v912 = vunpack.c.l.s4 1934713408
        %v913 = vunpack.c.0.s8 %v912
        %v914 = vlaneseq
        %v915 = vshrl.u32 %v914, 7
        %v916 = vsub.s32 %v913, %v915
        %v917 = vrot.slane %v910, %v916
        %v918 = vcombine.high %v917, 0
        %v921 = vpack.i.b16 %v917, %v892
        %v922 = vshrl.u32 %v892, 16
        %v923 = vshrl.u32 %v917, 16
        %v924 = vpack.i.b16 %v923, %v922
        %v927 = vpack.i.b16 %v918, %v893
        %v928 = vshrl.u32 %v893, 16
        %v929 = vshrl.u32 %v918, 16
        %v930 = vpack.i.b16 %v929, %v928
        %932 = vrot.lane.b32.xlu0 %v761, 96
        %v933 = vpop.permute.xlu0 %932
        %934 = vrot.lane.b32.xlu0 %v761, 64
        %v935 = vpop.permute.xlu0 %934
        %936 = vrot.lane.b32.xlu0 %v761, 32
        %v937 = vpop.permute.xlu0 %936
        %v939 = vunpack.c.l.s4 1983009808
        %v940 = vunpack.c.0.s8 %v939
        %v941 = vlaneseq
        %v942 = vshrl.u32 %v941, 7
        %v943 = vsub.s32 %v940, %v942
        %v944 = vrot.slane %v761, %v943
        %v947 = vunpack.c.l.s4 1983009808
        %v948 = vunpack.c.0.s8 %v947
        %v949 = vlaneseq
        %v950 = vshrl.u32 %v949, 7
        %v951 = vsub.s32 %v948, %v950
        %v952 = vrot.slane %v935, %v951
        %v953 = vcombine.low %v944, %v952
        %v954 = vcombine.high %v944, %v952
        %v956 = vunpack.c.l.s4 1934713408
        %v957 = vunpack.c.0.s8 %v956
        %v958 = vlaneseq
        %v959 = vshrl.u32 %v958, 7
        %v960 = vsub.s32 %v957, %v959
        %v961 = vrot.slane %v953, %v960
        %v963 = vunpack.c.l.s4 1934713408
        %v964 = vunpack.c.0.s8 %v963
        %v965 = vlaneseq
        %v966 = vshrl.u32 %v965, 7
        %v967 = vsub.s32 %v964, %v966
        %v968 = vrot.slane %v954, %v967
        %v969 = vcombine.high %v961, 0
        %v970 = vcombine.high %v968, 0
        %v973 = vunpack.c.l.s4 1983009808
        %v974 = vunpack.c.0.s8 %v973
        %v975 = vlaneseq
        %v976 = vshrl.u32 %v975, 7
        %v977 = vsub.s32 %v974, %v976
        %v978 = vrot.slane %v933, %v977
        %v981 = vunpack.c.l.s4 1983009808
        %v982 = vunpack.c.0.s8 %v981
        %v983 = vlaneseq
        %v984 = vshrl.u32 %v983, 7
        %v985 = vsub.s32 %v982, %v984
        %v986 = vrot.slane %v937, %v985
        %v987 = vcombine.low %v978, %v986
        %v988 = vcombine.high %v978, %v986
        %v990 = vunpack.c.l.s4 1934713408
        %v991 = vunpack.c.0.s8 %v990
        %v992 = vlaneseq
        %v993 = vshrl.u32 %v992, 7
        %v994 = vsub.s32 %v991, %v993
        %v995 = vrot.slane %v987, %v994
        %v997 = vunpack.c.l.s4 1934713408
        %v998 = vunpack.c.0.s8 %v997
        %v999 = vlaneseq
        %v1000 = vshrl.u32 %v999, 7
        %v1001 = vsub.s32 %v998, %v1000
        %v1002 = vrot.slane %v988, %v1001
        %v1003 = vcombine.high %v995, 0
        %v1004 = vcombine.high %v1002, 0
        %v1007 = vpack.i.b16 %v995, %v961
        %v1009 = vshrl.u32 %v961, 16
        %v1010 = vshrl.u32 %v995, 16
        %v1011 = vpack.i.b16 %v1010, %v1009
        %v1015 = vpack.i.b16 %v1003, %v969
        %v1017 = vshrl.u32 %v969, 16
        %v1018 = vshrl.u32 %v1003, 16
        %v1019 = vpack.i.b16 %v1018, %v1017
        %v1023 = vpack.i.b16 %v1002, %v968
        %v1025 = vshrl.u32 %v968, 16
        %v1026 = vshrl.u32 %v1002, 16
        %v1027 = vpack.i.b16 %v1026, %v1025
        %v1031 = vpack.i.b16 %v1004, %v970
        %v1033 = vshrl.u32 %v970, 16
        %v1034 = vshrl.u32 %v1004, 16
        %v1035 = vpack.i.b16 %v1034, %v1033
        %v1037 = vcombine.low %v1007, %v1023
        %v1039 = vunpack.c.l.s4 1983009808
        %v1040 = vunpack.c.0.s8 %v1039
        %v1041 = vlaneseq
        %v1042 = vshrl.u32 %v1041, 7
        %v1043 = vsub.s32 %v1040, %v1042
        %v1044 = vrot.slane %v1037, %v1043
        %v1045 = vcombine.low %v1015, %v1031
        %v1047 = vunpack.c.l.s4 1983009808
        %v1048 = vunpack.c.0.s8 %v1047
        %v1049 = vlaneseq
        %v1050 = vshrl.u32 %v1049, 7
        %v1051 = vsub.s32 %v1048, %v1050
        %v1052 = vrot.slane %v1045, %v1051
        %v1053 = vcombine.low %v1044, %v1052
        %v1055 = vunpack.c.l.s4 1934713408
        %v1056 = vunpack.c.0.s8 %v1055
        %v1057 = vlaneseq
        %v1058 = vshrl.u32 %v1057, 7
        %v1059 = vsub.s32 %v1056, %v1058
        %v1060 = vrot.slane %v1053, %v1059
        %v1061 = vcombine.high %v1060, 0
        %v1062 = vcombine.low %v1011, %v1027
        %v1064 = vunpack.c.l.s4 1983009808
        %v1065 = vunpack.c.0.s8 %v1064
        %v1066 = vlaneseq
        %v1067 = vshrl.u32 %v1066, 7
        %v1068 = vsub.s32 %v1065, %v1067
        %v1069 = vrot.slane %v1062, %v1068
        %v1070 = vcombine.low %v1019, %v1035
        %v1072 = vunpack.c.l.s4 1983009808
        %v1073 = vunpack.c.0.s8 %v1072
        %v1074 = vlaneseq
        %v1075 = vshrl.u32 %v1074, 7
        %v1076 = vsub.s32 %v1073, %v1075
        %v1077 = vrot.slane %v1070, %v1076
        %v1078 = vcombine.low %v1069, %v1077
        %v1080 = vunpack.c.l.s4 1934713408
        %v1081 = vunpack.c.0.s8 %v1080
        %v1082 = vlaneseq
        %v1083 = vshrl.u32 %v1082, 7
        %v1084 = vsub.s32 %v1081, %v1083
        %v1085 = vrot.slane %v1078, %v1084
        %v1086 = vcombine.high %v1085, 0
        %v1089 = vpack.i.b16 %v1085, %v1060
        %v1090 = vshrl.u32 %v1060, 16
        %v1091 = vshrl.u32 %v1085, 16
        %v1092 = vpack.i.b16 %v1091, %v1090
        %v1095 = vpack.i.b16 %v1086, %v1061
        %v1096 = vshrl.u32 %v1061, 16
        %v1097 = vshrl.u32 %v1086, 16
        %v1098 = vpack.i.b16 %v1097, %v1096
        %1100 = vrot.lane.b32.xlu0 %v762, 96
        %v1101 = vpop.permute.xlu0 %1100
        %1102 = vrot.lane.b32.xlu0 %v762, 64
        %v1103 = vpop.permute.xlu0 %1102
        %1104 = vrot.lane.b32.xlu0 %v762, 32
        %v1105 = vpop.permute.xlu0 %1104
        %v1107 = vunpack.c.l.s4 1983009808
        %v1108 = vunpack.c.0.s8 %v1107
        %v1109 = vlaneseq
        %v1110 = vshrl.u32 %v1109, 7
        %v1111 = vsub.s32 %v1108, %v1110
        %v1112 = vrot.slane %v762, %v1111
        %v1115 = vunpack.c.l.s4 1983009808
        %v1116 = vunpack.c.0.s8 %v1115
        %v1117 = vlaneseq
        %v1118 = vshrl.u32 %v1117, 7
        %v1119 = vsub.s32 %v1116, %v1118
        %v1120 = vrot.slane %v1103, %v1119
        %v1121 = vcombine.low %v1112, %v1120
        %v1122 = vcombine.high %v1112, %v1120
        %v1124 = vunpack.c.l.s4 1934713408
        %v1125 = vunpack.c.0.s8 %v1124
        %v1126 = vlaneseq
        %v1127 = vshrl.u32 %v1126, 7
        %v1128 = vsub.s32 %v1125, %v1127
        %v1129 = vrot.slane %v1121, %v1128
        %v1131 = vunpack.c.l.s4 1934713408
        %v1132 = vunpack.c.0.s8 %v1131
        %v1133 = vlaneseq
        %v1134 = vshrl.u32 %v1133, 7
        %v1135 = vsub.s32 %v1132, %v1134
        %v1136 = vrot.slane %v1122, %v1135
        %v1137 = vcombine.high %v1129, 0
        %v1138 = vcombine.high %v1136, 0
        %v1141 = vunpack.c.l.s4 1983009808
        %v1142 = vunpack.c.0.s8 %v1141
        %v1143 = vlaneseq
        %v1144 = vshrl.u32 %v1143, 7
        %v1145 = vsub.s32 %v1142, %v1144
        %v1146 = vrot.slane %v1101, %v1145
        %v1149 = vunpack.c.l.s4 1983009808
        %v1150 = vunpack.c.0.s8 %v1149
        %v1151 = vlaneseq
        %v1152 = vshrl.u32 %v1151, 7
        %v1153 = vsub.s32 %v1150, %v1152
        %v1154 = vrot.slane %v1105, %v1153
        %v1155 = vcombine.low %v1146, %v1154
        %v1156 = vcombine.high %v1146, %v1154
        %v1158 = vunpack.c.l.s4 1934713408
        %v1159 = vunpack.c.0.s8 %v1158
        %v1160 = vlaneseq
        %v1161 = vshrl.u32 %v1160, 7
        %v1162 = vsub.s32 %v1159, %v1161
        %v1163 = vrot.slane %v1155, %v1162
        %v1165 = vunpack.c.l.s4 1934713408
        %v1166 = vunpack.c.0.s8 %v1165
        %v1167 = vlaneseq
        %v1168 = vshrl.u32 %v1167, 7
        %v1169 = vsub.s32 %v1166, %v1168
        %v1170 = vrot.slane %v1156, %v1169
        %v1171 = vcombine.high %v1163, 0
        %v1172 = vcombine.high %v1170, 0
        %v1175 = vpack.i.b16 %v1163, %v1129
        %v1177 = vshrl.u32 %v1129, 16
        %v1178 = vshrl.u32 %v1163, 16
        %v1179 = vpack.i.b16 %v1178, %v1177
        %v1183 = vpack.i.b16 %v1171, %v1137
        %v1185 = vshrl.u32 %v1137, 16
        %v1186 = vshrl.u32 %v1171, 16
        %v1187 = vpack.i.b16 %v1186, %v1185
        %v1191 = vpack.i.b16 %v1170, %v1136
        %v1193 = vshrl.u32 %v1136, 16
        %v1194 = vshrl.u32 %v1170, 16
        %v1195 = vpack.i.b16 %v1194, %v1193
        %v1199 = vpack.i.b16 %v1172, %v1138
        %v1201 = vshrl.u32 %v1138, 16
        %v1202 = vshrl.u32 %v1172, 16
        %v1203 = vpack.i.b16 %v1202, %v1201
        %v1205 = vcombine.low %v1175, %v1191
        %v1207 = vunpack.c.l.s4 1983009808
        %v1208 = vunpack.c.0.s8 %v1207
        %v1209 = vlaneseq
        %v1210 = vshrl.u32 %v1209, 7
        %v1211 = vsub.s32 %v1208, %v1210
        %v1212 = vrot.slane %v1205, %v1211
        %v1213 = vcombine.low %v1183, %v1199
        %v1215 = vunpack.c.l.s4 1983009808
        %v1216 = vunpack.c.0.s8 %v1215
        %v1217 = vlaneseq
        %v1218 = vshrl.u32 %v1217, 7
        %v1219 = vsub.s32 %v1216, %v1218
        %v1220 = vrot.slane %v1213, %v1219
        %v1221 = vcombine.low %v1212, %v1220
        %v1223 = vunpack.c.l.s4 1934713408
        %v1224 = vunpack.c.0.s8 %v1223
        %v1225 = vlaneseq
        %v1226 = vshrl.u32 %v1225, 7
        %v1227 = vsub.s32 %v1224, %v1226
        %v1228 = vrot.slane %v1221, %v1227
        %v1229 = vcombine.high %v1228, 0
        %v1230 = vcombine.low %v1179, %v1195
        %v1232 = vunpack.c.l.s4 1983009808
        %v1233 = vunpack.c.0.s8 %v1232
        %v1234 = vlaneseq
        %v1235 = vshrl.u32 %v1234, 7
        %v1236 = vsub.s32 %v1233, %v1235
        %v1237 = vrot.slane %v1230, %v1236
        %v1238 = vcombine.low %v1187, %v1203
        %v1240 = vunpack.c.l.s4 1983009808
        %v1241 = vunpack.c.0.s8 %v1240
        %v1242 = vlaneseq
        %v1243 = vshrl.u32 %v1242, 7
        %v1244 = vsub.s32 %v1241, %v1243
        %v1245 = vrot.slane %v1238, %v1244
        %v1246 = vcombine.low %v1237, %v1245
        %v1248 = vunpack.c.l.s4 1934713408
        %v1249 = vunpack.c.0.s8 %v1248
        %v1250 = vlaneseq
        %v1251 = vshrl.u32 %v1250, 7
        %v1252 = vsub.s32 %v1249, %v1251
        %v1253 = vrot.slane %v1246, %v1252
        %v1254 = vcombine.high %v1253, 0
        %v1257 = vpack.i.b16 %v1253, %v1228
        %v1258 = vshrl.u32 %v1228, 16
        %v1259 = vshrl.u32 %v1253, 16
        %v1260 = vpack.i.b16 %v1259, %v1258
        %v1263 = vpack.i.b16 %v1254, %v1229
        %v1264 = vshrl.u32 %v1229, 16
        %v1265 = vshrl.u32 %v1254, 16
        %v1266 = vpack.i.b16 %v1265, %v1264
        %vm1267 = vcmask 261120
        %v1269 = vsel %vm1267, %v921, 0
        %v1272 = vsel %vm1267, %v1089, 0
        %1274 = vmatprep.subr.bf16.mxu0 0
        %1275 = vmatpush1.bf16.xpose.msra.mxu0 0
        %1276 = vmatprep.subr.bf16.mxu0 0
        %1277 = vmatpush1.bf16.xpose.msra.mxu0 0
        %1278 = vmatprep.subr.bf16.mxu0 0
        %1279 = vmatpush1.bf16.xpose.msra.mxu0 0
        %1280 = vmatprep.subr.bf16.mxu0 0
        %1281 = vmatpush1.bf16.xpose.msra.mxu0 0
        %1282 = vmatprep.subr.bf16.mxu0 0
        %1283 = vmatpush1.bf16.xpose.msra.mxu0 0
        %1284 = vmatprep.subr.bf16.mxu0 0
        %1285 = vmatpush1.bf16.xpose.msra.mxu0 0
        %1286 = vmatprep.subr.bf16.mxu0 0
        %1287 = vmatpush1.bf16.xpose.msra.mxu0 0
        %1288 = vmatprep.subr.bf16.mxu0 0
        %1289 = vmatpush1.bf16.xpose.msra.mxu0 %v1272
        %1290 = vmatprep.subr.bf16.mxu0 0
        %1291 = vmatpush2.bf16.xpose.msra.mxu0 0
        %1292 = vmatprep.subr.bf16.mxu0 0
        %1293 = vmatpush2.bf16.xpose.msra.mxu0 0
        %1294 = vmatprep.subr.bf16.mxu0 0
        %1295 = vmatpush2.bf16.xpose.msra.mxu0 0
        %1296 = vmatprep.subr.bf16.mxu0 0
        %1297 = vmatpush2.bf16.xpose.msra.mxu0 0
        %1298 = vmatprep.subr.bf16.mxu0 0
        %1299 = vmatpush2.bf16.xpose.msra.mxu0 0
        %1300 = vmatprep.subr.bf16.mxu0 0
        %1301 = vmatpush2.bf16.xpose.msra.mxu0 0
        %1302 = vmatprep.subr.bf16.mxu0 0
        %1303 = vmatpush2.bf16.xpose.msra.mxu0 0
        %1304 = vmatprep.subr.bf16.mxu0 0
        %1305 = vmatpush2.bf16.xpose.msra.mxu0 0
        %1306 = vmatprep.mubr.bf16.mxu0 0
        %1307 = vmatmul.mubr.bf16.gmra.mxu0 %v1269
        %v1308 = vpop.f32.mrf.mxu0
        %v1309 = vadd.f32 0.0, %v1308
        %v1310 = vpop.f32.mrf.mxu0
        %v1311 = vpop.f32.mrf.mxu0
        %v1312 = vpop.f32.mrf.mxu0
        %1313 = vdwg.mxu0
        %v1315 = vsel %vm1267, %v924, 0
        %v1318 = vsel %vm1267, %v1092, 0
        %1320 = vmatprep.subr.bf16.mxu0 0
        %1321 = vmatpush1.bf16.xpose.msra.mxu0 0
        %1322 = vmatprep.subr.bf16.mxu0 0
        %1323 = vmatpush1.bf16.xpose.msra.mxu0 0
        %1324 = vmatprep.subr.bf16.mxu0 0
        %1325 = vmatpush1.bf16.xpose.msra.mxu0 0
        %1326 = vmatprep.subr.bf16.mxu0 0
        %1327 = vmatpush1.bf16.xpose.msra.mxu0 0
        %1328 = vmatprep.subr.bf16.mxu0 0
        %1329 = vmatpush1.bf16.xpose.msra.mxu0 0
        %1330 = vmatprep.subr.bf16.mxu0 0
        %1331 = vmatpush1.bf16.xpose.msra.mxu0 0
        %1332 = vmatprep.subr.bf16.mxu0 0
        %1333 = vmatpush1.bf16.xpose.msra.mxu0 0
        %1334 = vmatprep.subr.bf16.mxu0 0
        %1335 = vmatpush1.bf16.xpose.msra.mxu0 %v1318
        %1336 = vmatprep.subr.bf16.mxu0 0
        %1337 = vmatpush2.bf16.xpose.msra.mxu0 0
        %1338 = vmatprep.subr.bf16.mxu0 0
        %1339 = vmatpush2.bf16.xpose.msra.mxu0 0
        %1340 = vmatprep.subr.bf16.mxu0 0
        %1341 = vmatpush2.bf16.xpose.msra.mxu0 0
        %1342 = vmatprep.subr.bf16.mxu0 0
        %1343 = vmatpush2.bf16.xpose.msra.mxu0 0
        %1344 = vmatprep.subr.bf16.mxu0 0
        %1345 = vmatpush2.bf16.xpose.msra.mxu0 0
        %1346 = vmatprep.subr.bf16.mxu0 0
        %1347 = vmatpush2.bf16.xpose.msra.mxu0 0
        %1348 = vmatprep.subr.bf16.mxu0 0
        %1349 = vmatpush2.bf16.xpose.msra.mxu0 0
        %1350 = vmatprep.subr.bf16.mxu0 0
        %1351 = vmatpush2.bf16.xpose.msra.mxu0 0
        %1352 = vmatprep.mubr.bf16.mxu0 0
        %1353 = vmatmul.mubr.bf16.gmra.mxu0 %v1315
        %v1354 = vpop.f32.mrf.mxu0
        %v1355 = vadd.f32 0.0, %v1354
        %v1356 = vpop.f32.mrf.mxu0
        %v1357 = vpop.f32.mrf.mxu0
        %v1358 = vpop.f32.mrf.mxu0
        %1359 = vdwg.mxu0
        %v1361 = vsel %vm1267, %v927, 0
        %v1364 = vsel %vm1267, %v1095, 0
        %1366 = vmatprep.subr.bf16.mxu0 0
        %1367 = vmatpush1.bf16.xpose.msra.mxu0 0
        %1368 = vmatprep.subr.bf16.mxu0 0
        %1369 = vmatpush1.bf16.xpose.msra.mxu0 0
        %1370 = vmatprep.subr.bf16.mxu0 0
        %1371 = vmatpush1.bf16.xpose.msra.mxu0 0
        %1372 = vmatprep.subr.bf16.mxu0 0
        %1373 = vmatpush1.bf16.xpose.msra.mxu0 0
        %1374 = vmatprep.subr.bf16.mxu0 0
        %1375 = vmatpush1.bf16.xpose.msra.mxu0 0
        %1376 = vmatprep.subr.bf16.mxu0 0
        %1377 = vmatpush1.bf16.xpose.msra.mxu0 0
        %1378 = vmatprep.subr.bf16.mxu0 0
        %1379 = vmatpush1.bf16.xpose.msra.mxu0 0
        %1380 = vmatprep.subr.bf16.mxu0 0
        %1381 = vmatpush1.bf16.xpose.msra.mxu0 %v1364
        %1382 = vmatprep.subr.bf16.mxu0 0
        %1383 = vmatpush2.bf16.xpose.msra.mxu0 0
        %1384 = vmatprep.subr.bf16.mxu0 0
        %1385 = vmatpush2.bf16.xpose.msra.mxu0 0
        %1386 = vmatprep.subr.bf16.mxu0 0
        %1387 = vmatpush2.bf16.xpose.msra.mxu0 0
        %1388 = vmatprep.subr.bf16.mxu0 0
        %1389 = vmatpush2.bf16.xpose.msra.mxu0 0
        %1390 = vmatprep.subr.bf16.mxu0 0
        %1391 = vmatpush2.bf16.xpose.msra.mxu0 0
        %1392 = vmatprep.subr.bf16.mxu0 0
        %1393 = vmatpush2.bf16.xpose.msra.mxu0 0
        %1394 = vmatprep.subr.bf16.mxu0 0
        %1395 = vmatpush2.bf16.xpose.msra.mxu0 0
        %1396 = vmatprep.subr.bf16.mxu0 0
        %1397 = vmatpush2.bf16.xpose.msra.mxu0 0
        %1398 = vmatprep.mubr.bf16.mxu0 0
        %1399 = vmatmul.mubr.bf16.gmra.mxu0 %v1361
        %v1400 = vpop.f32.mrf.mxu0
        %v1401 = vadd.f32 0.0, %v1400
        %v1402 = vpop.f32.mrf.mxu0
        %v1403 = vpop.f32.mrf.mxu0
        %v1404 = vpop.f32.mrf.mxu0
        %1405 = vdwg.mxu0
        %v1407 = vsel %vm1267, %v930, 0
        %v1410 = vsel %vm1267, %v1098, 0
        %1412 = vmatprep.subr.bf16.mxu0 0
        %1413 = vmatpush1.bf16.xpose.msra.mxu0 0
        %1414 = vmatprep.subr.bf16.mxu0 0
        %1415 = vmatpush1.bf16.xpose.msra.mxu0 0
        %1416 = vmatprep.subr.bf16.mxu0 0
        %1417 = vmatpush1.bf16.xpose.msra.mxu0 0
        %1418 = vmatprep.subr.bf16.mxu0 0
        %1419 = vmatpush1.bf16.xpose.msra.mxu0 0
        %1420 = vmatprep.subr.bf16.mxu0 0
        %1421 = vmatpush1.bf16.xpose.msra.mxu0 0
        %1422 = vmatprep.subr.bf16.mxu0 0
        %1423 = vmatpush1.bf16.xpose.msra.mxu0 0
        %1424 = vmatprep.subr.bf16.mxu0 0
        %1425 = vmatpush1.bf16.xpose.msra.mxu0 0
        %1426 = vmatprep.subr.bf16.mxu0 0
        %1427 = vmatpush1.bf16.xpose.msra.mxu0 %v1410
        %1428 = vmatprep.subr.bf16.mxu0 0
        %1429 = vmatpush2.bf16.xpose.msra.mxu0 0
        %1430 = vmatprep.subr.bf16.mxu0 0
        %1431 = vmatpush2.bf16.xpose.msra.mxu0 0
        %1432 = vmatprep.subr.bf16.mxu0 0
        %1433 = vmatpush2.bf16.xpose.msra.mxu0 0
        %1434 = vmatprep.subr.bf16.mxu0 0
        %1435 = vmatpush2.bf16.xpose.msra.mxu0 0
        %1436 = vmatprep.subr.bf16.mxu0 0
        %1437 = vmatpush2.bf16.xpose.msra.mxu0 0
        %1438 = vmatprep.subr.bf16.mxu0 0
        %1439 = vmatpush2.bf16.xpose.msra.mxu0 0
        %1440 = vmatprep.subr.bf16.mxu0 0
        %1441 = vmatpush2.bf16.xpose.msra.mxu0 0
        %1442 = vmatprep.subr.bf16.mxu0 0
        %1443 = vmatpush2.bf16.xpose.msra.mxu0 0
        %1444 = vmatprep.mubr.bf16.mxu0 0
        %1445 = vmatmul.mubr.bf16.gmra.mxu0 %v1407
        %v1446 = vpop.f32.mrf.mxu0
        %v1447 = vadd.f32 0.0, %v1446
        %v1448 = vpop.f32.mrf.mxu0
        %v1449 = vpop.f32.mrf.mxu0
        %v1450 = vpop.f32.mrf.mxu0
        %1451 = vdwg.mxu0
        %vm1452 = vcmask 64512
        %v1453 = vsel %vm1452, %v1309, -inf
        %1454 = vmax.xlane.f32.xlu0 %v1453
        %v1455 = vpop.xlane.xlu0 %1454
        %v1456 = vsel %vm1452, %v1355, -inf
        %1457 = vmax.xlane.f32.xlu0 %v1456
        %v1458 = vpop.xlane.xlu0 %1457
        %v1459 = vsel %vm1452, %v1401, -inf
        %1460 = vmax.xlane.f32.xlu0 %v1459
        %v1461 = vpop.xlane.xlu0 %1460
        %v1462 = vsel %vm1452, %v1447, -inf
        %1463 = vmax.xlane.f32.xlu0 %v1462
        %v1464 = vpop.xlane.xlu0 %1463
        %v1465 = vsub.f32 %v1309, %v1455
        %v1466 = vsub.f32 %v1355, %v1458
        %v1467 = vsub.f32 %v1401, %v1461
        %v1468 = vsub.f32 %v1447, %v1464
        %v1469 = vmul.f32 %v1465, 1.442695
        %v1470 = vpow.pop %v1469
        %v1471 = vmul.f32 %v1466, 1.442695
        %v1472 = vpow.pop %v1471
        %v1473 = vmul.f32 %v1467, 1.442695
        %v1474 = vpow.pop %v1473
        %v1475 = vmul.f32 %v1468, 1.442695
        %v1476 = vpow.pop %v1475
        %v1477 = vsel %vm1452, %v1470, 0.0
        %1478 = vadd.xlane.f32.xlu0 %v1477
        %v1479 = vpop.xlane.xlu0 %1478
        %v1480 = vsel %vm1452, %v1472, 0.0
        %1481 = vadd.xlane.f32.xlu0 %v1480
        %v1482 = vpop.xlane.xlu0 %1481
        %v1483 = vsel %vm1452, %v1474, 0.0
        %1484 = vadd.xlane.f32.xlu0 %v1483
        %v1485 = vpop.xlane.xlu0 %1484
        %v1486 = vsel %vm1452, %v1476, 0.0
        %1487 = vadd.xlane.f32.xlu0 %v1486
        %v1488 = vpop.xlane.xlu0 %1487
        %v1489 = vrcp.pop %v1479
        %v1490 = vrcp.pop %v1482
        %v1491 = vrcp.pop %v1485
        %v1492 = vrcp.pop %v1488
        %v1493 = vmul.f32 %v1470, %v1489
        %v1494 = vmul.f32 %v1472, %v1490
        %v1495 = vmul.f32 %v1474, %v1491
        %v1496 = vmul.f32 %v1476, %v1492
        %v1497 = vpack.c.bf16 %v1493, %v1493
        %v1498 = vpack.c.bf16 %v1494, %v1494
        %v1499 = vpack.c.bf16 %v1495, %v1495
        %v1500 = vpack.c.bf16 %v1496, %v1496
        %v1502 = vsel %vm1452, %v1497, 0
        %vm1504 = vcmask 1043456
        %v1506 = vsel %vm1504, %v1257, 0
        %1508 = vmatprep.subr.bf16.mxu0 0
        %1509 = vmatpush1.bf16.msra.mxu0 0
        %1510 = vmatprep.subr.bf16.mxu0 0
        %1511 = vmatpush1.bf16.msra.mxu0 0
        %1512 = vmatprep.subr.bf16.mxu0 0
        %1513 = vmatpush1.bf16.msra.mxu0 0
        %1514 = vmatprep.subr.bf16.mxu0 0
        %1515 = vmatpush1.bf16.msra.mxu0 0
        %1516 = vmatprep.subr.bf16.mxu0 0
        %1517 = vmatpush1.bf16.msra.mxu0 0
        %1518 = vmatprep.subr.bf16.mxu0 0
        %1519 = vmatpush1.bf16.msra.mxu0 0
        %1520 = vmatprep.subr.bf16.mxu0 0
        %1521 = vmatpush1.bf16.msra.mxu0 0
        %1522 = vmatprep.subr.bf16.mxu0 0
        %1523 = vmatpush1.bf16.msra.mxu0 %v1506
        %1524 = vmatprep.subr.bf16.mxu0 0
        %1525 = vmatpush2.bf16.msra.mxu0 0
        %1526 = vmatprep.subr.bf16.mxu0 0
        %1527 = vmatpush2.bf16.msra.mxu0 0
        %1528 = vmatprep.subr.bf16.mxu0 0
        %1529 = vmatpush2.bf16.msra.mxu0 0
        %1530 = vmatprep.subr.bf16.mxu0 0
        %1531 = vmatpush2.bf16.msra.mxu0 0
        %1532 = vmatprep.subr.bf16.mxu0 0
        %1533 = vmatpush2.bf16.msra.mxu0 0
        %1534 = vmatprep.subr.bf16.mxu0 0
        %1535 = vmatpush2.bf16.msra.mxu0 0
        %1536 = vmatprep.subr.bf16.mxu0 0
        %1537 = vmatpush2.bf16.msra.mxu0 0
        %1538 = vmatprep.subr.bf16.mxu0 0
        %1539 = vmatpush2.bf16.msra.mxu0 0
        %1540 = vmatprep.mubr.bf16.mxu0 0
        %1541 = vmatmul.mubr.bf16.gmra.mxu0 %v1502
        %v1542 = vpop.f32.mrf.mxu0
        %v1543 = vadd.f32 0.0, %v1542
        %v1544 = vpop.f32.mrf.mxu0
        %v1545 = vpop.f32.mrf.mxu0
        %v1546 = vpop.f32.mrf.mxu0
        %1547 = vdwg.mxu0
        %v1549 = vsel %vm1452, %v1498, 0
        %v1552 = vsel %vm1504, %v1260, 0
        %1554 = vmatprep.subr.bf16.mxu0 0
        %1555 = vmatpush1.bf16.msra.mxu0 0
        %1556 = vmatprep.subr.bf16.mxu0 0
        %1557 = vmatpush1.bf16.msra.mxu0 0
        %1558 = vmatprep.subr.bf16.mxu0 0
        %1559 = vmatpush1.bf16.msra.mxu0 0
        %1560 = vmatprep.subr.bf16.mxu0 0
        %1561 = vmatpush1.bf16.msra.mxu0 0
        %1562 = vmatprep.subr.bf16.mxu0 0
        %1563 = vmatpush1.bf16.msra.mxu0 0
        %1564 = vmatprep.subr.bf16.mxu0 0
        %1565 = vmatpush1.bf16.msra.mxu0 0
        %1566 = vmatprep.subr.bf16.mxu0 0
        %1567 = vmatpush1.bf16.msra.mxu0 0
        %1568 = vmatprep.subr.bf16.mxu0 0
        %1569 = vmatpush1.bf16.msra.mxu0 %v1552
        %1570 = vmatprep.subr.bf16.mxu0 0
        %1571 = vmatpush2.bf16.msra.mxu0 0
        %1572 = vmatprep.subr.bf16.mxu0 0
        %1573 = vmatpush2.bf16.msra.mxu0 0
        %1574 = vmatprep.subr.bf16.mxu0 0
        %1575 = vmatpush2.bf16.msra.mxu0 0
        %1576 = vmatprep.subr.bf16.mxu0 0
        %1577 = vmatpush2.bf16.msra.mxu0 0
        %1578 = vmatprep.subr.bf16.mxu0 0
        %1579 = vmatpush2.bf16.msra.mxu0 0
        %1580 = vmatprep.subr.bf16.mxu0 0
        %1581 = vmatpush2.bf16.msra.mxu0 0
        %1582 = vmatprep.subr.bf16.mxu0 0
        %1583 = vmatpush2.bf16.msra.mxu0 0
        %1584 = vmatprep.subr.bf16.mxu0 0
        %1585 = vmatpush2.bf16.msra.mxu0 0
        %1586 = vmatprep.mubr.bf16.mxu0 0
        %1587 = vmatmul.mubr.bf16.gmra.mxu0 %v1549
        %v1588 = vpop.f32.mrf.mxu0
        %v1589 = vadd.f32 0.0, %v1588
        %v1590 = vpop.f32.mrf.mxu0
        %v1591 = vpop.f32.mrf.mxu0
        %v1592 = vpop.f32.mrf.mxu0
        %1593 = vdwg.mxu0
        %v1595 = vsel %vm1452, %v1499, 0
        %v1598 = vsel %vm1504, %v1263, 0
        %1600 = vmatprep.subr.bf16.mxu0 0
        %1601 = vmatpush1.bf16.msra.mxu0 0
        %1602 = vmatprep.subr.bf16.mxu0 0
        %1603 = vmatpush1.bf16.msra.mxu0 0
        %1604 = vmatprep.subr.bf16.mxu0 0
        %1605 = vmatpush1.bf16.msra.mxu0 0
        %1606 = vmatprep.subr.bf16.mxu0 0
        %1607 = vmatpush1.bf16.msra.mxu0 0
        %1608 = vmatprep.subr.bf16.mxu0 0
        %1609 = vmatpush1.bf16.msra.mxu0 0
        %1610 = vmatprep.subr.bf16.mxu0 0
        %1611 = vmatpush1.bf16.msra.mxu0 0
        %1612 = vmatprep.subr.bf16.mxu0 0
        %1613 = vmatpush1.bf16.msra.mxu0 0
        %1614 = vmatprep.subr.bf16.mxu0 0
        %1615 = vmatpush1.bf16.msra.mxu0 %v1598
        %1616 = vmatprep.subr.bf16.mxu0 0
        %1617 = vmatpush2.bf16.msra.mxu0 0
        %1618 = vmatprep.subr.bf16.mxu0 0
        %1619 = vmatpush2.bf16.msra.mxu0 0
        %1620 = vmatprep.subr.bf16.mxu0 0
        %1621 = vmatpush2.bf16.msra.mxu0 0
        %1622 = vmatprep.subr.bf16.mxu0 0
        %1623 = vmatpush2.bf16.msra.mxu0 0
        %1624 = vmatprep.subr.bf16.mxu0 0
        %1625 = vmatpush2.bf16.msra.mxu0 0
        %1626 = vmatprep.subr.bf16.mxu0 0
        %1627 = vmatpush2.bf16.msra.mxu0 0
        %1628 = vmatprep.subr.bf16.mxu0 0
        %1629 = vmatpush2.bf16.msra.mxu0 0
        %1630 = vmatprep.subr.bf16.mxu0 0
        %1631 = vmatpush2.bf16.msra.mxu0 0
        %1632 = vmatprep.mubr.bf16.mxu0 0
        %1633 = vmatmul.mubr.bf16.gmra.mxu0 %v1595
        %v1634 = vpop.f32.mrf.mxu0
        %v1635 = vadd.f32 0.0, %v1634
        %v1636 = vpop.f32.mrf.mxu0
        %v1637 = vpop.f32.mrf.mxu0
        %v1638 = vpop.f32.mrf.mxu0
        %1639 = vdwg.mxu0
        %v1641 = vsel %vm1452, %v1500, 0
        %v1644 = vsel %vm1504, %v1266, 0
        %1646 = vmatprep.subr.bf16.mxu0 0
        %1647 = vmatpush1.bf16.msra.mxu0 0
        %1648 = vmatprep.subr.bf16.mxu0 0
        %1649 = vmatpush1.bf16.msra.mxu0 0
        %1650 = vmatprep.subr.bf16.mxu0 0
        %1651 = vmatpush1.bf16.msra.mxu0 0
        %1652 = vmatprep.subr.bf16.mxu0 0
        %1653 = vmatpush1.bf16.msra.mxu0 0
        %1654 = vmatprep.subr.bf16.mxu0 0
        %1655 = vmatpush1.bf16.msra.mxu0 0
        %1656 = vmatprep.subr.bf16.mxu0 0
        %1657 = vmatpush1.bf16.msra.mxu0 0
        %1658 = vmatprep.subr.bf16.mxu0 0
        %1659 = vmatpush1.bf16.msra.mxu0 0
        %1660 = vmatprep.subr.bf16.mxu0 0
        %1661 = vmatpush1.bf16.msra.mxu0 %v1644
        %1662 = vmatprep.subr.bf16.mxu0 0
        %1663 = vmatpush2.bf16.msra.mxu0 0
        %1664 = vmatprep.subr.bf16.mxu0 0
        %1665 = vmatpush2.bf16.msra.mxu0 0
        %1666 = vmatprep.subr.bf16.mxu0 0
        %1667 = vmatpush2.bf16.msra.mxu0 0
        %1668 = vmatprep.subr.bf16.mxu0 0
        %1669 = vmatpush2.bf16.msra.mxu0 0
        %1670 = vmatprep.subr.bf16.mxu0 0
        %1671 = vmatpush2.bf16.msra.mxu0 0
        %1672 = vmatprep.subr.bf16.mxu0 0
        %1673 = vmatpush2.bf16.msra.mxu0 0
        %1674 = vmatprep.subr.bf16.mxu0 0
        %1675 = vmatpush2.bf16.msra.mxu0 0
        %1676 = vmatprep.subr.bf16.mxu0 0
        %1677 = vmatpush2.bf16.msra.mxu0 0
        %1678 = vmatprep.mubr.bf16.mxu0 0
        %1679 = vmatmul.mubr.bf16.gmra.mxu0 %v1641
        %v1680 = vpop.f32.mrf.mxu0
        %v1681 = vadd.f32 0.0, %v1680
        %v1682 = vpop.f32.mrf.mxu0
        %v1683 = vpop.f32.mrf.mxu0
        %v1684 = vpop.f32.mrf.mxu0
        %1685 = vdwg.mxu0
        %v1686 = vcombine.low %v1543, %v1635
        %v1687 = vcombine.high %v1543, %v1635
        %v1689 = vunpack.c.l.s4 1983009808
        %v1690 = vunpack.c.0.s8 %v1689
        %v1691 = vlaneseq
        %v1692 = vshrl.u32 %v1691, 7
        %v1693 = vsub.s32 %v1690, %v1692
        %v1694 = vrot.slane %v1686, %v1693
        %v1696 = vunpack.c.l.s4 1983009808
        %v1697 = vunpack.c.0.s8 %v1696
        %v1698 = vlaneseq
        %v1699 = vshrl.u32 %v1698, 7
        %v1700 = vsub.s32 %v1697, %v1699
        %v1701 = vrot.slane %v1687, %v1700
        %v1702 = vcombine.low %v1589, %v1681
        %v1703 = vcombine.high %v1589, %v1681
        %v1705 = vunpack.c.l.s4 1983009808
        %v1706 = vunpack.c.0.s8 %v1705
        %v1707 = vlaneseq
        %v1708 = vshrl.u32 %v1707, 7
        %v1709 = vsub.s32 %v1706, %v1708
        %v1710 = vrot.slane %v1702, %v1709
        %v1712 = vunpack.c.l.s4 1983009808
        %v1713 = vunpack.c.0.s8 %v1712
        %v1714 = vlaneseq
        %v1715 = vshrl.u32 %v1714, 7
        %v1716 = vsub.s32 %v1713, %v1715
        %v1717 = vrot.slane %v1703, %v1716
        %v1718 = vcombine.low %v1694, %v1710
        %v1719 = vcombine.high %v1694, %v1710
        %v1721 = vunpack.c.l.s4 1934713408
        %v1722 = vunpack.c.0.s8 %v1721
        %v1723 = vlaneseq
        %v1724 = vshrl.u32 %v1723, 7
        %v1725 = vsub.s32 %v1722, %v1724
        %v1726 = vrot.slane %v1718, %v1725
        %v1728 = vunpack.c.l.s4 1934713408
        %v1729 = vunpack.c.0.s8 %v1728
        %v1730 = vlaneseq
        %v1731 = vshrl.u32 %v1730, 7
        %v1732 = vsub.s32 %v1729, %v1731
        %v1733 = vrot.slane %v1719, %v1732
        %v1734 = vcombine.low %v1701, %v1717
        %v1735 = vcombine.high %v1701, %v1717
        %v1737 = vunpack.c.l.s4 1934713408
        %v1738 = vunpack.c.0.s8 %v1737
        %v1739 = vlaneseq
        %v1740 = vshrl.u32 %v1739, 7
        %v1741 = vsub.s32 %v1738, %v1740
        %v1742 = vrot.slane %v1734, %v1741
        %v1744 = vunpack.c.l.s4 1934713408
        %v1745 = vunpack.c.0.s8 %v1744
        %v1746 = vlaneseq
        %v1747 = vshrl.u32 %v1746, 7
        %v1748 = vsub.s32 %v1745, %v1747
        %v1749 = vrot.slane %v1735, %v1748
        %v1750 = vcombine.high %v1726, 0.0
        %v1751 = vcombine.high %v1733, 0.0
        %v1752 = vcombine.high %v1742, 0.0
        %v1753 = vcombine.high %v1749, 0.0
        %v1754 = vcombine.low %v1726, %v1733
        %v1756 = vunpack.c.l.s4 1983009808
        %v1757 = vunpack.c.0.s8 %v1756
        %v1758 = vlaneseq
        %v1759 = vshrl.u32 %v1758, 7
        %v1760 = vsub.s32 %v1757, %v1759
        %v1761 = vrot.slane %v1754, %v1760
        %v1762 = vcombine.low %v1750, %v1751
        %v1764 = vunpack.c.l.s4 1983009808
        %v1765 = vunpack.c.0.s8 %v1764
        %v1766 = vlaneseq
        %v1767 = vshrl.u32 %v1766, 7
        %v1768 = vsub.s32 %v1765, %v1767
        %v1769 = vrot.slane %v1762, %v1768
        %v1770 = vcombine.low %v1742, %v1749
        %v1772 = vunpack.c.l.s4 1983009808
        %v1773 = vunpack.c.0.s8 %v1772
        %v1774 = vlaneseq
        %v1775 = vshrl.u32 %v1774, 7
        %v1776 = vsub.s32 %v1773, %v1775
        %v1777 = vrot.slane %v1770, %v1776
        %v1778 = vcombine.low %v1752, %v1753
        %v1780 = vunpack.c.l.s4 1983009808
        %v1781 = vunpack.c.0.s8 %v1780
        %v1782 = vlaneseq
        %v1783 = vshrl.u32 %v1782, 7
        %v1784 = vsub.s32 %v1781, %v1783
        %v1785 = vrot.slane %v1778, %v1784
        %v1786 = vcombine.low %v1761, %v1769
        %v1787 = vcombine.high %v1761, %v1769
        %v1789 = vunpack.c.l.s4 1934713408
        %v1790 = vunpack.c.0.s8 %v1789
        %v1791 = vlaneseq
        %v1792 = vshrl.u32 %v1791, 7
        %v1793 = vsub.s32 %v1790, %v1792
        %v1794 = vrot.slane %v1786, %v1793
        %v1796 = vunpack.c.l.s4 1934713408
        %v1797 = vunpack.c.0.s8 %v1796
        %v1798 = vlaneseq
        %v1799 = vshrl.u32 %v1798, 7
        %v1800 = vsub.s32 %v1797, %v1799
        %v1801 = vrot.slane %v1787, %v1800
        %v1802 = vcombine.low %v1777, %v1785
        %v1803 = vcombine.high %v1777, %v1785
        %v1805 = vunpack.c.l.s4 1934713408
        %v1806 = vunpack.c.0.s8 %v1805
        %v1807 = vlaneseq
        %v1808 = vshrl.u32 %v1807, 7
        %v1809 = vsub.s32 %v1806, %v1808
        %v1810 = vrot.slane %v1802, %v1809
        %v1812 = vunpack.c.l.s4 1934713408
        %v1813 = vunpack.c.0.s8 %v1812
        %v1814 = vlaneseq
        %v1815 = vshrl.u32 %v1814, 7
        %v1816 = vsub.s32 %v1813, %v1815
        %v1817 = vrot.slane %v1803, %v1816
        %v1818 = vcombine.low %v1794, %v1810
        %v1819 = vcombine.high %v1794, %v1810
        %v1820 = vcombine.low %v1801, %v1817
        %v1821 = vcombine.high %v1801, %v1817
        %1823 = vrot.lane.b32.xlu0 %v1819, 32
        %v1824 = vpop.permute.xlu0 %1823
        %1827 = vrot.lane.b32.xlu0 %v1820, 64
        %v1828 = vpop.permute.xlu0 %1827
        %1831 = vrot.lane.b32.xlu0 %v1821, 96
        %v1832 = vpop.permute.xlu0 %1831
        %v1834 = vsel %vm1267, %v1818, %v1824
        %vm1835 = vcmask 523264
        %v1836 = vsel %vm1835, %v1834, %v1828
        %vm1837 = vcmask 785408
        %v1838 = vsel %vm1837, %v1836, %v1832
        %v1839 = vpack.c.bf16 %v1838, %v1838
        %v1840 = vld [vmem:[#allocation7] sm:$0xf]
        %v1841 = vld [vmem:[#allocation7 + $0x4] sm:$0xf]
        %v1842 = vld [vmem:[#allocation7 + $0x8] sm:$0xf]
        %v1843 = vld [vmem:[#allocation7 + $0xc] sm:$0xf]
        %v1844 = vld [vmem:[#allocation7 + $0x10] sm:$0xf]
        %v1845 = vld [vmem:[#allocation7 + $0x14] sm:$0xf]
        %v1846 = vld [vmem:[#allocation7 + $0x18] sm:$0xf]
        %v1847 = vld [vmem:[#allocation7 + $0x1c] sm:$0xf]
        %v1848 = vld [vmem:[#allocation7 + $0x20] sm:$0xf]
        %v1849 = vld [vmem:[#allocation7 + $0x24] sm:$0xf]
        %v1850 = vld [vmem:[#allocation7 + $0x28] sm:$0xf]
        %v1851 = vld [vmem:[#allocation7 + $0x2c] sm:$0xf]
        %v1852 = vld [vmem:[#allocation7 + $0x30] sm:$0xf]
        %v1853 = vld [vmem:[#allocation7 + $0x34] sm:$0xf]
        %v1854 = vld [vmem:[#allocation7 + $0x38] sm:$0xf]
        %v1855 = vld [vmem:[#allocation7 + $0x3c] sm:$0xf]
        %v1856 = vld [vmem:[%s5] sm:$0x1]
        %v1858 = vlaneseq
        %v1859 = vshrl.u32 %v1858, 7
        %v1860 = vsub.s32 0, %v1859
        %v1861 = vrot.slane %v1856, %v1860
        %v1879 = vunpack.c.l.b16 %v1840
        %v1880 = vunpack.c.l.b16 %v1841
        %v1881 = vunpack.c.l.b16 %v1842
        %v1882 = vunpack.c.l.b16 %v1843
        %v1883 = vunpack.c.l.b16 %v1844
        %v1884 = vunpack.c.l.b16 %v1845
        %v1885 = vunpack.c.l.b16 %v1846
        %v1886 = vunpack.c.l.b16 %v1847
        %v1887 = vunpack.c.l.b16 %v1848
        %v1888 = vunpack.c.l.b16 %v1849
        %v1889 = vunpack.c.l.b16 %v1850
        %v1890 = vunpack.c.l.b16 %v1851
        %v1891 = vunpack.c.l.b16 %v1852
        %v1892 = vunpack.c.l.b16 %v1853
        %v1893 = vunpack.c.l.b16 %v1854
        %v1894 = vunpack.c.l.b16 %v1855
        %v1895 = vpack.c.b16 %v1880, %v1879
        %v1896 = vpack.c.b16 %v1882, %v1881
        %v1897 = vpack.c.b16 %v1884, %v1883
        %v1898 = vpack.c.b16 %v1886, %v1885
        %v1899 = vpack.c.b16 %v1888, %v1887
        %v1900 = vpack.c.b16 %v1890, %v1889
        %v1901 = vpack.c.b16 %v1892, %v1891
        %v1902 = vpack.c.b16 %v1894, %v1893
        %1911 = vmatprep.subr.bf16.mxu0 0
        %1912 = vmatpush1.bf16.msra.mxu0 %v1902
        %1913 = vmatprep.subr.bf16.mxu0 0
        %1914 = vmatpush1.bf16.msra.mxu0 %v1901
        %1915 = vmatprep.subr.bf16.mxu0 0
        %1916 = vmatpush1.bf16.msra.mxu0 %v1900
        %1917 = vmatprep.subr.bf16.mxu0 0
        %1918 = vmatpush1.bf16.msra.mxu0 %v1899
        %1919 = vmatprep.subr.bf16.mxu0 0
        %1920 = vmatpush1.bf16.msra.mxu0 %v1898
        %1921 = vmatprep.subr.bf16.mxu0 0
        %1922 = vmatpush1.bf16.msra.mxu0 %v1897
        %1923 = vmatprep.subr.bf16.mxu0 0
        %1924 = vmatpush1.bf16.msra.mxu0 %v1896
        %1925 = vmatprep.subr.bf16.mxu0 0
        %1926 = vmatpush1.bf16.msra.mxu0 %v1895
        %1927 = vmatprep.subr.bf16.mxu0 0
        %1928 = vmatpush2.bf16.msra.mxu0 0
        %1929 = vmatprep.subr.bf16.mxu0 0
        %1930 = vmatpush2.bf16.msra.mxu0 0
        %1931 = vmatprep.subr.bf16.mxu0 0
        %1932 = vmatpush2.bf16.msra.mxu0 0
        %1933 = vmatprep.subr.bf16.mxu0 0
        %1934 = vmatpush2.bf16.msra.mxu0 0
        %1935 = vmatprep.subr.bf16.mxu0 0
        %1936 = vmatpush2.bf16.msra.mxu0 0
        %1937 = vmatprep.subr.bf16.mxu0 0
        %1938 = vmatpush2.bf16.msra.mxu0 0
        %1939 = vmatprep.subr.bf16.mxu0 0
        %1940 = vmatpush2.bf16.msra.mxu0 0
        %1941 = vmatprep.subr.bf16.mxu0 0
        %1942 = vmatpush2.bf16.msra.mxu0 0
        %1943 = vmatprep.mubr.bf16.mxu0 0
        %1944 = vmatmul.mubr.bf16.gmra.mxu0 %v1839
        %v1945 = vpop.f32.mrf.mxu0
        %v1946 = vadd.f32 %v1861, %v1945
        %v1947 = vpop.f32.mrf.mxu0
        %v1948 = vpop.f32.mrf.mxu0
        %v1949 = vpop.f32.mrf.mxu0
        %1950 = vdwg.mxu0
        %v1951 = vadd.f32 %v488, %v1946
        %v1952 = vld [vmem:[%s6] sm:$0x1]
        %v1953 = vld [vmem:[%s7] sm:$0x1]
        %1954 = vadd.xlane.f32.xlu0 %v1951
        %v1955 = vpop.xlane.xlu0 %1954
        %v1956 = vmul.f32 %v1955, %v493
        %v1957 = vsub.f32 %v1951, %v1956
        %v1958 = vmul.f32 %v1957, %v1957
        %1959 = vadd.xlane.f32.xlu0 %v1958
        %v1960 = vpop.xlane.xlu0 %1959
        %v1961 = vmul.f32 %v1960, %v493
        %v1962 = vadd.f32 %v1961, 1e-05
        %v1963 = vrsqrt.pop %v1962
        %v1964 = vmul.f32 %v1957, %v1963
        %v1966 = vlaneseq
        %v1967 = vshrl.u32 %v1966, 7
        %v1968 = vsub.s32 0, %v1967
        %v1969 = vrot.slane %v1952, %v1968
        %v1971 = vmul.f32 %v1964, %v1969
        %v1973 = vlaneseq
        %v1974 = vshrl.u32 %v1973, 7
        %v1975 = vsub.s32 0, %v1974
        %v1976 = vrot.slane %v1953, %v1975
        %v1978 = vadd.f32 %v1971, %v1976
        %v1979 = vpack.c.bf16 %v1978, %v1978
        %v1980 = vld [vmem:[#allocation8] sm:$0xff]
        %v1981 = vld [vmem:[#allocation8 + $0x8] sm:$0xff]
        %v1982 = vld [vmem:[#allocation8 + $0x10] sm:$0xff]
        %v1983 = vld [vmem:[#allocation8 + $0x18] sm:$0xff]
        %v1984 = vld [vmem:[#allocation8 + $0x20] sm:$0xff]
        %v1985 = vld [vmem:[#allocation8 + $0x28] sm:$0xff]
        %v1986 = vld [vmem:[#allocation8 + $0x30] sm:$0xff]
        %v1987 = vld [vmem:[#allocation8 + $0x38] sm:$0xff]
        %v1988 = vld [vmem:[#allocation8 + $0x40] sm:$0xff]
        %v1989 = vld [vmem:[#allocation8 + $0x48] sm:$0xff]
        %v1990 = vld [vmem:[#allocation8 + $0x50] sm:$0xff]
        %v1991 = vld [vmem:[#allocation8 + $0x58] sm:$0xff]
        %v1992 = vld [vmem:[#allocation8 + $0x60] sm:$0xff]
        %v1993 = vld [vmem:[#allocation8 + $0x68] sm:$0xff]
        %v1994 = vld [vmem:[#allocation8 + $0x70] sm:$0xff]
        %v1995 = vld [vmem:[#allocation8 + $0x78] sm:$0xff]
        %v1996 = vld [vmem:[#allocation8 + $0x80] sm:$0xff]
        %v1997 = vld [vmem:[#allocation8 + $0x88] sm:$0xff]
        %v1998 = vld [vmem:[#allocation8 + $0x90] sm:$0xff]
        %v1999 = vld [vmem:[#allocation8 + $0x98] sm:$0xff]
        %v2000 = vld [vmem:[#allocation8 + $0xa0] sm:$0xff]
        %v2001 = vld [vmem:[#allocation8 + $0xa8] sm:$0xff]
        %v2002 = vld [vmem:[#allocation8 + $0xb0] sm:$0xff]
        %v2003 = vld [vmem:[#allocation8 + $0xb8] sm:$0xff]
        %v2004 = vld [vmem:[#allocation8 + $0xc0] sm:$0xff]
        %v2005 = vld [vmem:[#allocation8 + $0xc8] sm:$0xff]
        %v2006 = vld [vmem:[#allocation8 + $0xd0] sm:$0xff]
        %v2007 = vld [vmem:[#allocation8 + $0xd8] sm:$0xff]
        %v2008 = vld [vmem:[#allocation8 + $0xe0] sm:$0xff]
        %v2009 = vld [vmem:[#allocation8 + $0xe8] sm:$0xff]
        %v2010 = vld [vmem:[#allocation8 + $0xf0] sm:$0xff]
        %v2011 = vld [vmem:[#allocation8 + $0xf8] sm:$0xff]
        %v2012 = vld [vmem:[%s9] sm:$0xf]
        %v2014 = vlaneseq
        %v2015 = vshrl.u32 %v2014, 7
        %v2016 = vsub.s32 0, %v2015
        %v2017 = vrot.slane %v2012, %v2016
        %v2018 = vlaneseq
        %v2019 = vshrl.u32 %v2018, 7
        %v2020 = vsub.s32 1, %v2019
        %v2021 = vrot.slane %v2012, %v2020
        %v2022 = vlaneseq
        %v2023 = vshrl.u32 %v2022, 7
        %v2024 = vsub.s32 2, %v2023
        %v2025 = vrot.slane %v2012, %v2024
        %v2026 = vlaneseq
        %v2027 = vshrl.u32 %v2026, 7
        %v2028 = vsub.s32 3, %v2027
        %v2029 = vrot.slane %v2012, %v2028
        %v2066 = vunpack.c.l.b16 %v1980
        %v2067 = vunpack.c.h.b16 %v1980
        %v2068 = vunpack.c.l.b16 %v1981
        %v2069 = vunpack.c.h.b16 %v1981
        %v2070 = vunpack.c.l.b16 %v1982
        %v2071 = vunpack.c.h.b16 %v1982
        %v2072 = vunpack.c.l.b16 %v1983
        %v2073 = vunpack.c.h.b16 %v1983
        %v2074 = vunpack.c.l.b16 %v1984
        %v2075 = vunpack.c.h.b16 %v1984
        %v2076 = vunpack.c.l.b16 %v1985
        %v2077 = vunpack.c.h.b16 %v1985
        %v2078 = vunpack.c.l.b16 %v1986
        %v2079 = vunpack.c.h.b16 %v1986
        %v2080 = vunpack.c.l.b16 %v1987
        %v2081 = vunpack.c.h.b16 %v1987
        %v2082 = vunpack.c.l.b16 %v1988
        %v2083 = vunpack.c.h.b16 %v1988
        %v2084 = vunpack.c.l.b16 %v1989
        %v2085 = vunpack.c.h.b16 %v1989
        %v2086 = vunpack.c.l.b16 %v1990
        %v2087 = vunpack.c.h.b16 %v1990
        %v2088 = vunpack.c.l.b16 %v1991
        %v2089 = vunpack.c.h.b16 %v1991
        %v2090 = vunpack.c.l.b16 %v1992
        %v2091 = vunpack.c.h.b16 %v1992
        %v2092 = vunpack.c.l.b16 %v1993
        %v2093 = vunpack.c.h.b16 %v1993
        %v2094 = vunpack.c.l.b16 %v1994
        %v2095 = vunpack.c.h.b16 %v1994
        %v2096 = vunpack.c.l.b16 %v1995
        %v2097 = vunpack.c.h.b16 %v1995
        %v2098 = vunpack.c.l.b16 %v1996
        %v2099 = vunpack.c.h.b16 %v1996
        %v2100 = vunpack.c.l.b16 %v1997
        %v2101 = vunpack.c.h.b16 %v1997
        %v2102 = vunpack.c.l.b16 %v1998
        %v2103 = vunpack.c.h.b16 %v1998
        %v2104 = vunpack.c.l.b16 %v1999
        %v2105 = vunpack.c.h.b16 %v1999
        %v2106 = vunpack.c.l.b16 %v2000
        %v2107 = vunpack.c.h.b16 %v2000
        %v2108 = vunpack.c.l.b16 %v2001
        %v2109 = vunpack.c.h.b16 %v2001
        %v2110 = vunpack.c.l.b16 %v2002
        %v2111 = vunpack.c.h.b16 %v2002
        %v2112 = vunpack.c.l.b16 %v2003
        %v2113 = vunpack.c.h.b16 %v2003
        %v2114 = vunpack.c.l.b16 %v2004
        %v2115 = vunpack.c.h.b16 %v2004
        %v2116 = vunpack.c.l.b16 %v2005
        %v2117 = vunpack.c.h.b16 %v2005
        %v2118 = vunpack.c.l.b16 %v2006
        %v2119 = vunpack.c.h.b16 %v2006
        %v2120 = vunpack.c.l.b16 %v2007
        %v2121 = vunpack.c.h.b16 %v2007
        %v2122 = vunpack.c.l.b16 %v2008
        %v2123 = vunpack.c.h.b16 %v2008
        %v2124 = vunpack.c.l.b16 %v2009
        %v2125 = vunpack.c.h.b16 %v2009
        %v2126 = vunpack.c.l.b16 %v2010
        %v2127 = vunpack.c.h.b16 %v2010
        %v2128 = vunpack.c.l.b16 %v2011
        %v2129 = vunpack.c.h.b16 %v2011
        %v2130 = vpack.c.b16 %v2070, %v2066
        %v2131 = vpack.c.b16 %v2071, %v2067
        %v2132 = vpack.c.b16 %v2072, %v2068
        %v2133 = vpack.c.b16 %v2073, %v2069
        %v2134 = vpack.c.b16 %v2078, %v2074
        %v2135 = vpack.c.b16 %v2079, %v2075
        %v2136 = vpack.c.b16 %v2080, %v2076
        %v2137 = vpack.c.b16 %v2081, %v2077
        %v2138 = vpack.c.b16 %v2086, %v2082
        %v2139 = vpack.c.b16 %v2087, %v2083
        %v2140 = vpack.c.b16 %v2088, %v2084
        %v2141 = vpack.c.b16 %v2089, %v2085
        %v2142 = vpack.c.b16 %v2094, %v2090
        %v2143 = vpack.c.b16 %v2095, %v2091
        %v2144 = vpack.c.b16 %v2096, %v2092
        %v2145 = vpack.c.b16 %v2097, %v2093
        %v2146 = vpack.c.b16 %v2102, %v2098
        %v2147 = vpack.c.b16 %v2103, %v2099
        %v2148 = vpack.c.b16 %v2104, %v2100
        %v2149 = vpack.c.b16 %v2105, %v2101
        %v2150 = vpack.c.b16 %v2110, %v2106
        %v2151 = vpack.c.b16 %v2111, %v2107
        %v2152 = vpack.c.b16 %v2112, %v2108
        %v2153 = vpack.c.b16 %v2113, %v2109
        %v2154 = vpack.c.b16 %v2118, %v2114
        %v2155 = vpack.c.b16 %v2119, %v2115
        %v2156 = vpack.c.b16 %v2120, %v2116
        %v2157 = vpack.c.b16 %v2121, %v2117
        %v2158 = vpack.c.b16 %v2126, %v2122
        %v2159 = vpack.c.b16 %v2127, %v2123
        %v2160 = vpack.c.b16 %v2128, %v2124
        %v2161 = vpack.c.b16 %v2129, %v2125
        %2194 = vmatprep.subr.bf16.mxu0 %v2159
        %2195 = vmatpush1.bf16.msra.mxu0 %v2158
        %2196 = vmatprep.subr.bf16.mxu0 %v2155
        %2197 = vmatpush1.bf16.msra.mxu0 %v2154
        %2198 = vmatprep.subr.bf16.mxu0 %v2151
        %2199 = vmatpush1.bf16.msra.mxu0 %v2150
        %2200 = vmatprep.subr.bf16.mxu0 %v2147
        %2201 = vmatpush1.bf16.msra.mxu0 %v2146
        %2202 = vmatprep.subr.bf16.mxu0 %v2143
        %2203 = vmatpush1.bf16.msra.mxu0 %v2142
        %2204 = vmatprep.subr.bf16.mxu0 %v2139
        %2205 = vmatpush1.bf16.msra.mxu0 %v2138
        %2206 = vmatprep.subr.bf16.mxu0 %v2135
        %2207 = vmatpush1.bf16.msra.mxu0 %v2134
        %2208 = vmatprep.subr.bf16.mxu0 %v2131
        %2209 = vmatpush1.bf16.msra.mxu0 %v2130
        %2210 = vmatprep.subr.bf16.mxu0 0
        %2211 = vmatpush2.bf16.msra.mxu0 0
        %2212 = vmatprep.subr.bf16.mxu0 0
        %2213 = vmatpush2.bf16.msra.mxu0 0
        %2214 = vmatprep.subr.bf16.mxu0 0
        %2215 = vmatpush2.bf16.msra.mxu0 0
        %2216 = vmatprep.subr.bf16.mxu0 0
        %2217 = vmatpush2.bf16.msra.mxu0 0
        %2218 = vmatprep.subr.bf16.mxu0 0
        %2219 = vmatpush2.bf16.msra.mxu0 0
        %2220 = vmatprep.subr.bf16.mxu0 0
        %2221 = vmatpush2.bf16.msra.mxu0 0
        %2222 = vmatprep.subr.bf16.mxu0 0
        %2223 = vmatpush2.bf16.msra.mxu0 0
        %2224 = vmatprep.subr.bf16.mxu0 0
        %2225 = vmatpush2.bf16.msra.mxu0 0
        %2226 = vmatprep.mubr.bf16.mxu0 0
        %2227 = vmatmul.mubr.bf16.gmra.mxu0 %v1979
        %v2228 = vpop.f32.mrf.mxu0
        %v2229 = vadd.f32 %v2017, %v2228
        %v2230 = vpop.f32.mrf.mxu0
        %v2231 = vadd.f32 %v2021, %v2230
        %v2232 = vpop.f32.mrf.mxu0
        %v2233 = vpop.f32.mrf.mxu0
        %2234 = vdwg.mxu0
        %2235 = vmatprep.subr.bf16.mxu0 %v2161
        %2236 = vmatpush1.bf16.msra.mxu0 %v2160
        %2237 = vmatprep.subr.bf16.mxu0 %v2157
        %2238 = vmatpush1.bf16.msra.mxu0 %v2156
        %2239 = vmatprep.subr.bf16.mxu0 %v2153
        %2240 = vmatpush1.bf16.msra.mxu0 %v2152
        %2241 = vmatprep.subr.bf16.mxu0 %v2149
        %2242 = vmatpush1.bf16.msra.mxu0 %v2148
        %2243 = vmatprep.subr.bf16.mxu0 %v2145
        %2244 = vmatpush1.bf16.msra.mxu0 %v2144
        %2245 = vmatprep.subr.bf16.mxu0 %v2141
        %2246 = vmatpush1.bf16.msra.mxu0 %v2140
        %2247 = vmatprep.subr.bf16.mxu0 %v2137
        %2248 = vmatpush1.bf16.msra.mxu0 %v2136
        %2249 = vmatprep.subr.bf16.mxu0 %v2133
        %2250 = vmatpush1.bf16.msra.mxu0 %v2132
        %2251 = vmatprep.subr.bf16.mxu0 0
        %2252 = vmatpush2.bf16.msra.mxu0 0
        %2253 = vmatprep.subr.bf16.mxu0 0
        %2254 = vmatpush2.bf16.msra.mxu0 0
        %2255 = vmatprep.subr.bf16.mxu0 0
        %2256 = vmatpush2.bf16.msra.mxu0 0
        %2257 = vmatprep.subr.bf16.mxu0 0
        %2258 = vmatpush2.bf16.msra.mxu0 0
        %2259 = vmatprep.subr.bf16.mxu0 0
        %2260 = vmatpush2.bf16.msra.mxu0 0
        %2261 = vmatprep.subr.bf16.mxu0 0
        %2262 = vmatpush2.bf16.msra.mxu0 0
        %2263 = vmatprep.subr.bf16.mxu0 0
        %2264 = vmatpush2.bf16.msra.mxu0 0
        %2265 = vmatprep.subr.bf16.mxu0 0
        %2266 = vmatpush2.bf16.msra.mxu0 0
        %2267 = vmatprep.mubr.bf16.mxu0 0
        %2268 = vmatmul.mubr.bf16.gmra.mxu0 %v1979
        %v2269 = vpop.f32.mrf.mxu0
        %v2270 = vadd.f32 %v2025, %v2269
        %v2271 = vpop.f32.mrf.mxu0
        %v2272 = vadd.f32 %v2029, %v2271
        %v2273 = vpop.f32.mrf.mxu0
        %v2274 = vpop.f32.mrf.mxu0
        %2275 = vdwg.mxu0
        %v2276 = vmul.f32 %v2229, 0.5
        %v2277 = vmul.f32 %v2231, 0.5
        %v2278 = vmul.f32 %v2270, 0.5
        %v2279 = vmul.f32 %v2272, 0.5
        %v2280 = vmul.f32 %v2229, 0.70710677
        %v2281 = vmul.f32 %v2231, 0.70710677
        %v2282 = vmul.f32 %v2270, 0.70710677
        %v2283 = vmul.f32 %v2272, 0.70710677
        %v2284 = vand.u32 2147483647, %v2280
        %v2285 = vand.u32 2147483647, %v2281
        %v2286 = vand.u32 2147483647, %v2282
        %v2287 = vand.u32 2147483647, %v2283
        %v2288 = vmul.f32 %v2284, 0.3275911
        %v2289 = vmul.f32 %v2285, 0.3275911
        %v2290 = vmul.f32 %v2286, 0.3275911
        %v2291 = vmul.f32 %v2287, 0.3275911
        %v2292 = vadd.f32 %v2288, 1.0
        %v2293 = vadd.f32 %v2289, 1.0
        %v2294 = vadd.f32 %v2290, 1.0
        %v2295 = vadd.f32 %v2291, 1.0
        %v2296 = vrcp.pop %v2292
        %v2297 = vmul.f32 1.0, %v2296
        %v2298 = vrcp.pop %v2293
        %v2299 = vmul.f32 1.0, %v2298
        %v2300 = vrcp.pop %v2294
        %v2301 = vmul.f32 1.0, %v2300
        %v2302 = vrcp.pop %v2295
        %v2303 = vmul.f32 1.0, %v2302
        %v2304 = vmul.f32 %v2297, 1.0614054
        %v2305 = vmul.f32 %v2299, 1.0614054
        %v2306 = vmul.f32 %v2301, 1.0614054
        %v2307 = vmul.f32 %v2303, 1.0614054
        %v2308 = vadd.f32 %v2304, -1.4531521
        %v2309 = vadd.f32 %v2305, -1.4531521
        %v2310 = vadd.f32 %v2306, -1.4531521
        %v2311 = vadd.f32 %v2307, -1.4531521
        %v2312 = vmul.f32 %v2308, %v2297
        %v2313 = vmul.f32 %v2309, %v2299
        %v2314 = vmul.f32 %v2310, %v2301
        %v2315 = vmul.f32 %v2311, %v2303
        %v2316 = vadd.f32 %v2312, 1.4214138
        %v2317 = vadd.f32 %v2313, 1.4214138
        %v2318 = vadd.f32 %v2314, 1.4214138
        %v2319 = vadd.f32 %v2315, 1.4214138
        %v2320 = vmul.f32 %v2316, %v2297
        %v2321 = vmul.f32 %v2317, %v2299
        %v2322 = vmul.f32 %v2318, %v2301
        %v2323 = vmul.f32 %v2319, %v2303
        %v2324 = vadd.f32 %v2320, -0.28449672
        %v2325 = vadd.f32 %v2321, -0.28449672
        %v2326 = vadd.f32 %v2322, -0.28449672
        %v2327 = vadd.f32 %v2323, -0.28449672
        %v2328 = vmul.f32 %v2324, %v2297
        %v2329 = vmul.f32 %v2325, %v2299
        %v2330 = vmul.f32 %v2326, %v2301
        %v2331 = vmul.f32 %v2327, %v2303
        %v2332 = vadd.f32 %v2328, 0.2548296
        %v2333 = vadd.f32 %v2329, 0.2548296
        %v2334 = vadd.f32 %v2330, 0.2548296
        %v2335 = vadd.f32 %v2331, 0.2548296
        %v2336 = vmul.f32 %v2332, %v2297
        %v2337 = vmul.f32 %v2333, %v2299
        %v2338 = vmul.f32 %v2334, %v2301
        %v2339 = vmul.f32 %v2335, %v2303
        %v2340 = vsub.f32 0.0, %v2284
        %v2341 = vsub.f32 0.0, %v2285
        %v2342 = vsub.f32 0.0, %v2286
        %v2343 = vsub.f32 0.0, %v2287
        %v2344 = vmul.f32 %v2340, %v2284
        %v2345 = vmul.f32 %v2341, %v2285
        %v2346 = vmul.f32 %v2342, %v2286
        %v2347 = vmul.f32 %v2343, %v2287
        %v2348 = vmul.f32 %v2344, 1.442695
        %v2349 = vpow.pop %v2348
        %v2350 = vmul.f32 %v2345, 1.442695
        %v2351 = vpow.pop %v2350
        %v2352 = vmul.f32 %v2346, 1.442695
        %v2353 = vpow.pop %v2352
        %v2354 = vmul.f32 %v2347, 1.442695
        %v2355 = vpow.pop %v2354
        %v2356 = vmul.f32 %v2336, %v2349
        %v2357 = vmul.f32 %v2337, %v2351
        %v2358 = vmul.f32 %v2338, %v2353
        %v2359 = vmul.f32 %v2339, %v2355
        %v2360 = vsub.f32 1.0, %v2356
        %v2361 = vsub.f32 1.0, %v2357
        %v2362 = vsub.f32 1.0, %v2358
        %v2363 = vsub.f32 1.0, %v2359
        %vm2364 = vcmp.ge.f32.partialorder %v2280, 0.0
        %vm2365 = vcmp.ge.f32.partialorder %v2281, 0.0
        %vm2366 = vcmp.ge.f32.partialorder %v2282, 0.0
        %vm2367 = vcmp.ge.f32.partialorder %v2283, 0.0
        %v2368 = vsub.f32 0.0, %v2360
        %v2369 = vsub.f32 0.0, %v2361
        %v2370 = vsub.f32 0.0, %v2362
        %v2371 = vsub.f32 0.0, %v2363
        %v2372 = vsel %vm2364, %v2360, %v2368
        %v2373 = vsel %vm2365, %v2361, %v2369
        %v2374 = vsel %vm2366, %v2362, %v2370
        %v2375 = vsel %vm2367, %v2363, %v2371
        %v2376 = vadd.f32 %v2372, 1.0
        %v2377 = vadd.f32 %v2373, 1.0
        %v2378 = vadd.f32 %v2374, 1.0
        %v2379 = vadd.f32 %v2375, 1.0
        %v2380 = vmul.f32 %v2276, %v2376
        %v2381 = vmul.f32 %v2277, %v2377
        %v2382 = vmul.f32 %v2278, %v2378
        %v2383 = vmul.f32 %v2279, %v2379
        %v2384 = vpack.c.bf16 %v2380, %v2380
        %v2385 = vpack.c.bf16 %v2381, %v2381
        %v2386 = vpack.c.bf16 %v2382, %v2382
        %v2387 = vpack.c.bf16 %v2383, %v2383
        %v2388 = vld [vmem:[#allocation10] sm:$0xf]
        %v2389 = vld [vmem:[#allocation10 + $0x4] sm:$0xf]
        %v2390 = vld [vmem:[#allocation10 + $0x8] sm:$0xf]
        %v2391 = vld [vmem:[#allocation10 + $0xc] sm:$0xf]
        %v2392 = vld [vmem:[#allocation10 + $0x10] sm:$0xf]
        %v2393 = vld [vmem:[#allocation10 + $0x14] sm:$0xf]
        %v2394 = vld [vmem:[#allocation10 + $0x18] sm:$0xf]
        %v2395 = vld [vmem:[#allocation10 + $0x1c] sm:$0xf]
        %v2396 = vld [vmem:[#allocation10 + $0x20] sm:$0xf]
        %v2397 = vld [vmem:[#allocation10 + $0x24] sm:$0xf]
        %v2398 = vld [vmem:[#allocation10 + $0x28] sm:$0xf]
        %v2399 = vld [vmem:[#allocation10 + $0x2c] sm:$0xf]
        %v2400 = vld [vmem:[#allocation10 + $0x30] sm:$0xf]
        %v2401 = vld [vmem:[#allocation10 + $0x34] sm:$0xf]
        %v2402 = vld [vmem:[#allocation10 + $0x38] sm:$0xf]
        %v2403 = vld [vmem:[#allocation10 + $0x3c] sm:$0xf]
        %v2404 = vld [vmem:[#allocation10 + $0x40] sm:$0xf]
        %v2405 = vld [vmem:[#allocation10 + $0x44] sm:$0xf]
        %v2406 = vld [vmem:[#allocation10 + $0x48] sm:$0xf]
        %v2407 = vld [vmem:[#allocation10 + $0x4c] sm:$0xf]
        %v2408 = vld [vmem:[#allocation10 + $0x50] sm:$0xf]
        %v2409 = vld [vmem:[#allocation10 + $0x54] sm:$0xf]
        %v2410 = vld [vmem:[#allocation10 + $0x58] sm:$0xf]
        %v2411 = vld [vmem:[#allocation10 + $0x5c] sm:$0xf]
        %v2412 = vld [vmem:[#allocation10 + $0x60] sm:$0xf]
        %v2413 = vld [vmem:[#allocation10 + $0x64] sm:$0xf]
        %v2414 = vld [vmem:[#allocation10 + $0x68] sm:$0xf]
        %v2415 = vld [vmem:[#allocation10 + $0x6c] sm:$0xf]
        %v2416 = vld [vmem:[#allocation10 + $0x70] sm:$0xf]
        %v2417 = vld [vmem:[#allocation10 + $0x74] sm:$0xf]
        %v2418 = vld [vmem:[#allocation10 + $0x78] sm:$0xf]
        %v2419 = vld [vmem:[#allocation10 + $0x7c] sm:$0xf]
        %v2420 = vld [vmem:[#allocation10 + $0x80] sm:$0xf]
        %v2421 = vld [vmem:[#allocation10 + $0x84] sm:$0xf]
        %v2422 = vld [vmem:[#allocation10 + $0x88] sm:$0xf]
        %v2423 = vld [vmem:[#allocation10 + $0x8c] sm:$0xf]
        %v2424 = vld [vmem:[#allocation10 + $0x90] sm:$0xf]
        %v2425 = vld [vmem:[#allocation10 + $0x94] sm:$0xf]
        %v2426 = vld [vmem:[#allocation10 + $0x98] sm:$0xf]
        %v2427 = vld [vmem:[#allocation10 + $0x9c] sm:$0xf]
        %v2428 = vld [vmem:[#allocation10 + $0xa0] sm:$0xf]
        %v2429 = vld [vmem:[#allocation10 + $0xa4] sm:$0xf]
        %v2430 = vld [vmem:[#allocation10 + $0xa8] sm:$0xf]
        %v2431 = vld [vmem:[#allocation10 + $0xac] sm:$0xf]
        %v2432 = vld [vmem:[#allocation10 + $0xb0] sm:$0xf]
        %v2433 = vld [vmem:[#allocation10 + $0xb4] sm:$0xf]
        %v2434 = vld [vmem:[#allocation10 + $0xb8] sm:$0xf]
        %v2435 = vld [vmem:[#allocation10 + $0xbc] sm:$0xf]
        %v2436 = vld [vmem:[#allocation10 + $0xc0] sm:$0xf]
        %v2437 = vld [vmem:[#allocation10 + $0xc4] sm:$0xf]
        %v2438 = vld [vmem:[#allocation10 + $0xc8] sm:$0xf]
        %v2439 = vld [vmem:[#allocation10 + $0xcc] sm:$0xf]
        %v2440 = vld [vmem:[#allocation10 + $0xd0] sm:$0xf]
        %v2441 = vld [vmem:[#allocation10 + $0xd4] sm:$0xf]
        %v2442 = vld [vmem:[#allocation10 + $0xd8] sm:$0xf]
        %v2443 = vld [vmem:[#allocation10 + $0xdc] sm:$0xf]
        %v2444 = vld [vmem:[#allocation10 + $0xe0] sm:$0xf]
        %v2445 = vld [vmem:[#allocation10 + $0xe4] sm:$0xf]
        %v2446 = vld [vmem:[#allocation10 + $0xe8] sm:$0xf]
        %v2447 = vld [vmem:[#allocation10 + $0xec] sm:$0xf]
        %v2448 = vld [vmem:[#allocation10 + $0xf0] sm:$0xf]
        %v2449 = vld [vmem:[#allocation10 + $0xf4] sm:$0xf]
        %v2450 = vld [vmem:[#allocation10 + $0xf8] sm:$0xf]
        %v2451 = vld [vmem:[#allocation10 + $0xfc] sm:$0xf]
        %v2452 = vld [vmem:[%s11] sm:$0x1]
        %v2454 = vlaneseq
        %v2455 = vshrl.u32 %v2454, 7
        %v2456 = vsub.s32 0, %v2455
        %v2457 = vrot.slane %v2452, %v2456
        %v2523 = vunpack.c.l.b16 %v2388
        %v2524 = vunpack.c.l.b16 %v2389
        %v2525 = vunpack.c.l.b16 %v2390
        %v2526 = vunpack.c.l.b16 %v2391
        %v2527 = vunpack.c.l.b16 %v2392
        %v2528 = vunpack.c.l.b16 %v2393
        %v2529 = vunpack.c.l.b16 %v2394
        %v2530 = vunpack.c.l.b16 %v2395
        %v2531 = vunpack.c.l.b16 %v2396
        %v2532 = vunpack.c.l.b16 %v2397
        %v2533 = vunpack.c.l.b16 %v2398
        %v2534 = vunpack.c.l.b16 %v2399
        %v2535 = vunpack.c.l.b16 %v2400
        %v2536 = vunpack.c.l.b16 %v2401
        %v2537 = vunpack.c.l.b16 %v2402
        %v2538 = vunpack.c.l.b16 %v2403
        %v2539 = vunpack.c.l.b16 %v2404
        %v2540 = vunpack.c.l.b16 %v2405
        %v2541 = vunpack.c.l.b16 %v2406
        %v2542 = vunpack.c.l.b16 %v2407
        %v2543 = vunpack.c.l.b16 %v2408
        %v2544 = vunpack.c.l.b16 %v2409
        %v2545 = vunpack.c.l.b16 %v2410
        %v2546 = vunpack.c.l.b16 %v2411
        %v2547 = vunpack.c.l.b16 %v2412
        %v2548 = vunpack.c.l.b16 %v2413
        %v2549 = vunpack.c.l.b16 %v2414
        %v2550 = vunpack.c.l.b16 %v2415
        %v2551 = vunpack.c.l.b16 %v2416
        %v2552 = vunpack.c.l.b16 %v2417
        %v2553 = vunpack.c.l.b16 %v2418
        %v2554 = vunpack.c.l.b16 %v2419
        %v2555 = vunpack.c.l.b16 %v2420
        %v2556 = vunpack.c.l.b16 %v2421
        %v2557 = vunpack.c.l.b16 %v2422
        %v2558 = vunpack.c.l.b16 %v2423
        %v2559 = vunpack.c.l.b16 %v2424
        %v2560 = vunpack.c.l.b16 %v2425
        %v2561 = vunpack.c.l.b16 %v2426
        %v2562 = vunpack.c.l.b16 %v2427
        %v2563 = vunpack.c.l.b16 %v2428
        %v2564 = vunpack.c.l.b16 %v2429
        %v2565 = vunpack.c.l.b16 %v2430
        %v2566 = vunpack.c.l.b16 %v2431
        %v2567 = vunpack.c.l.b16 %v2432
        %v2568 = vunpack.c.l.b16 %v2433
        %v2569 = vunpack.c.l.b16 %v2434
        %v2570 = vunpack.c.l.b16 %v2435
        %v2571 = vunpack.c.l.b16 %v2436
        %v2572 = vunpack.c.l.b16 %v2437
        %v2573 = vunpack.c.l.b16 %v2438
        %v2574 = vunpack.c.l.b16 %v2439
        %v2575 = vunpack.c.l.b16 %v2440
        %v2576 = vunpack.c.l.b16 %v2441
        %v2577 = vunpack.c.l.b16 %v2442
        %v2578 = vunpack.c.l.b16 %v2443
        %v2579 = vunpack.c.l.b16 %v2444
        %v2580 = vunpack.c.l.b16 %v2445
        %v2581 = vunpack.c.l.b16 %v2446
        %v2582 = vunpack.c.l.b16 %v2447
        %v2583 = vunpack.c.l.b16 %v2448
        %v2584 = vunpack.c.l.b16 %v2449
        %v2585 = vunpack.c.l.b16 %v2450
        %v2586 = vunpack.c.l.b16 %v2451
        %v2587 = vpack.c.b16 %v2524, %v2523
        %v2588 = vpack.c.b16 %v2526, %v2525
        %v2589 = vpack.c.b16 %v2528, %v2527
        %v2590 = vpack.c.b16 %v2530, %v2529
        %v2591 = vpack.c.b16 %v2532, %v2531
        %v2592 = vpack.c.b16 %v2534, %v2533
        %v2593 = vpack.c.b16 %v2536, %v2535
        %v2594 = vpack.c.b16 %v2538, %v2537
        %v2595 = vpack.c.b16 %v2540, %v2539
        %v2596 = vpack.c.b16 %v2542, %v2541
        %v2597 = vpack.c.b16 %v2544, %v2543
        %v2598 = vpack.c.b16 %v2546, %v2545
        %v2599 = vpack.c.b16 %v2548, %v2547
        %v2600 = vpack.c.b16 %v2550, %v2549
        %v2601 = vpack.c.b16 %v2552, %v2551
        %v2602 = vpack.c.b16 %v2554, %v2553
        %v2603 = vpack.c.b16 %v2556, %v2555
        %v2604 = vpack.c.b16 %v2558, %v2557
        %v2605 = vpack.c.b16 %v2560, %v2559
        %v2606 = vpack.c.b16 %v2562, %v2561
        %v2607 = vpack.c.b16 %v2564, %v2563
        %v2608 = vpack.c.b16 %v2566, %v2565
        %v2609 = vpack.c.b16 %v2568, %v2567
        %v2610 = vpack.c.b16 %v2570, %v2569
        %v2611 = vpack.c.b16 %v2572, %v2571
        %v2612 = vpack.c.b16 %v2574, %v2573
        %v2613 = vpack.c.b16 %v2576, %v2575
        %v2614 = vpack.c.b16 %v2578, %v2577
        %v2615 = vpack.c.b16 %v2580, %v2579
        %v2616 = vpack.c.b16 %v2582, %v2581
        %v2617 = vpack.c.b16 %v2584, %v2583
        %v2618 = vpack.c.b16 %v2586, %v2585
        %2651 = vmatprep.subr.bf16.mxu0 0
        %2652 = vmatpush1.bf16.msra.mxu0 %v2594
        %2653 = vmatprep.subr.bf16.mxu0 0
        %2654 = vmatpush1.bf16.msra.mxu0 %v2593
        %2655 = vmatprep.subr.bf16.mxu0 0
        %2656 = vmatpush1.bf16.msra.mxu0 %v2592
        %2657 = vmatprep.subr.bf16.mxu0 0
        %2658 = vmatpush1.bf16.msra.mxu0 %v2591
        %2659 = vmatprep.subr.bf16.mxu0 0
        %2660 = vmatpush1.bf16.msra.mxu0 %v2590
        %2661 = vmatprep.subr.bf16.mxu0 0
        %2662 = vmatpush1.bf16.msra.mxu0 %v2589
        %2663 = vmatprep.subr.bf16.mxu0 0
        %2664 = vmatpush1.bf16.msra.mxu0 %v2588
        %2665 = vmatprep.subr.bf16.mxu0 0
        %2666 = vmatpush1.bf16.msra.mxu0 %v2587
        %2667 = vmatprep.subr.bf16.mxu0 0
        %2668 = vmatpush2.bf16.msra.mxu0 %v2602
        %2669 = vmatprep.subr.bf16.mxu0 0
        %2670 = vmatpush2.bf16.msra.mxu0 %v2601
        %2671 = vmatprep.subr.bf16.mxu0 0
        %2672 = vmatpush2.bf16.msra.mxu0 %v2600
        %2673 = vmatprep.subr.bf16.mxu0 0
        %2674 = vmatpush2.bf16.msra.mxu0 %v2599
        %2675 = vmatprep.subr.bf16.mxu0 0
        %2676 = vmatpush2.bf16.msra.mxu0 %v2598
        %2677 = vmatprep.subr.bf16.mxu0 0
        %2678 = vmatpush2.bf16.msra.mxu0 %v2597
        %2679 = vmatprep.subr.bf16.mxu0 0
        %2680 = vmatpush2.bf16.msra.mxu0 %v2596
        %2681 = vmatprep.subr.bf16.mxu0 0
        %2682 = vmatpush2.bf16.msra.mxu0 %v2595
        %2683 = vmatprep.mubr.bf16.mxu0 %v2385
        %2684 = vmatmul.mubr.bf16.gmra.mxu0 %v2384
        %v2685 = vpop.f32.mrf.mxu0
        %v2686 = vadd.f32 %v2457, %v2685
        %v2687 = vpop.f32.mrf.mxu0
        %v2688 = vpop.f32.mrf.mxu0
        %v2689 = vpop.f32.mrf.mxu0
        %2690 = vdwg.mxu0
        %2691 = vmatprep.subr.bf16.mxu0 0
        %2692 = vmatpush1.bf16.msra.mxu0 %v2610
        %2693 = vmatprep.subr.bf16.mxu0 0
        %2694 = vmatpush1.bf16.msra.mxu0 %v2609
        %2695 = vmatprep.subr.bf16.mxu0 0
        %2696 = vmatpush1.bf16.msra.mxu0 %v2608
        %2697 = vmatprep.subr.bf16.mxu0 0
        %2698 = vmatpush1.bf16.msra.mxu0 %v2607
        %2699 = vmatprep.subr.bf16.mxu0 0
        %2700 = vmatpush1.bf16.msra.mxu0 %v2606
        %2701 = vmatprep.subr.bf16.mxu0 0
        %2702 = vmatpush1.bf16.msra.mxu0 %v2605
        %2703 = vmatprep.subr.bf16.mxu0 0
        %2704 = vmatpush1.bf16.msra.mxu0 %v2604
        %2705 = vmatprep.subr.bf16.mxu0 0
        %2706 = vmatpush1.bf16.msra.mxu0 %v2603
        %2707 = vmatprep.subr.bf16.mxu0 0
        %2708 = vmatpush2.bf16.msra.mxu0 %v2618
        %2709 = vmatprep.subr.bf16.mxu0 0
        %2710 = vmatpush2.bf16.msra.mxu0 %v2617
        %2711 = vmatprep.subr.bf16.mxu0 0
        %2712 = vmatpush2.bf16.msra.mxu0 %v2616
        %2713 = vmatprep.subr.bf16.mxu0 0
        %2714 = vmatpush2.bf16.msra.mxu0 %v2615
        %2715 = vmatprep.subr.bf16.mxu0 0
        %2716 = vmatpush2.bf16.msra.mxu0 %v2614
        %2717 = vmatprep.subr.bf16.mxu0 0
        %2718 = vmatpush2.bf16.msra.mxu0 %v2613
        %2719 = vmatprep.subr.bf16.mxu0 0
        %2720 = vmatpush2.bf16.msra.mxu0 %v2612
        %2721 = vmatprep.subr.bf16.mxu0 0
        %2722 = vmatpush2.bf16.msra.mxu0 %v2611
        %2723 = vmatprep.mubr.bf16.mxu0 %v2387
        %2724 = vmatmul.mubr.bf16.gmra.mxu0 %v2386
        %v2725 = vpop.f32.mrf.mxu0
        %v2726 = vadd.f32 %v2686, %v2725
        %v2727 = vpop.f32.mrf.mxu0
        %v2728 = vpop.f32.mrf.mxu0
        %v2729 = vpop.f32.mrf.mxu0
        %2730 = vdwg.mxu0
        %v2731 = vadd.f32 %v1951, %v2726
        %2732 = vst [vmem:[%s486] sm:$0xff] %v2731
        %s2733 = sand.u32 %s296, 1
        %s2734 = scalar_lea.sflag [#allocation4], %s2733
        %s2735 = sand.u32 %s296, 1
        %s2736 = smul.addr %s2735, 8
        %s2737 = scalar_lea.vmem [#allocation11], %s2736
        // Predicated region
        $region89: #{tpu_custom_call.1} parent=67 // pred_check
          %p2738 = pneg %p306
        $region90: #{tpu_custom_call.1} parent=67 // pred_check_branch
          %2740 = sbr.rel (%p2738) target = $region92
        $region91: #{tpu_custom_call.1} parent=67 // pred_region
          %s2742 = ssub.s32 128, 128
          %2743 = vsyncadd %s2734, %s2742
          %s2744 = smul.addr %s31, 128
          %s2745 = scalar_lea.hbm %s12, %s2744
          %s2747 = sshll.u32 %s2737, 4
          %s2748 = int_to_ptr.vmem [resolvable:$true] %s2747
          %2750 = dma.vmem_to_hbm [thread:$0]  %s2748, 128, %s2745, %s2734
        $region92: #{tpu_custom_call.1} parent=67 // pred_fallthru
          _
      $region68: #{tpu_custom_call.1} parent=5 // pred_fallthru
        _
      %p2751 = scmp.le.s32.totalorder 2, %s26
      // Predicated region
      $region93: #{tpu_custom_call.1} parent=5 // pred_check
        %p2752 = pneg %p2751
      $region94: #{tpu_custom_call.1} parent=5 // pred_check_branch
        %2754 = sbr.rel (%p2752) target = $region96
      $region95: #{tpu_custom_call.1} parent=5 // pred_region
        %s2755 = ssub.s32 %s26, 2
        // Predicated region
        $region97: #{tpu_custom_call.1} parent=95 // pred_check
          %p2756 = pneg %p312
        $region98: #{tpu_custom_call.1} parent=95 // pred_check_branch
          %2758 = sbr.rel (%p2756) target = $region100
        $region99: #{tpu_custom_call.1} parent=95 // pred_region
          %s2759 = sand.u32 %s297, 1
          %s2760 = scalar_lea.sflag [#allocation4], %s2759
          %s2761 = sand.u32 %s297, 1
          %s2762 = smul.addr %s2761, 8
          %s2763 = scalar_lea.vmem [#allocation11], %s2762
          %2764 = dma.done %s2760, 128
        $region100: #{tpu_custom_call.1} parent=95 // pred_fallthru
          _
      $region96: #{tpu_custom_call.1} parent=5 // pred_fallthru
        _
    $region6: #{tpu_custom_call.1} parent=1 // loop_footer
      %s30 = sadd.s32 1, %s26
    $region7: #{tpu_custom_call.1} parent=1 // loop_footer_branch
      %25 = sbr.rel target = $region3
    $region8: #{tpu_custom_call.1} parent=1 // loop_exit
      _
    %2765 = vsyncpa [#allocation3], 1
    %s2766 = scalar_lea.sflag [#allocation3], 1
    %2767 = vsyncpa %s2766, 1
    %2768 = vsyncpa [#allocation6], 1
    %2769 = vsyncpa [#allocation9], 1
    %2770 = vsyncpa [#allocation4], 1
    %s2771 = scalar_lea.sflag [#allocation4], 1
    %2772 = vsyncpa %s2771, 1

</llo_original>
